<compile_context>
chip_gen: v7x
topology: tpu7x:2x2x1
jax: 0.10.0
libtpu: 0.0.40
codegen_flags: <defaults>
</compile_context>

<pallas_src>
import functools
import math

import jax
import jax.numpy as jnp
from jax.experimental import pallas as pl
from jax.experimental.pallas import tpu as pltpu


def _gat_fused_kernel(h_ref, mask_ref,
                      w1_ref, b1_ref, p1_ref, sb1_ref,
                      w2_ref, b2_ref, p2_ref, sb2_ref,
                      out_ref, hid_ref,
                      *, alpha, n_head1, n_head2, f1, f2):
    """Fused 2-layer multi-head GAT forward (all heads batched per layer)."""
    mask = mask_ref[...]                                   # (N, N)
    neg = jnp.float32(-9.0e15)

    def attention_heads(x, w_ref, b_ref, p_ref, sb_ref, n_head, f_out):
        # One wide matmul for every head: (N, H*F)
        Wh = jnp.dot(x, w_ref[...], preferred_element_type=jnp.float32) + b_ref[...]
        # Folded attention projections: cols [0:H) = a1·Wh_h (+ab), [H:2H) = a2·Wh_h
        scores = jnp.dot(Wh, p_ref[...], preferred_element_type=jnp.float32) + sb_ref[...]
        outs = []
        for hh in range(n_head):
            ei = scores[:, hh:hh + 1]                      # (N, 1), includes ab
            ej = scores[:, n_head + hh:n_head + hh + 1]    # (N, 1)
            e = ei + ej.T                                  # (N, N)
            e = jnp.where(e > 0, e, alpha * e)             # leaky_relu
            a = jnp.where(mask > 0, e, neg)                # mask
            a = a - jnp.max(a, axis=1, keepdims=True)      # softmax over neighbours
            a = jnp.exp(a)
            a = a * pl.reciprocal(jnp.sum(a, axis=1, keepdims=True), approx=True)
            outs.append(jnp.dot(a, Wh[:, hh * f_out:(hh + 1) * f_out],
                                preferred_element_type=jnp.float32))
        return outs

    # ---- Layer 1: ELU, concat across heads into the VMEM scratch -------------
    outs1 = attention_heads(h_ref[...], w1_ref, b1_ref, p1_ref, sb1_ref,
                            n_head1, f1)
    for hh, agg in enumerate(outs1):
        elu = jnp.where(agg > 0, agg, jnp.exp(jnp.minimum(agg, 0.0)) - 1.0)
        hid_ref[:, hh * f1:(hh + 1) * f1] = elu

    # ---- Layer 2: mean across heads ------------------------------------------
    outs2 = attention_heads(hid_ref[...], w2_ref, b2_ref, p2_ref, sb2_ref,
                            n_head2, f2)
    acc = outs2[0]
    for agg in outs2[1:]:
        acc = acc + agg
    out_ref[...] = acc * (1.0 / n_head2)


def pack_layer_params(params):
    """Per-head params -> head-batched / MXU-folded operands."""
    W, b, a1, a2, ab = params              # (H,in,F), (H,F), (H,F), (H,F), (H,)
    H, in_f, F = W.shape
    W_all = jnp.transpose(W, (1, 0, 2)).reshape(in_f, H * F)   # heads on lanes
    b_all = b.reshape(1, H * F)
    eyeH = jnp.eye(H, dtype=W.dtype)
    Pa = (a1[:, :, None] * eyeH[:, None, :]).reshape(H * F, H)  # Wh_all@Pa -> a1·Wh_h
    Pb = (a2[:, :, None] * eyeH[:, None, :]).reshape(H * F, H)
    P = jnp.concatenate([Pa, Pb], axis=1)                       # (H*F, 2H)
    sb = jnp.concatenate([ab, jnp.zeros_like(ab)]).reshape(1, 2 * H)
    return W_all, b_all, P, sb


def gat_forward(X, A, params1, params2, alpha=0.2):
    """GAT.forward: conv1 (ELU + concat) -> conv2 (mean), fused in one kernel."""
    N, _ = X.shape
    H1, _, F1 = params1[0].shape
    H2, _, F2 = params2[0].shape

    w1, b1, p1, sb1 = pack_layer_params(params1)
    w2, b2, p2, sb2 = pack_layer_params(params2)

    kernel = functools.partial(_gat_fused_kernel, alpha=alpha,
                               n_head1=H1, n_head2=H2, f1=F1, f2=F2)

    def full(shape):
        return pl.BlockSpec(shape, lambda i, _s=shape: (0,) * len(_s))

    args = (X, A, w1, b1, p1, sb1, w2, b2, p2, sb2)
    out = pl.pallas_call(
        kernel,
        out_shape=jax.ShapeDtypeStruct((N, F2), jnp.float32),
        grid=(1,),
        in_specs=[full(a.shape) for a in args],
        out_specs=full((N, F2)),
        scratch_shapes=[pltpu.VMEM((N, H1 * F1), jnp.float32)],  # fused hidden
        compiler_params=pltpu.CompilerParams(
            dimension_semantics=("arbitrary",)),
    )(*args)
    return out


def init_gat_layer_params(key, in_f, out_f, n_head, gain=1.414):
    """Deterministic synthetic params matching the PyTorch layer's shapes."""
    k_w, k_wb, k_a, k_ab = jax.random.split(key, 4)
    lim_w = gain * math.sqrt(6.0 / (in_f + out_f))               # xavier_uniform
    W = jax.random.uniform(k_w, (n_head, in_f, out_f), jnp.float32, -lim_w, lim_w)
    bw = 1.0 / math.sqrt(in_f)
    Wb = jax.random.uniform(k_wb, (n_head, out_f), jnp.float32, -bw, bw)

    lim_a = gain * math.sqrt(6.0 / (2 * out_f + 1))              # xavier_uniform
    Aw = jax.random.uniform(k_a, (n_head, 2 * out_f), jnp.float32, -lim_a, lim_a)
    a1 = Aw[:, :out_f]
    a2 = Aw[:, out_f:]
    ba = 1.0 / math.sqrt(2 * out_f)
    ab = jax.random.uniform(k_ab, (n_head,), jnp.float32, -ba, ba)
    return W, Wb, a1, a2, ab


def gat_reference(X, A, params1, params2, alpha=0.2):
    """Pure-JAX reference mirroring the PyTorch module (eval mode)."""
    def layer(h, mask, params, last):
        W, b, a1, a2, ab = params
        outs = []
        for i in range(W.shape[0]):
            Wh = h @ W[i] + b[i]
            e = (Wh @ a1[i])[:, None] + (Wh @ a2[i])[None, :] + ab[i]
            e = jnp.where(e > 0, e, alpha * e)
            a = jnp.where(mask > 0, e, -9.0e15)
            a = jax.nn.softmax(a, axis=1)
            aWh = a @ Wh
            outs.append(aWh if last else jax.nn.elu(aWh))
        if last:
            return jnp.mean(jnp.stack(outs, axis=2), axis=2)
        return jnp.concatenate(outs, axis=1)

    hidden = layer(X, A, params1, last=False)
    return layer(hidden, A, params2, last=True)


if __name__ == "__main__":
    # Small shapes consistent with GAT(in_features, out_features, h_dim=8, n_head=8)
    N = 16               # number of graph nodes
    in_features = 16
    h_dim = 8
    n_head = 8
    out_features = 4

    key = jax.random.PRNGKey(0)
    kx, ka, kp1, kp2 = jax.random.split(key, 4)

    X = jax.random.normal(kx, (N, in_features), dtype=jnp.float32)
    # adjacency mask with self-loops, float32 (mask > 0 keeps the edge)
    A = (jax.random.uniform(ka, (N, N)) > 0.5).astype(jnp.float32)
    A = jnp.maximum(A, jnp.eye(N, dtype=jnp.float32))

    params1 = init_gat_layer_params(kp1, in_features, h_dim, n_head)
    params2 = init_gat_layer_params(kp2, h_dim * n_head, out_features, n_head)

    out = gat_forward(X, A, params1, params2)
    out = jax.block_until_ready(out)
    assert out.shape == (N, out_features)
    assert bool(jnp.all(jnp.isfinite(out)))

    # sanity-check against the pure-JAX reference (loose tol: approx reciprocal)
    ref = gat_reference(X, A, params1, params2)
    max_err = float(jnp.max(jnp.abs(out - ref)))
    scale = float(jnp.max(jnp.abs(ref))) + 1.0
    assert max_err <= 0.05 * scale, (max_err, scale)

    print("KERNEL_OK")
</pallas_src>

<mosaic_0001>
module attributes {stable_mosaic.version = 11 : i64} {
  func.func @_gat_fused_kernel(%arg0: i32, %arg1: memref<16x16xf32, #tpu.memory_space<vmem>>, %arg2: memref<16x16xf32, #tpu.memory_space<vmem>>, %arg3: memref<16x64xf32, #tpu.memory_space<vmem>>, %arg4: memref<1x64xf32, #tpu.memory_space<vmem>>, %arg5: memref<64x16xf32, #tpu.memory_space<vmem>>, %arg6: memref<1x16xf32, #tpu.memory_space<vmem>>, %arg7: memref<64x32xf32, #tpu.memory_space<vmem>>, %arg8: memref<1x32xf32, #tpu.memory_space<vmem>>, %arg9: memref<32x16xf32, #tpu.memory_space<vmem>>, %arg10: memref<1x16xf32, #tpu.memory_space<vmem>>, %arg11: memref<16x4xf32, #tpu.memory_space<vmem>>, %arg12: memref<16x64xf32, #tpu.memory_space<vmem>>) attributes {dimension_semantics = [#tpu.dimension_semantics<arbitrary>], iteration_bounds = array<i64: 1>, scalar_prefetch = 0 : i64, scratch_operands = 1 : i64, tpu.core_type = #tpu.core_type<tc>, window_params = [{pipeline_mode = #tpu.pipeline_mode<synchronous>, transform_indices = @transform_0, window_bounds = array<i64: 16, 16>}, {pipeline_mode = #tpu.pipeline_mode<synchronous>, transform_indices = @transform_1, window_bounds = array<i64: 16, 16>}, {pipeline_mode = #tpu.pipeline_mode<synchronous>, transform_indices = @transform_2, window_bounds = array<i64: 16, 64>}, {pipeline_mode = #tpu.pipeline_mode<synchronous>, transform_indices = @transform_3, window_bounds = array<i64: 1, 64>}, {pipeline_mode = #tpu.pipeline_mode<synchronous>, transform_indices = @transform_4, window_bounds = array<i64: 64, 16>}, {pipeline_mode = #tpu.pipeline_mode<synchronous>, transform_indices = @transform_5, window_bounds = array<i64: 1, 16>}, {pipeline_mode = #tpu.pipeline_mode<synchronous>, transform_indices = @transform_6, window_bounds = array<i64: 64, 32>}, {pipeline_mode = #tpu.pipeline_mode<synchronous>, transform_indices = @transform_7, window_bounds = array<i64: 1, 32>}, {pipeline_mode = #tpu.pipeline_mode<synchronous>, transform_indices = @transform_8, window_bounds = array<i64: 32, 16>}, {pipeline_mode = #tpu.pipeline_mode<synchronous>, transform_indices = @transform_9, window_bounds = array<i64: 1, 16>}, {pipeline_mode = #tpu.pipeline_mode<synchronous>, transform_indices = @transform_10, window_bounds = array<i64: 16, 4>}]} {
    %c0 = arith.constant 0 : index
    %c0_0 = arith.constant 0 : index
    %0 = vector.load %arg2[%c0, %c0_0] : memref<16x16xf32, #tpu.memory_space<vmem>>, vector<16x16xf32>
    %c0_1 = arith.constant 0 : index
    %c0_2 = arith.constant 0 : index
    %1 = vector.load %arg1[%c0_1, %c0_2] : memref<16x16xf32, #tpu.memory_space<vmem>>, vector<16x16xf32>
    %c0_3 = arith.constant 0 : index
    %c0_4 = arith.constant 0 : index
    %2 = vector.load %arg3[%c0_3, %c0_4] : memref<16x64xf32, #tpu.memory_space<vmem>>, vector<16x64xf32>
    %cst = arith.constant dense<0.000000e+00> : vector<16x64xf32>
    %3 = tpu.matmul %1, %2, %cst {dimension_numbers = #tpu.dot_dimension_numbers<[1], [0], [0], [1], [0, 0, 1, 1], [], []>} : vector<16x16xf32>, vector<16x64xf32>, vector<16x64xf32> -> vector<16x64xf32>
    %c0_5 = arith.constant 0 : index
    %c0_6 = arith.constant 0 : index
    %4 = vector.load %arg4[%c0_5, %c0_6] : memref<1x64xf32, #tpu.memory_space<vmem>>, vector<1x64xf32>
    %5 = vector.broadcast %4 : vector<1x64xf32> to vector<16x64xf32>
    %6 = arith.addf %3, %5 : vector<16x64xf32>
    %c0_7 = arith.constant 0 : index
    %c0_8 = arith.constant 0 : index
    %7 = vector.load %arg5[%c0_7, %c0_8] : memref<64x16xf32, #tpu.memory_space<vmem>>, vector<64x16xf32>
    %cst_9 = arith.constant dense<0.000000e+00> : vector<16x16xf32>
    %8 = tpu.matmul %6, %7, %cst_9 {dimension_numbers = #tpu.dot_dimension_numbers<[1], [0], [0], [1], [0, 0, 1, 1], [], []>} : vector<16x64xf32>, vector<64x16xf32>, vector<16x16xf32> -> vector<16x16xf32>
    %c0_10 = arith.constant 0 : index
    %c0_11 = arith.constant 0 : index
    %9 = vector.load %arg6[%c0_10, %c0_11] : memref<1x16xf32, #tpu.memory_space<vmem>>, vector<1x16xf32>
    %10 = vector.broadcast %9 : vector<1x16xf32> to vector<16x16xf32>
    %11 = arith.addf %8, %10 : vector<16x16xf32>
    %12 = vector.extract_strided_slice %11 {offsets = [0, 0], sizes = [16, 1], strides = [1, 1]} : vector<16x16xf32> to vector<16x1xf32>
    %13 = vector.extract_strided_slice %11 {offsets = [0, 8], sizes = [16, 1], strides = [1, 1]} : vector<16x16xf32> to vector<16x1xf32>
    %14 = tpu.transpose %13, [1, 0] : vector<16x1xf32> -> vector<1x16xf32>
    %15 = vector.broadcast %12 : vector<16x1xf32> to vector<16x16xf32>
    %16 = vector.broadcast %14 : vector<1x16xf32> to vector<16x16xf32>
    %17 = arith.addf %15, %16 : vector<16x16xf32>
    %cst_12 = arith.constant 0.000000e+00 : f32
    %18 = vector.broadcast %cst_12 : f32 to vector<16x16xf32>
    %19 = arith.cmpf ogt, %17, %18 : vector<16x16xf32>
    %cst_13 = arith.constant 2.000000e-01 : f32
    %20 = vector.broadcast %cst_13 : f32 to vector<16x16xf32>
    %21 = arith.mulf %20, %17 : vector<16x16xf32>
    %22 = arith.select %19, %17, %21 : vector<16x16xi1>, vector<16x16xf32>
    %cst_14 = arith.constant 0.000000e+00 : f32
    %23 = vector.broadcast %cst_14 : f32 to vector<16x16xf32>
    %24 = arith.cmpf ogt, %0, %23 : vector<16x16xf32>
    %cst_15 = arith.constant -9.000000e+15 : f32
    %25 = vector.broadcast %cst_15 : f32 to vector<16x16xf32>
    %26 = arith.select %24, %22, %25 : vector<16x16xi1>, vector<16x16xf32>
    %cst_16 = arith.constant dense<0xFF800000> : vector<16xf32>
    %27 = vector.multi_reduction <maximumf>, %26, %cst_16 [1] : vector<16x16xf32> to vector<16xf32>
    %28 = vector.shape_cast %27 : vector<16xf32> to vector<16x1xf32>
    %29 = vector.broadcast %28 : vector<16x1xf32> to vector<16x16xf32>
    %30 = arith.subf %26, %29 : vector<16x16xf32>
    %31 = math.exp %30 : vector<16x16xf32>
    %cst_17 = arith.constant dense<0.000000e+00> : vector<16xf32>
    %32 = vector.multi_reduction <add>, %31, %cst_17 [1] : vector<16x16xf32> to vector<16xf32>
    %33 = vector.shape_cast %32 : vector<16xf32> to vector<16x1xf32>
    %34 = tpu.reciprocal %33 {approx = true} : vector<16x1xf32> -> vector<16x1xf32>
    %35 = vector.broadcast %34 : vector<16x1xf32> to vector<16x16xf32>
    %36 = arith.mulf %31, %35 : vector<16x16xf32>
    %37 = vector.extract_strided_slice %6 {offsets = [0, 0], sizes = [16, 8], strides = [1, 1]} : vector<16x64xf32> to vector<16x8xf32>
    %cst_18 = arith.constant dense<0.000000e+00> : vector<16x8xf32>
    %38 = tpu.matmul %36, %37, %cst_18 {dimension_numbers = #tpu.dot_dimension_numbers<[1], [0], [0], [1], [0, 0, 1, 1], [], []>} : vector<16x16xf32>, vector<16x8xf32>, vector<16x8xf32> -> vector<16x8xf32>
    %39 = vector.extract_strided_slice %11 {offsets = [0, 1], sizes = [16, 1], strides = [1, 1]} : vector<16x16xf32> to vector<16x1xf32>
    %40 = vector.extract_strided_slice %11 {offsets = [0, 9], sizes = [16, 1], strides = [1, 1]} : vector<16x16xf32> to vector<16x1xf32>
    %41 = tpu.transpose %40, [1, 0] : vector<16x1xf32> -> vector<1x16xf32>
    %42 = vector.broadcast %39 : vector<16x1xf32> to vector<16x16xf32>
    %43 = vector.broadcast %41 : vector<1x16xf32> to vector<16x16xf32>
    %44 = arith.addf %42, %43 : vector<16x16xf32>
    %cst_19 = arith.constant 0.000000e+00 : f32
    %45 = vector.broadcast %cst_19 : f32 to vector<16x16xf32>
    %46 = arith.cmpf ogt, %44, %45 : vector<16x16xf32>
    %cst_20 = arith.constant 2.000000e-01 : f32
    %47 = vector.broadcast %cst_20 : f32 to vector<16x16xf32>
    %48 = arith.mulf %47, %44 : vector<16x16xf32>
    %49 = arith.select %46, %44, %48 : vector<16x16xi1>, vector<16x16xf32>
    %cst_21 = arith.constant 0.000000e+00 : f32
    %50 = vector.broadcast %cst_21 : f32 to vector<16x16xf32>
    %51 = arith.cmpf ogt, %0, %50 : vector<16x16xf32>
    %cst_22 = arith.constant -9.000000e+15 : f32
    %52 = vector.broadcast %cst_22 : f32 to vector<16x16xf32>
    %53 = arith.select %51, %49, %52 : vector<16x16xi1>, vector<16x16xf32>
    %cst_23 = arith.constant dense<0xFF800000> : vector<16xf32>
    %54 = vector.multi_reduction <maximumf>, %53, %cst_23 [1] : vector<16x16xf32> to vector<16xf32>
    %55 = vector.shape_cast %54 : vector<16xf32> to vector<16x1xf32>
    %56 = vector.broadcast %55 : vector<16x1xf32> to vector<16x16xf32>
    %57 = arith.subf %53, %56 : vector<16x16xf32>
    %58 = math.exp %57 : vector<16x16xf32>
    %cst_24 = arith.constant dense<0.000000e+00> : vector<16xf32>
    %59 = vector.multi_reduction <add>, %58, %cst_24 [1] : vector<16x16xf32> to vector<16xf32>
    %60 = vector.shape_cast %59 : vector<16xf32> to vector<16x1xf32>
    %61 = tpu.reciprocal %60 {approx = true} : vector<16x1xf32> -> vector<16x1xf32>
    %62 = vector.broadcast %61 : vector<16x1xf32> to vector<16x16xf32>
    %63 = arith.mulf %58, %62 : vector<16x16xf32>
    %64 = vector.extract_strided_slice %6 {offsets = [0, 8], sizes = [16, 8], strides = [1, 1]} : vector<16x64xf32> to vector<16x8xf32>
    %cst_25 = arith.constant dense<0.000000e+00> : vector<16x8xf32>
    %65 = tpu.matmul %63, %64, %cst_25 {dimension_numbers = #tpu.dot_dimension_numbers<[1], [0], [0], [1], [0, 0, 1, 1], [], []>} : vector<16x16xf32>, vector<16x8xf32>, vector<16x8xf32> -> vector<16x8xf32>
    %66 = vector.extract_strided_slice %11 {offsets = [0, 2], sizes = [16, 1], strides = [1, 1]} : vector<16x16xf32> to vector<16x1xf32>
    %67 = vector.extract_strided_slice %11 {offsets = [0, 10], sizes = [16, 1], strides = [1, 1]} : vector<16x16xf32> to vector<16x1xf32>
    %68 = tpu.transpose %67, [1, 0] : vector<16x1xf32> -> vector<1x16xf32>
    %69 = vector.broadcast %66 : vector<16x1xf32> to vector<16x16xf32>
    %70 = vector.broadcast %68 : vector<1x16xf32> to vector<16x16xf32>
    %71 = arith.addf %69, %70 : vector<16x16xf32>
    %cst_26 = arith.constant 0.000000e+00 : f32
    %72 = vector.broadcast %cst_26 : f32 to vector<16x16xf32>
    %73 = arith.cmpf ogt, %71, %72 : vector<16x16xf32>
    %cst_27 = arith.constant 2.000000e-01 : f32
    %74 = vector.broadcast %cst_27 : f32 to vector<16x16xf32>
    %75 = arith.mulf %74, %71 : vector<16x16xf32>
    %76 = arith.select %73, %71, %75 : vector<16x16xi1>, vector<16x16xf32>
    %cst_28 = arith.constant 0.000000e+00 : f32
    %77 = vector.broadcast %cst_28 : f32 to vector<16x16xf32>
    %78 = arith.cmpf ogt, %0, %77 : vector<16x16xf32>
    %cst_29 = arith.constant -9.000000e+15 : f32
    %79 = vector.broadcast %cst_29 : f32 to vector<16x16xf32>
    %80 = arith.select %78, %76, %79 : vector<16x16xi1>, vector<16x16xf32>
    %cst_30 = arith.constant dense<0xFF800000> : vector<16xf32>
    %81 = vector.multi_reduction <maximumf>, %80, %cst_30 [1] : vector<16x16xf32> to vector<16xf32>
    %82 = vector.shape_cast %81 : vector<16xf32> to vector<16x1xf32>
    %83 = vector.broadcast %82 : vector<16x1xf32> to vector<16x16xf32>
    %84 = arith.subf %80, %83 : vector<16x16xf32>
    %85 = math.exp %84 : vector<16x16xf32>
    %cst_31 = arith.constant dense<0.000000e+00> : vector<16xf32>
    %86 = vector.multi_reduction <add>, %85, %cst_31 [1] : vector<16x16xf32> to vector<16xf32>
    %87 = vector.shape_cast %86 : vector<16xf32> to vector<16x1xf32>
    %88 = tpu.reciprocal %87 {approx = true} : vector<16x1xf32> -> vector<16x1xf32>
    %89 = vector.broadcast %88 : vector<16x1xf32> to vector<16x16xf32>
    %90 = arith.mulf %85, %89 : vector<16x16xf32>
    %91 = vector.extract_strided_slice %6 {offsets = [0, 16], sizes = [16, 8], strides = [1, 1]} : vector<16x64xf32> to vector<16x8xf32>
    %cst_32 = arith.constant dense<0.000000e+00> : vector<16x8xf32>
    %92 = tpu.matmul %90, %91, %cst_32 {dimension_numbers = #tpu.dot_dimension_numbers<[1], [0], [0], [1], [0, 0, 1, 1], [], []>} : vector<16x16xf32>, vector<16x8xf32>, vector<16x8xf32> -> vector<16x8xf32>
    %93 = vector.extract_strided_slice %11 {offsets = [0, 3], sizes = [16, 1], strides = [1, 1]} : vector<16x16xf32> to vector<16x1xf32>
    %94 = vector.extract_strided_slice %11 {offsets = [0, 11], sizes = [16, 1], strides = [1, 1]} : vector<16x16xf32> to vector<16x1xf32>
    %95 = tpu.transpose %94, [1, 0] : vector<16x1xf32> -> vector<1x16xf32>
    %96 = vector.broadcast %93 : vector<16x1xf32> to vector<16x16xf32>
    %97 = vector.broadcast %95 : vector<1x16xf32> to vector<16x16xf32>
    %98 = arith.addf %96, %97 : vector<16x16xf32>
    %cst_33 = arith.constant 0.000000e+00 : f32
    %99 = vector.broadcast %cst_33 : f32 to vector<16x16xf32>
    %100 = arith.cmpf ogt, %98, %99 : vector<16x16xf32>
    %cst_34 = arith.constant 2.000000e-01 : f32
    %101 = vector.broadcast %cst_34 : f32 to vector<16x16xf32>
    %102 = arith.mulf %101, %98 : vector<16x16xf32>
    %103 = arith.select %100, %98, %102 : vector<16x16xi1>, vector<16x16xf32>
    %cst_35 = arith.constant 0.000000e+00 : f32
    %104 = vector.broadcast %cst_35 : f32 to vector<16x16xf32>
    %105 = arith.cmpf ogt, %0, %104 : vector<16x16xf32>
    %cst_36 = arith.constant -9.000000e+15 : f32
    %106 = vector.broadcast %cst_36 : f32 to vector<16x16xf32>
    %107 = arith.select %105, %103, %106 : vector<16x16xi1>, vector<16x16xf32>
    %cst_37 = arith.constant dense<0xFF800000> : vector<16xf32>
    %108 = vector.multi_reduction <maximumf>, %107, %cst_37 [1] : vector<16x16xf32> to vector<16xf32>
    %109 = vector.shape_cast %108 : vector<16xf32> to vector<16x1xf32>
    %110 = vector.broadcast %109 : vector<16x1xf32> to vector<16x16xf32>
    %111 = arith.subf %107, %110 : vector<16x16xf32>
    %112 = math.exp %111 : vector<16x16xf32>
    %cst_38 = arith.constant dense<0.000000e+00> : vector<16xf32>
    %113 = vector.multi_reduction <add>, %112, %cst_38 [1] : vector<16x16xf32> to vector<16xf32>
    %114 = vector.shape_cast %113 : vector<16xf32> to vector<16x1xf32>
    %115 = tpu.reciprocal %114 {approx = true} : vector<16x1xf32> -> vector<16x1xf32>
    %116 = vector.broadcast %115 : vector<16x1xf32> to vector<16x16xf32>
    %117 = arith.mulf %112, %116 : vector<16x16xf32>
    %118 = vector.extract_strided_slice %6 {offsets = [0, 24], sizes = [16, 8], strides = [1, 1]} : vector<16x64xf32> to vector<16x8xf32>
    %cst_39 = arith.constant dense<0.000000e+00> : vector<16x8xf32>
    %119 = tpu.matmul %117, %118, %cst_39 {dimension_numbers = #tpu.dot_dimension_numbers<[1], [0], [0], [1], [0, 0, 1, 1], [], []>} : vector<16x16xf32>, vector<16x8xf32>, vector<16x8xf32> -> vector<16x8xf32>
    %120 = vector.extract_strided_slice %11 {offsets = [0, 4], sizes = [16, 1], strides = [1, 1]} : vector<16x16xf32> to vector<16x1xf32>
    %121 = vector.extract_strided_slice %11 {offsets = [0, 12], sizes = [16, 1], strides = [1, 1]} : vector<16x16xf32> to vector<16x1xf32>
    %122 = tpu.transpose %121, [1, 0] : vector<16x1xf32> -> vector<1x16xf32>
    %123 = vector.broadcast %120 : vector<16x1xf32> to vector<16x16xf32>
    %124 = vector.broadcast %122 : vector<1x16xf32> to vector<16x16xf32>
    %125 = arith.addf %123, %124 : vector<16x16xf32>
    %cst_40 = arith.constant 0.000000e+00 : f32
    %126 = vector.broadcast %cst_40 : f32 to vector<16x16xf32>
    %127 = arith.cmpf ogt, %125, %126 : vector<16x16xf32>
    %cst_41 = arith.constant 2.000000e-01 : f32
    %128 = vector.broadcast %cst_41 : f32 to vector<16x16xf32>
    %129 = arith.mulf %128, %125 : vector<16x16xf32>
    %130 = arith.select %127, %125, %129 : vector<16x16xi1>, vector<16x16xf32>
    %cst_42 = arith.constant 0.000000e+00 : f32
    %131 = vector.broadcast %cst_42 : f32 to vector<16x16xf32>
    %132 = arith.cmpf ogt, %0, %131 : vector<16x16xf32>
    %cst_43 = arith.constant -9.000000e+15 : f32
    %133 = vector.broadcast %cst_43 : f32 to vector<16x16xf32>
    %134 = arith.select %132, %130, %133 : vector<16x16xi1>, vector<16x16xf32>
    %cst_44 = arith.constant dense<0xFF800000> : vector<16xf32>
    %135 = vector.multi_reduction <maximumf>, %134, %cst_44 [1] : vector<16x16xf32> to vector<16xf32>
    %136 = vector.shape_cast %135 : vector<16xf32> to vector<16x1xf32>
    %137 = vector.broadcast %136 : vector<16x1xf32> to vector<16x16xf32>
    %138 = arith.subf %134, %137 : vector<16x16xf32>
    %139 = math.exp %138 : vector<16x16xf32>
    %cst_45 = arith.constant dense<0.000000e+00> : vector<16xf32>
    %140 = vector.multi_reduction <add>, %139, %cst_45 [1] : vector<16x16xf32> to vector<16xf32>
    %141 = vector.shape_cast %140 : vector<16xf32> to vector<16x1xf32>
    %142 = tpu.reciprocal %141 {approx = true} : vector<16x1xf32> -> vector<16x1xf32>
    %143 = vector.broadcast %142 : vector<16x1xf32> to vector<16x16xf32>
    %144 = arith.mulf %139, %143 : vector<16x16xf32>
    %145 = vector.extract_strided_slice %6 {offsets = [0, 32], sizes = [16, 8], strides = [1, 1]} : vector<16x64xf32> to vector<16x8xf32>
    %cst_46 = arith.constant dense<0.000000e+00> : vector<16x8xf32>
    %146 = tpu.matmul %144, %145, %cst_46 {dimension_numbers = #tpu.dot_dimension_numbers<[1], [0], [0], [1], [0, 0, 1, 1], [], []>} : vector<16x16xf32>, vector<16x8xf32>, vector<16x8xf32> -> vector<16x8xf32>
    %147 = vector.extract_strided_slice %11 {offsets = [0, 5], sizes = [16, 1], strides = [1, 1]} : vector<16x16xf32> to vector<16x1xf32>
    %148 = vector.extract_strided_slice %11 {offsets = [0, 13], sizes = [16, 1], strides = [1, 1]} : vector<16x16xf32> to vector<16x1xf32>
    %149 = tpu.transpose %148, [1, 0] : vector<16x1xf32> -> vector<1x16xf32>
    %150 = vector.broadcast %147 : vector<16x1xf32> to vector<16x16xf32>
    %151 = vector.broadcast %149 : vector<1x16xf32> to vector<16x16xf32>
    %152 = arith.addf %150, %151 : vector<16x16xf32>
    %cst_47 = arith.constant 0.000000e+00 : f32
    %153 = vector.broadcast %cst_47 : f32 to vector<16x16xf32>
    %154 = arith.cmpf ogt, %152, %153 : vector<16x16xf32>
    %cst_48 = arith.constant 2.000000e-01 : f32
    %155 = vector.broadcast %cst_48 : f32 to vector<16x16xf32>
    %156 = arith.mulf %155, %152 : vector<16x16xf32>
    %157 = arith.select %154, %152, %156 : vector<16x16xi1>, vector<16x16xf32>
    %cst_49 = arith.constant 0.000000e+00 : f32
    %158 = vector.broadcast %cst_49 : f32 to vector<16x16xf32>
    %159 = arith.cmpf ogt, %0, %158 : vector<16x16xf32>
    %cst_50 = arith.constant -9.000000e+15 : f32
    %160 = vector.broadcast %cst_50 : f32 to vector<16x16xf32>
    %161 = arith.select %159, %157, %160 : vector<16x16xi1>, vector<16x16xf32>
    %cst_51 = arith.constant dense<0xFF800000> : vector<16xf32>
    %162 = vector.multi_reduction <maximumf>, %161, %cst_51 [1] : vector<16x16xf32> to vector<16xf32>
    %163 = vector.shape_cast %162 : vector<16xf32> to vector<16x1xf32>
    %164 = vector.broadcast %163 : vector<16x1xf32> to vector<16x16xf32>
    %165 = arith.subf %161, %164 : vector<16x16xf32>
    %166 = math.exp %165 : vector<16x16xf32>
    %cst_52 = arith.constant dense<0.000000e+00> : vector<16xf32>
    %167 = vector.multi_reduction <add>, %166, %cst_52 [1] : vector<16x16xf32> to vector<16xf32>
    %168 = vector.shape_cast %167 : vector<16xf32> to vector<16x1xf32>
    %169 = tpu.reciprocal %168 {approx = true} : vector<16x1xf32> -> vector<16x1xf32>
    %170 = vector.broadcast %169 : vector<16x1xf32> to vector<16x16xf32>
    %171 = arith.mulf %166, %170 : vector<16x16xf32>
    %172 = vector.extract_strided_slice %6 {offsets = [0, 40], sizes = [16, 8], strides = [1, 1]} : vector<16x64xf32> to vector<16x8xf32>
    %cst_53 = arith.constant dense<0.000000e+00> : vector<16x8xf32>
    %173 = tpu.matmul %171, %172, %cst_53 {dimension_numbers = #tpu.dot_dimension_numbers<[1], [0], [0], [1], [0, 0, 1, 1], [], []>} : vector<16x16xf32>, vector<16x8xf32>, vector<16x8xf32> -> vector<16x8xf32>
    %174 = vector.extract_strided_slice %11 {offsets = [0, 6], sizes = [16, 1], strides = [1, 1]} : vector<16x16xf32> to vector<16x1xf32>
    %175 = vector.extract_strided_slice %11 {offsets = [0, 14], sizes = [16, 1], strides = [1, 1]} : vector<16x16xf32> to vector<16x1xf32>
    %176 = tpu.transpose %175, [1, 0] : vector<16x1xf32> -> vector<1x16xf32>
    %177 = vector.broadcast %174 : vector<16x1xf32> to vector<16x16xf32>
    %178 = vector.broadcast %176 : vector<1x16xf32> to vector<16x16xf32>
    %179 = arith.addf %177, %178 : vector<16x16xf32>
    %cst_54 = arith.constant 0.000000e+00 : f32
    %180 = vector.broadcast %cst_54 : f32 to vector<16x16xf32>
    %181 = arith.cmpf ogt, %179, %180 : vector<16x16xf32>
    %cst_55 = arith.constant 2.000000e-01 : f32
    %182 = vector.broadcast %cst_55 : f32 to vector<16x16xf32>
    %183 = arith.mulf %182, %179 : vector<16x16xf32>
    %184 = arith.select %181, %179, %183 : vector<16x16xi1>, vector<16x16xf32>
    %cst_56 = arith.constant 0.000000e+00 : f32
    %185 = vector.broadcast %cst_56 : f32 to vector<16x16xf32>
    %186 = arith.cmpf ogt, %0, %185 : vector<16x16xf32>
    %cst_57 = arith.constant -9.000000e+15 : f32
    %187 = vector.broadcast %cst_57 : f32 to vector<16x16xf32>
    %188 = arith.select %186, %184, %187 : vector<16x16xi1>, vector<16x16xf32>
    %cst_58 = arith.constant dense<0xFF800000> : vector<16xf32>
    %189 = vector.multi_reduction <maximumf>, %188, %cst_58 [1] : vector<16x16xf32> to vector<16xf32>
    %190 = vector.shape_cast %189 : vector<16xf32> to vector<16x1xf32>
    %191 = vector.broadcast %190 : vector<16x1xf32> to vector<16x16xf32>
    %192 = arith.subf %188, %191 : vector<16x16xf32>
    %193 = math.exp %192 : vector<16x16xf32>
    %cst_59 = arith.constant dense<0.000000e+00> : vector<16xf32>
    %194 = vector.multi_reduction <add>, %193, %cst_59 [1] : vector<16x16xf32> to vector<16xf32>
    %195 = vector.shape_cast %194 : vector<16xf32> to vector<16x1xf32>
    %196 = tpu.reciprocal %195 {approx = true} : vector<16x1xf32> -> vector<16x1xf32>
    %197 = vector.broadcast %196 : vector<16x1xf32> to vector<16x16xf32>
    %198 = arith.mulf %193, %197 : vector<16x16xf32>
    %199 = vector.extract_strided_slice %6 {offsets = [0, 48], sizes = [16, 8], strides = [1, 1]} : vector<16x64xf32> to vector<16x8xf32>
    %cst_60 = arith.constant dense<0.000000e+00> : vector<16x8xf32>
    %200 = tpu.matmul %198, %199, %cst_60 {dimension_numbers = #tpu.dot_dimension_numbers<[1], [0], [0], [1], [0, 0, 1, 1], [], []>} : vector<16x16xf32>, vector<16x8xf32>, vector<16x8xf32> -> vector<16x8xf32>
    %201 = vector.extract_strided_slice %11 {offsets = [0, 7], sizes = [16, 1], strides = [1, 1]} : vector<16x16xf32> to vector<16x1xf32>
    %202 = vector.extract_strided_slice %11 {offsets = [0, 15], sizes = [16, 1], strides = [1, 1]} : vector<16x16xf32> to vector<16x1xf32>
    %203 = tpu.transpose %202, [1, 0] : vector<16x1xf32> -> vector<1x16xf32>
    %204 = vector.broadcast %201 : vector<16x1xf32> to vector<16x16xf32>
    %205 = vector.broadcast %203 : vector<1x16xf32> to vector<16x16xf32>
    %206 = arith.addf %204, %205 : vector<16x16xf32>
    %cst_61 = arith.constant 0.000000e+00 : f32
    %207 = vector.broadcast %cst_61 : f32 to vector<16x16xf32>
    %208 = arith.cmpf ogt, %206, %207 : vector<16x16xf32>
    %cst_62 = arith.constant 2.000000e-01 : f32
    %209 = vector.broadcast %cst_62 : f32 to vector<16x16xf32>
    %210 = arith.mulf %209, %206 : vector<16x16xf32>
    %211 = arith.select %208, %206, %210 : vector<16x16xi1>, vector<16x16xf32>
    %cst_63 = arith.constant 0.000000e+00 : f32
    %212 = vector.broadcast %cst_63 : f32 to vector<16x16xf32>
    %213 = arith.cmpf ogt, %0, %212 : vector<16x16xf32>
    %cst_64 = arith.constant -9.000000e+15 : f32
    %214 = vector.broadcast %cst_64 : f32 to vector<16x16xf32>
    %215 = arith.select %213, %211, %214 : vector<16x16xi1>, vector<16x16xf32>
    %cst_65 = arith.constant dense<0xFF800000> : vector<16xf32>
    %216 = vector.multi_reduction <maximumf>, %215, %cst_65 [1] : vector<16x16xf32> to vector<16xf32>
    %217 = vector.shape_cast %216 : vector<16xf32> to vector<16x1xf32>
    %218 = vector.broadcast %217 : vector<16x1xf32> to vector<16x16xf32>
    %219 = arith.subf %215, %218 : vector<16x16xf32>
    %220 = math.exp %219 : vector<16x16xf32>
    %cst_66 = arith.constant dense<0.000000e+00> : vector<16xf32>
    %221 = vector.multi_reduction <add>, %220, %cst_66 [1] : vector<16x16xf32> to vector<16xf32>
    %222 = vector.shape_cast %221 : vector<16xf32> to vector<16x1xf32>
    %223 = tpu.reciprocal %222 {approx = true} : vector<16x1xf32> -> vector<16x1xf32>
    %224 = vector.broadcast %223 : vector<16x1xf32> to vector<16x16xf32>
    %225 = arith.mulf %220, %224 : vector<16x16xf32>
    %226 = vector.extract_strided_slice %6 {offsets = [0, 56], sizes = [16, 8], strides = [1, 1]} : vector<16x64xf32> to vector<16x8xf32>
    %cst_67 = arith.constant dense<0.000000e+00> : vector<16x8xf32>
    %227 = tpu.matmul %225, %226, %cst_67 {dimension_numbers = #tpu.dot_dimension_numbers<[1], [0], [0], [1], [0, 0, 1, 1], [], []>} : vector<16x16xf32>, vector<16x8xf32>, vector<16x8xf32> -> vector<16x8xf32>
    %cst_68 = arith.constant 0.000000e+00 : f32
    %228 = vector.broadcast %cst_68 : f32 to vector<16x8xf32>
    %229 = arith.cmpf ogt, %38, %228 : vector<16x8xf32>
    %cst_69 = arith.constant 0.000000e+00 : f32
    %230 = vector.broadcast %cst_69 : f32 to vector<16x8xf32>
    %231 = arith.minimumf %38, %230 : vector<16x8xf32>
    %232 = math.exp %231 : vector<16x8xf32>
    %cst_70 = arith.constant 1.000000e+00 : f32
    %233 = vector.broadcast %cst_70 : f32 to vector<16x8xf32>
    %234 = arith.subf %232, %233 : vector<16x8xf32>
    %235 = arith.select %229, %38, %234 : vector<16x8xi1>, vector<16x8xf32>
    %c0_71 = arith.constant 0 : index
    %c0_72 = arith.constant 0 : index
    %236 = vector.load %arg12[%c0_71, %c0_72] : memref<16x64xf32, #tpu.memory_space<vmem>>, vector<16x8xf32>
    tpu.vector_store %arg12[%c0_71, %c0_72], %235 {strides = array<i32>} : memref<16x64xf32, #tpu.memory_space<vmem>>, vector<16x8xf32>,
    %cst_73 = arith.constant 0.000000e+00 : f32
    %237 = vector.broadcast %cst_73 : f32 to vector<16x8xf32>
    %238 = arith.cmpf ogt, %65, %237 : vector<16x8xf32>
    %cst_74 = arith.constant 0.000000e+00 : f32
    %239 = vector.broadcast %cst_74 : f32 to vector<16x8xf32>
    %240 = arith.minimumf %65, %239 : vector<16x8xf32>
    %241 = math.exp %240 : vector<16x8xf32>
    %cst_75 = arith.constant 1.000000e+00 : f32
    %242 = vector.broadcast %cst_75 : f32 to vector<16x8xf32>
    %243 = arith.subf %241, %242 : vector<16x8xf32>
    %244 = arith.select %238, %65, %243 : vector<16x8xi1>, vector<16x8xf32>
    %c0_76 = arith.constant 0 : index
    %c8 = arith.constant 8 : index
    %245 = vector.load %arg12[%c0_76, %c8] : memref<16x64xf32, #tpu.memory_space<vmem>>, vector<16x8xf32>
    tpu.vector_store %arg12[%c0_76, %c8], %244 {strides = array<i32>} : memref<16x64xf32, #tpu.memory_space<vmem>>, vector<16x8xf32>,
    %cst_77 = arith.constant 0.000000e+00 : f32
    %246 = vector.broadcast %cst_77 : f32 to vector<16x8xf32>
    %247 = arith.cmpf ogt, %92, %246 : vector<16x8xf32>
    %cst_78 = arith.constant 0.000000e+00 : f32
    %248 = vector.broadcast %cst_78 : f32 to vector<16x8xf32>
    %249 = arith.minimumf %92, %248 : vector<16x8xf32>
    %250 = math.exp %249 : vector<16x8xf32>
    %cst_79 = arith.constant 1.000000e+00 : f32
    %251 = vector.broadcast %cst_79 : f32 to vector<16x8xf32>
    %252 = arith.subf %250, %251 : vector<16x8xf32>
    %253 = arith.select %247, %92, %252 : vector<16x8xi1>, vector<16x8xf32>
    %c0_80 = arith.constant 0 : index
    %c16 = arith.constant 16 : index
    %254 = vector.load %arg12[%c0_80, %c16] : memref<16x64xf32, #tpu.memory_space<vmem>>, vector<16x8xf32>
    tpu.vector_store %arg12[%c0_80, %c16], %253 {strides = array<i32>} : memref<16x64xf32, #tpu.memory_space<vmem>>, vector<16x8xf32>,
    %cst_81 = arith.constant 0.000000e+00 : f32
    %255 = vector.broadcast %cst_81 : f32 to vector<16x8xf32>
    %256 = arith.cmpf ogt, %119, %255 : vector<16x8xf32>
    %cst_82 = arith.constant 0.000000e+00 : f32
    %257 = vector.broadcast %cst_82 : f32 to vector<16x8xf32>
    %258 = arith.minimumf %119, %257 : vector<16x8xf32>
    %259 = math.exp %258 : vector<16x8xf32>
    %cst_83 = arith.constant 1.000000e+00 : f32
    %260 = vector.broadcast %cst_83 : f32 to vector<16x8xf32>
    %261 = arith.subf %259, %260 : vector<16x8xf32>
    %262 = arith.select %256, %119, %261 : vector<16x8xi1>, vector<16x8xf32>
    %c0_84 = arith.constant 0 : index
    %c24 = arith.constant 24 : index
    %263 = vector.load %arg12[%c0_84, %c24] : memref<16x64xf32, #tpu.memory_space<vmem>>, vector<16x8xf32>
    tpu.vector_store %arg12[%c0_84, %c24], %262 {strides = array<i32>} : memref<16x64xf32, #tpu.memory_space<vmem>>, vector<16x8xf32>,
    %cst_85 = arith.constant 0.000000e+00 : f32
    %264 = vector.broadcast %cst_85 : f32 to vector<16x8xf32>
    %265 = arith.cmpf ogt, %146, %264 : vector<16x8xf32>
    %cst_86 = arith.constant 0.000000e+00 : f32
    %266 = vector.broadcast %cst_86 : f32 to vector<16x8xf32>
    %267 = arith.minimumf %146, %266 : vector<16x8xf32>
    %268 = math.exp %267 : vector<16x8xf32>
    %cst_87 = arith.constant 1.000000e+00 : f32
    %269 = vector.broadcast %cst_87 : f32 to vector<16x8xf32>
    %270 = arith.subf %268, %269 : vector<16x8xf32>
    %271 = arith.select %265, %146, %270 : vector<16x8xi1>, vector<16x8xf32>
    %c0_88 = arith.constant 0 : index
    %c32 = arith.constant 32 : index
    %272 = vector.load %arg12[%c0_88, %c32] : memref<16x64xf32, #tpu.memory_space<vmem>>, vector<16x8xf32>
    tpu.vector_store %arg12[%c0_88, %c32], %271 {strides = array<i32>} : memref<16x64xf32, #tpu.memory_space<vmem>>, vector<16x8xf32>,
    %cst_89 = arith.constant 0.000000e+00 : f32
    %273 = vector.broadcast %cst_89 : f32 to vector<16x8xf32>
    %274 = arith.cmpf ogt, %173, %273 : vector<16x8xf32>
    %cst_90 = arith.constant 0.000000e+00 : f32
    %275 = vector.broadcast %cst_90 : f32 to vector<16x8xf32>
    %276 = arith.minimumf %173, %275 : vector<16x8xf32>
    %277 = math.exp %276 : vector<16x8xf32>
    %cst_91 = arith.constant 1.000000e+00 : f32
    %278 = vector.broadcast %cst_91 : f32 to vector<16x8xf32>
    %279 = arith.subf %277, %278 : vector<16x8xf32>
    %280 = arith.select %274, %173, %279 : vector<16x8xi1>, vector<16x8xf32>
    %c0_92 = arith.constant 0 : index
    %c40 = arith.constant 40 : index
    %281 = vector.load %arg12[%c0_92, %c40] : memref<16x64xf32, #tpu.memory_space<vmem>>, vector<16x8xf32>
    tpu.vector_store %arg12[%c0_92, %c40], %280 {strides = array<i32>} : memref<16x64xf32, #tpu.memory_space<vmem>>, vector<16x8xf32>,
    %cst_93 = arith.constant 0.000000e+00 : f32
    %282 = vector.broadcast %cst_93 : f32 to vector<16x8xf32>
    %283 = arith.cmpf ogt, %200, %282 : vector<16x8xf32>
    %cst_94 = arith.constant 0.000000e+00 : f32
    %284 = vector.broadcast %cst_94 : f32 to vector<16x8xf32>
    %285 = arith.minimumf %200, %284 : vector<16x8xf32>
    %286 = math.exp %285 : vector<16x8xf32>
    %cst_95 = arith.constant 1.000000e+00 : f32
    %287 = vector.broadcast %cst_95 : f32 to vector<16x8xf32>
    %288 = arith.subf %286, %287 : vector<16x8xf32>
    %289 = arith.select %283, %200, %288 : vector<16x8xi1>, vector<16x8xf32>
    %c0_96 = arith.constant 0 : index
    %c48 = arith.constant 48 : index
    %290 = vector.load %arg12[%c0_96, %c48] : memref<16x64xf32, #tpu.memory_space<vmem>>, vector<16x8xf32>
    tpu.vector_store %arg12[%c0_96, %c48], %289 {strides = array<i32>} : memref<16x64xf32, #tpu.memory_space<vmem>>, vector<16x8xf32>,
    %cst_97 = arith.constant 0.000000e+00 : f32
    %291 = vector.broadcast %cst_97 : f32 to vector<16x8xf32>
    %292 = arith.cmpf ogt, %227, %291 : vector<16x8xf32>
    %cst_98 = arith.constant 0.000000e+00 : f32
    %293 = vector.broadcast %cst_98 : f32 to vector<16x8xf32>
    %294 = arith.minimumf %227, %293 : vector<16x8xf32>
    %295 = math.exp %294 : vector<16x8xf32>
    %cst_99 = arith.constant 1.000000e+00 : f32
    %296 = vector.broadcast %cst_99 : f32 to vector<16x8xf32>
    %297 = arith.subf %295, %296 : vector<16x8xf32>
    %298 = arith.select %292, %227, %297 : vector<16x8xi1>, vector<16x8xf32>
    %c0_100 = arith.constant 0 : index
    %c56 = arith.constant 56 : index
    %299 = vector.load %arg12[%c0_100, %c56] : memref<16x64xf32, #tpu.memory_space<vmem>>, vector<16x8xf32>
    tpu.vector_store %arg12[%c0_100, %c56], %298 {strides = array<i32>} : memref<16x64xf32, #tpu.memory_space<vmem>>, vector<16x8xf32>,
    %c0_101 = arith.constant 0 : index
    %c0_102 = arith.constant 0 : index
    %300 = vector.load %arg12[%c0_101, %c0_102] : memref<16x64xf32, #tpu.memory_space<vmem>>, vector<16x64xf32>
    %c0_103 = arith.constant 0 : index
    %c0_104 = arith.constant 0 : index
    %301 = vector.load %arg7[%c0_103, %c0_104] : memref<64x32xf32, #tpu.memory_space<vmem>>, vector<64x32xf32>
    %cst_105 = arith.constant dense<0.000000e+00> : vector<16x32xf32>
    %302 = tpu.matmul %300, %301, %cst_105 {dimension_numbers = #tpu.dot_dimension_numbers<[1], [0], [0], [1], [0, 0, 1, 1], [], []>} : vector<16x64xf32>, vector<64x32xf32>, vector<16x32xf32> -> vector<16x32xf32>
    %c0_106 = arith.constant 0 : index
    %c0_107 = arith.constant 0 : index
    %303 = vector.load %arg8[%c0_106, %c0_107] : memref<1x32xf32, #tpu.memory_space<vmem>>, vector<1x32xf32>
    %304 = vector.broadcast %303 : vector<1x32xf32> to vector<16x32xf32>
    %305 = arith.addf %302, %304 : vector<16x32xf32>
    %c0_108 = arith.constant 0 : index
    %c0_109 = arith.constant 0 : index
    %306 = vector.load %arg9[%c0_108, %c0_109] : memref<32x16xf32, #tpu.memory_space<vmem>>, vector<32x16xf32>
    %cst_110 = arith.constant dense<0.000000e+00> : vector<16x16xf32>
    %307 = tpu.matmul %305, %306, %cst_110 {dimension_numbers = #tpu.dot_dimension_numbers<[1], [0], [0], [1], [0, 0, 1, 1], [], []>} : vector<16x32xf32>, vector<32x16xf32>, vector<16x16xf32> -> vector<16x16xf32>
    %c0_111 = arith.constant 0 : index
    %c0_112 = arith.constant 0 : index
    %308 = vector.load %arg10[%c0_111, %c0_112] : memref<1x16xf32, #tpu.memory_space<vmem>>, vector<1x16xf32>
    %309 = vector.broadcast %308 : vector<1x16xf32> to vector<16x16xf32>
    %310 = arith.addf %307, %309 : vector<16x16xf32>
    %311 = vector.extract_strided_slice %310 {offsets = [0, 0], sizes = [16, 1], strides = [1, 1]} : vector<16x16xf32> to vector<16x1xf32>
    %312 = vector.extract_strided_slice %310 {offsets = [0, 8], sizes = [16, 1], strides = [1, 1]} : vector<16x16xf32> to vector<16x1xf32>
    %313 = tpu.transpose %312, [1, 0] : vector<16x1xf32> -> vector<1x16xf32>
    %314 = vector.broadcast %311 : vector<16x1xf32> to vector<16x16xf32>
    %315 = vector.broadcast %313 : vector<1x16xf32> to vector<16x16xf32>
    %316 = arith.addf %314, %315 : vector<16x16xf32>
    %cst_113 = arith.constant 0.000000e+00 : f32
    %317 = vector.broadcast %cst_113 : f32 to vector<16x16xf32>
    %318 = arith.cmpf ogt, %316, %317 : vector<16x16xf32>
    %cst_114 = arith.constant 2.000000e-01 : f32
    %319 = vector.broadcast %cst_114 : f32 to vector<16x16xf32>
    %320 = arith.mulf %319, %316 : vector<16x16xf32>
    %321 = arith.select %318, %316, %320 : vector<16x16xi1>, vector<16x16xf32>
    %cst_115 = arith.constant 0.000000e+00 : f32
    %322 = vector.broadcast %cst_115 : f32 to vector<16x16xf32>
    %323 = arith.cmpf ogt, %0, %322 : vector<16x16xf32>
    %cst_116 = arith.constant -9.000000e+15 : f32
    %324 = vector.broadcast %cst_116 : f32 to vector<16x16xf32>
    %325 = arith.select %323, %321, %324 : vector<16x16xi1>, vector<16x16xf32>
    %cst_117 = arith.constant dense<0xFF800000> : vector<16xf32>
    %326 = vector.multi_reduction <maximumf>, %325, %cst_117 [1] : vector<16x16xf32> to vector<16xf32>
    %327 = vector.shape_cast %326 : vector<16xf32> to vector<16x1xf32>
    %328 = vector.broadcast %327 : vector<16x1xf32> to vector<16x16xf32>
    %329 = arith.subf %325, %328 : vector<16x16xf32>
    %330 = math.exp %329 : vector<16x16xf32>
    %cst_118 = arith.constant dense<0.000000e+00> : vector<16xf32>
    %331 = vector.multi_reduction <add>, %330, %cst_118 [1] : vector<16x16xf32> to vector<16xf32>
    %332 = vector.shape_cast %331 : vector<16xf32> to vector<16x1xf32>
    %333 = tpu.reciprocal %332 {approx = true} : vector<16x1xf32> -> vector<16x1xf32>
    %334 = vector.broadcast %333 : vector<16x1xf32> to vector<16x16xf32>
    %335 = arith.mulf %330, %334 : vector<16x16xf32>
    %336 = vector.extract_strided_slice %305 {offsets = [0, 0], sizes = [16, 4], strides = [1, 1]} : vector<16x32xf32> to vector<16x4xf32>
    %cst_119 = arith.constant dense<0.000000e+00> : vector<16x4xf32>
    %337 = tpu.matmul %335, %336, %cst_119 {dimension_numbers = #tpu.dot_dimension_numbers<[1], [0], [0], [1], [0, 0, 1, 1], [], []>} : vector<16x16xf32>, vector<16x4xf32>, vector<16x4xf32> -> vector<16x4xf32>
    %338 = vector.extract_strided_slice %310 {offsets = [0, 1], sizes = [16, 1], strides = [1, 1]} : vector<16x16xf32> to vector<16x1xf32>
    %339 = vector.extract_strided_slice %310 {offsets = [0, 9], sizes = [16, 1], strides = [1, 1]} : vector<16x16xf32> to vector<16x1xf32>
    %340 = tpu.transpose %339, [1, 0] : vector<16x1xf32> -> vector<1x16xf32>
    %341 = vector.broadcast %338 : vector<16x1xf32> to vector<16x16xf32>
    %342 = vector.broadcast %340 : vector<1x16xf32> to vector<16x16xf32>
    %343 = arith.addf %341, %342 : vector<16x16xf32>
    %cst_120 = arith.constant 0.000000e+00 : f32
    %344 = vector.broadcast %cst_120 : f32 to vector<16x16xf32>
    %345 = arith.cmpf ogt, %343, %344 : vector<16x16xf32>
    %cst_121 = arith.constant 2.000000e-01 : f32
    %346 = vector.broadcast %cst_121 : f32 to vector<16x16xf32>
    %347 = arith.mulf %346, %343 : vector<16x16xf32>
    %348 = arith.select %345, %343, %347 : vector<16x16xi1>, vector<16x16xf32>
    %cst_122 = arith.constant 0.000000e+00 : f32
    %349 = vector.broadcast %cst_122 : f32 to vector<16x16xf32>
    %350 = arith.cmpf ogt, %0, %349 : vector<16x16xf32>
    %cst_123 = arith.constant -9.000000e+15 : f32
    %351 = vector.broadcast %cst_123 : f32 to vector<16x16xf32>
    %352 = arith.select %350, %348, %351 : vector<16x16xi1>, vector<16x16xf32>
    %cst_124 = arith.constant dense<0xFF800000> : vector<16xf32>
    %353 = vector.multi_reduction <maximumf>, %352, %cst_124 [1] : vector<16x16xf32> to vector<16xf32>
    %354 = vector.shape_cast %353 : vector<16xf32> to vector<16x1xf32>
    %355 = vector.broadcast %354 : vector<16x1xf32> to vector<16x16xf32>
    %356 = arith.subf %352, %355 : vector<16x16xf32>
    %357 = math.exp %356 : vector<16x16xf32>
    %cst_125 = arith.constant dense<0.000000e+00> : vector<16xf32>
    %358 = vector.multi_reduction <add>, %357, %cst_125 [1] : vector<16x16xf32> to vector<16xf32>
    %359 = vector.shape_cast %358 : vector<16xf32> to vector<16x1xf32>
    %360 = tpu.reciprocal %359 {approx = true} : vector<16x1xf32> -> vector<16x1xf32>
    %361 = vector.broadcast %360 : vector<16x1xf32> to vector<16x16xf32>
    %362 = arith.mulf %357, %361 : vector<16x16xf32>
    %363 = vector.extract_strided_slice %305 {offsets = [0, 4], sizes = [16, 4], strides = [1, 1]} : vector<16x32xf32> to vector<16x4xf32>
    %cst_126 = arith.constant dense<0.000000e+00> : vector<16x4xf32>
    %364 = tpu.matmul %362, %363, %cst_126 {dimension_numbers = #tpu.dot_dimension_numbers<[1], [0], [0], [1], [0, 0, 1, 1], [], []>} : vector<16x16xf32>, vector<16x4xf32>, vector<16x4xf32> -> vector<16x4xf32>
    %365 = vector.extract_strided_slice %310 {offsets = [0, 2], sizes = [16, 1], strides = [1, 1]} : vector<16x16xf32> to vector<16x1xf32>
    %366 = vector.extract_strided_slice %310 {offsets = [0, 10], sizes = [16, 1], strides = [1, 1]} : vector<16x16xf32> to vector<16x1xf32>
    %367 = tpu.transpose %366, [1, 0] : vector<16x1xf32> -> vector<1x16xf32>
    %368 = vector.broadcast %365 : vector<16x1xf32> to vector<16x16xf32>
    %369 = vector.broadcast %367 : vector<1x16xf32> to vector<16x16xf32>
    %370 = arith.addf %368, %369 : vector<16x16xf32>
    %cst_127 = arith.constant 0.000000e+00 : f32
    %371 = vector.broadcast %cst_127 : f32 to vector<16x16xf32>
    %372 = arith.cmpf ogt, %370, %371 : vector<16x16xf32>
    %cst_128 = arith.constant 2.000000e-01 : f32
    %373 = vector.broadcast %cst_128 : f32 to vector<16x16xf32>
    %374 = arith.mulf %373, %370 : vector<16x16xf32>
    %375 = arith.select %372, %370, %374 : vector<16x16xi1>, vector<16x16xf32>
    %cst_129 = arith.constant 0.000000e+00 : f32
    %376 = vector.broadcast %cst_129 : f32 to vector<16x16xf32>
    %377 = arith.cmpf ogt, %0, %376 : vector<16x16xf32>
    %cst_130 = arith.constant -9.000000e+15 : f32
    %378 = vector.broadcast %cst_130 : f32 to vector<16x16xf32>
    %379 = arith.select %377, %375, %378 : vector<16x16xi1>, vector<16x16xf32>
    %cst_131 = arith.constant dense<0xFF800000> : vector<16xf32>
    %380 = vector.multi_reduction <maximumf>, %379, %cst_131 [1] : vector<16x16xf32> to vector<16xf32>
    %381 = vector.shape_cast %380 : vector<16xf32> to vector<16x1xf32>
    %382 = vector.broadcast %381 : vector<16x1xf32> to vector<16x16xf32>
    %383 = arith.subf %379, %382 : vector<16x16xf32>
    %384 = math.exp %383 : vector<16x16xf32>
    %cst_132 = arith.constant dense<0.000000e+00> : vector<16xf32>
    %385 = vector.multi_reduction <add>, %384, %cst_132 [1] : vector<16x16xf32> to vector<16xf32>
    %386 = vector.shape_cast %385 : vector<16xf32> to vector<16x1xf32>
    %387 = tpu.reciprocal %386 {approx = true} : vector<16x1xf32> -> vector<16x1xf32>
    %388 = vector.broadcast %387 : vector<16x1xf32> to vector<16x16xf32>
    %389 = arith.mulf %384, %388 : vector<16x16xf32>
    %390 = vector.extract_strided_slice %305 {offsets = [0, 8], sizes = [16, 4], strides = [1, 1]} : vector<16x32xf32> to vector<16x4xf32>
    %cst_133 = arith.constant dense<0.000000e+00> : vector<16x4xf32>
    %391 = tpu.matmul %389, %390, %cst_133 {dimension_numbers = #tpu.dot_dimension_numbers<[1], [0], [0], [1], [0, 0, 1, 1], [], []>} : vector<16x16xf32>, vector<16x4xf32>, vector<16x4xf32> -> vector<16x4xf32>
    %392 = vector.extract_strided_slice %310 {offsets = [0, 3], sizes = [16, 1], strides = [1, 1]} : vector<16x16xf32> to vector<16x1xf32>
    %393 = vector.extract_strided_slice %310 {offsets = [0, 11], sizes = [16, 1], strides = [1, 1]} : vector<16x16xf32> to vector<16x1xf32>
    %394 = tpu.transpose %393, [1, 0] : vector<16x1xf32> -> vector<1x16xf32>
    %395 = vector.broadcast %392 : vector<16x1xf32> to vector<16x16xf32>
    %396 = vector.broadcast %394 : vector<1x16xf32> to vector<16x16xf32>
    %397 = arith.addf %395, %396 : vector<16x16xf32>
    %cst_134 = arith.constant 0.000000e+00 : f32
    %398 = vector.broadcast %cst_134 : f32 to vector<16x16xf32>
    %399 = arith.cmpf ogt, %397, %398 : vector<16x16xf32>
    %cst_135 = arith.constant 2.000000e-01 : f32
    %400 = vector.broadcast %cst_135 : f32 to vector<16x16xf32>
    %401 = arith.mulf %400, %397 : vector<16x16xf32>
    %402 = arith.select %399, %397, %401 : vector<16x16xi1>, vector<16x16xf32>
    %cst_136 = arith.constant 0.000000e+00 : f32
    %403 = vector.broadcast %cst_136 : f32 to vector<16x16xf32>
    %404 = arith.cmpf ogt, %0, %403 : vector<16x16xf32>
    %cst_137 = arith.constant -9.000000e+15 : f32
    %405 = vector.broadcast %cst_137 : f32 to vector<16x16xf32>
    %406 = arith.select %404, %402, %405 : vector<16x16xi1>, vector<16x16xf32>
    %cst_138 = arith.constant dense<0xFF800000> : vector<16xf32>
    %407 = vector.multi_reduction <maximumf>, %406, %cst_138 [1] : vector<16x16xf32> to vector<16xf32>
    %408 = vector.shape_cast %407 : vector<16xf32> to vector<16x1xf32>
    %409 = vector.broadcast %408 : vector<16x1xf32> to vector<16x16xf32>
    %410 = arith.subf %406, %409 : vector<16x16xf32>
    %411 = math.exp %410 : vector<16x16xf32>
    %cst_139 = arith.constant dense<0.000000e+00> : vector<16xf32>
    %412 = vector.multi_reduction <add>, %411, %cst_139 [1] : vector<16x16xf32> to vector<16xf32>
    %413 = vector.shape_cast %412 : vector<16xf32> to vector<16x1xf32>
    %414 = tpu.reciprocal %413 {approx = true} : vector<16x1xf32> -> vector<16x1xf32>
    %415 = vector.broadcast %414 : vector<16x1xf32> to vector<16x16xf32>
    %416 = arith.mulf %411, %415 : vector<16x16xf32>
    %417 = vector.extract_strided_slice %305 {offsets = [0, 12], sizes = [16, 4], strides = [1, 1]} : vector<16x32xf32> to vector<16x4xf32>
    %cst_140 = arith.constant dense<0.000000e+00> : vector<16x4xf32>
    %418 = tpu.matmul %416, %417, %cst_140 {dimension_numbers = #tpu.dot_dimension_numbers<[1], [0], [0], [1], [0, 0, 1, 1], [], []>} : vector<16x16xf32>, vector<16x4xf32>, vector<16x4xf32> -> vector<16x4xf32>
    %419 = vector.extract_strided_slice %310 {offsets = [0, 4], sizes = [16, 1], strides = [1, 1]} : vector<16x16xf32> to vector<16x1xf32>
    %420 = vector.extract_strided_slice %310 {offsets = [0, 12], sizes = [16, 1], strides = [1, 1]} : vector<16x16xf32> to vector<16x1xf32>
    %421 = tpu.transpose %420, [1, 0] : vector<16x1xf32> -> vector<1x16xf32>
    %422 = vector.broadcast %419 : vector<16x1xf32> to vector<16x16xf32>
    %423 = vector.broadcast %421 : vector<1x16xf32> to vector<16x16xf32>
    %424 = arith.addf %422, %423 : vector<16x16xf32>
    %cst_141 = arith.constant 0.000000e+00 : f32
    %425 = vector.broadcast %cst_141 : f32 to vector<16x16xf32>
    %426 = arith.cmpf ogt, %424, %425 : vector<16x16xf32>
    %cst_142 = arith.constant 2.000000e-01 : f32
    %427 = vector.broadcast %cst_142 : f32 to vector<16x16xf32>
    %428 = arith.mulf %427, %424 : vector<16x16xf32>
    %429 = arith.select %426, %424, %428 : vector<16x16xi1>, vector<16x16xf32>
    %cst_143 = arith.constant 0.000000e+00 : f32
    %430 = vector.broadcast %cst_143 : f32 to vector<16x16xf32>
    %431 = arith.cmpf ogt, %0, %430 : vector<16x16xf32>
    %cst_144 = arith.constant -9.000000e+15 : f32
    %432 = vector.broadcast %cst_144 : f32 to vector<16x16xf32>
    %433 = arith.select %431, %429, %432 : vector<16x16xi1>, vector<16x16xf32>
    %cst_145 = arith.constant dense<0xFF800000> : vector<16xf32>
    %434 = vector.multi_reduction <maximumf>, %433, %cst_145 [1] : vector<16x16xf32> to vector<16xf32>
    %435 = vector.shape_cast %434 : vector<16xf32> to vector<16x1xf32>
    %436 = vector.broadcast %435 : vector<16x1xf32> to vector<16x16xf32>
    %437 = arith.subf %433, %436 : vector<16x16xf32>
    %438 = math.exp %437 : vector<16x16xf32>
    %cst_146 = arith.constant dense<0.000000e+00> : vector<16xf32>
    %439 = vector.multi_reduction <add>, %438, %cst_146 [1] : vector<16x16xf32> to vector<16xf32>
    %440 = vector.shape_cast %439 : vector<16xf32> to vector<16x1xf32>
    %441 = tpu.reciprocal %440 {approx = true} : vector<16x1xf32> -> vector<16x1xf32>
    %442 = vector.broadcast %441 : vector<16x1xf32> to vector<16x16xf32>
    %443 = arith.mulf %438, %442 : vector<16x16xf32>
    %444 = vector.extract_strided_slice %305 {offsets = [0, 16], sizes = [16, 4], strides = [1, 1]} : vector<16x32xf32> to vector<16x4xf32>
    %cst_147 = arith.constant dense<0.000000e+00> : vector<16x4xf32>
    %445 = tpu.matmul %443, %444, %cst_147 {dimension_numbers = #tpu.dot_dimension_numbers<[1], [0], [0], [1], [0, 0, 1, 1], [], []>} : vector<16x16xf32>, vector<16x4xf32>, vector<16x4xf32> -> vector<16x4xf32>
    %446 = vector.extract_strided_slice %310 {offsets = [0, 5], sizes = [16, 1], strides = [1, 1]} : vector<16x16xf32> to vector<16x1xf32>
    %447 = vector.extract_strided_slice %310 {offsets = [0, 13], sizes = [16, 1], strides = [1, 1]} : vector<16x16xf32> to vector<16x1xf32>
    %448 = tpu.transpose %447, [1, 0] : vector<16x1xf32> -> vector<1x16xf32>
    %449 = vector.broadcast %446 : vector<16x1xf32> to vector<16x16xf32>
    %450 = vector.broadcast %448 : vector<1x16xf32> to vector<16x16xf32>
    %451 = arith.addf %449, %450 : vector<16x16xf32>
    %cst_148 = arith.constant 0.000000e+00 : f32
    %452 = vector.broadcast %cst_148 : f32 to vector<16x16xf32>
    %453 = arith.cmpf ogt, %451, %452 : vector<16x16xf32>
    %cst_149 = arith.constant 2.000000e-01 : f32
    %454 = vector.broadcast %cst_149 : f32 to vector<16x16xf32>
    %455 = arith.mulf %454, %451 : vector<16x16xf32>
    %456 = arith.select %453, %451, %455 : vector<16x16xi1>, vector<16x16xf32>
    %cst_150 = arith.constant 0.000000e+00 : f32
    %457 = vector.broadcast %cst_150 : f32 to vector<16x16xf32>
    %458 = arith.cmpf ogt, %0, %457 : vector<16x16xf32>
    %cst_151 = arith.constant -9.000000e+15 : f32
    %459 = vector.broadcast %cst_151 : f32 to vector<16x16xf32>
    %460 = arith.select %458, %456, %459 : vector<16x16xi1>, vector<16x16xf32>
    %cst_152 = arith.constant dense<0xFF800000> : vector<16xf32>
    %461 = vector.multi_reduction <maximumf>, %460, %cst_152 [1] : vector<16x16xf32> to vector<16xf32>
    %462 = vector.shape_cast %461 : vector<16xf32> to vector<16x1xf32>
    %463 = vector.broadcast %462 : vector<16x1xf32> to vector<16x16xf32>
    %464 = arith.subf %460, %463 : vector<16x16xf32>
    %465 = math.exp %464 : vector<16x16xf32>
    %cst_153 = arith.constant dense<0.000000e+00> : vector<16xf32>
    %466 = vector.multi_reduction <add>, %465, %cst_153 [1] : vector<16x16xf32> to vector<16xf32>
    %467 = vector.shape_cast %466 : vector<16xf32> to vector<16x1xf32>
    %468 = tpu.reciprocal %467 {approx = true} : vector<16x1xf32> -> vector<16x1xf32>
    %469 = vector.broadcast %468 : vector<16x1xf32> to vector<16x16xf32>
    %470 = arith.mulf %465, %469 : vector<16x16xf32>
    %471 = vector.extract_strided_slice %305 {offsets = [0, 20], sizes = [16, 4], strides = [1, 1]} : vector<16x32xf32> to vector<16x4xf32>
    %cst_154 = arith.constant dense<0.000000e+00> : vector<16x4xf32>
    %472 = tpu.matmul %470, %471, %cst_154 {dimension_numbers = #tpu.dot_dimension_numbers<[1], [0], [0], [1], [0, 0, 1, 1], [], []>} : vector<16x16xf32>, vector<16x4xf32>, vector<16x4xf32> -> vector<16x4xf32>
    %473 = vector.extract_strided_slice %310 {offsets = [0, 6], sizes = [16, 1], strides = [1, 1]} : vector<16x16xf32> to vector<16x1xf32>
    %474 = vector.extract_strided_slice %310 {offsets = [0, 14], sizes = [16, 1], strides = [1, 1]} : vector<16x16xf32> to vector<16x1xf32>
    %475 = tpu.transpose %474, [1, 0] : vector<16x1xf32> -> vector<1x16xf32>
    %476 = vector.broadcast %473 : vector<16x1xf32> to vector<16x16xf32>
    %477 = vector.broadcast %475 : vector<1x16xf32> to vector<16x16xf32>
    %478 = arith.addf %476, %477 : vector<16x16xf32>
    %cst_155 = arith.constant 0.000000e+00 : f32
    %479 = vector.broadcast %cst_155 : f32 to vector<16x16xf32>
    %480 = arith.cmpf ogt, %478, %479 : vector<16x16xf32>
    %cst_156 = arith.constant 2.000000e-01 : f32
    %481 = vector.broadcast %cst_156 : f32 to vector<16x16xf32>
    %482 = arith.mulf %481, %478 : vector<16x16xf32>
    %483 = arith.select %480, %478, %482 : vector<16x16xi1>, vector<16x16xf32>
    %cst_157 = arith.constant 0.000000e+00 : f32
    %484 = vector.broadcast %cst_157 : f32 to vector<16x16xf32>
    %485 = arith.cmpf ogt, %0, %484 : vector<16x16xf32>
    %cst_158 = arith.constant -9.000000e+15 : f32
    %486 = vector.broadcast %cst_158 : f32 to vector<16x16xf32>
    %487 = arith.select %485, %483, %486 : vector<16x16xi1>, vector<16x16xf32>
    %cst_159 = arith.constant dense<0xFF800000> : vector<16xf32>
    %488 = vector.multi_reduction <maximumf>, %487, %cst_159 [1] : vector<16x16xf32> to vector<16xf32>
    %489 = vector.shape_cast %488 : vector<16xf32> to vector<16x1xf32>
    %490 = vector.broadcast %489 : vector<16x1xf32> to vector<16x16xf32>
    %491 = arith.subf %487, %490 : vector<16x16xf32>
    %492 = math.exp %491 : vector<16x16xf32>
    %cst_160 = arith.constant dense<0.000000e+00> : vector<16xf32>
    %493 = vector.multi_reduction <add>, %492, %cst_160 [1] : vector<16x16xf32> to vector<16xf32>
    %494 = vector.shape_cast %493 : vector<16xf32> to vector<16x1xf32>
    %495 = tpu.reciprocal %494 {approx = true} : vector<16x1xf32> -> vector<16x1xf32>
    %496 = vector.broadcast %495 : vector<16x1xf32> to vector<16x16xf32>
    %497 = arith.mulf %492, %496 : vector<16x16xf32>
    %498 = vector.extract_strided_slice %305 {offsets = [0, 24], sizes = [16, 4], strides = [1, 1]} : vector<16x32xf32> to vector<16x4xf32>
    %cst_161 = arith.constant dense<0.000000e+00> : vector<16x4xf32>
    %499 = tpu.matmul %497, %498, %cst_161 {dimension_numbers = #tpu.dot_dimension_numbers<[1], [0], [0], [1], [0, 0, 1, 1], [], []>} : vector<16x16xf32>, vector<16x4xf32>, vector<16x4xf32> -> vector<16x4xf32>
    %500 = vector.extract_strided_slice %310 {offsets = [0, 7], sizes = [16, 1], strides = [1, 1]} : vector<16x16xf32> to vector<16x1xf32>
    %501 = vector.extract_strided_slice %310 {offsets = [0, 15], sizes = [16, 1], strides = [1, 1]} : vector<16x16xf32> to vector<16x1xf32>
    %502 = tpu.transpose %501, [1, 0] : vector<16x1xf32> -> vector<1x16xf32>
    %503 = vector.broadcast %500 : vector<16x1xf32> to vector<16x16xf32>
    %504 = vector.broadcast %502 : vector<1x16xf32> to vector<16x16xf32>
    %505 = arith.addf %503, %504 : vector<16x16xf32>
    %cst_162 = arith.constant 0.000000e+00 : f32
    %506 = vector.broadcast %cst_162 : f32 to vector<16x16xf32>
    %507 = arith.cmpf ogt, %505, %506 : vector<16x16xf32>
    %cst_163 = arith.constant 2.000000e-01 : f32
    %508 = vector.broadcast %cst_163 : f32 to vector<16x16xf32>
    %509 = arith.mulf %508, %505 : vector<16x16xf32>
    %510 = arith.select %507, %505, %509 : vector<16x16xi1>, vector<16x16xf32>
    %cst_164 = arith.constant 0.000000e+00 : f32
    %511 = vector.broadcast %cst_164 : f32 to vector<16x16xf32>
    %512 = arith.cmpf ogt, %0, %511 : vector<16x16xf32>
    %cst_165 = arith.constant -9.000000e+15 : f32
    %513 = vector.broadcast %cst_165 : f32 to vector<16x16xf32>
    %514 = arith.select %512, %510, %513 : vector<16x16xi1>, vector<16x16xf32>
    %cst_166 = arith.constant dense<0xFF800000> : vector<16xf32>
    %515 = vector.multi_reduction <maximumf>, %514, %cst_166 [1] : vector<16x16xf32> to vector<16xf32>
    %516 = vector.shape_cast %515 : vector<16xf32> to vector<16x1xf32>
    %517 = vector.broadcast %516 : vector<16x1xf32> to vector<16x16xf32>
    %518 = arith.subf %514, %517 : vector<16x16xf32>
    %519 = math.exp %518 : vector<16x16xf32>
    %cst_167 = arith.constant dense<0.000000e+00> : vector<16xf32>
    %520 = vector.multi_reduction <add>, %519, %cst_167 [1] : vector<16x16xf32> to vector<16xf32>
    %521 = vector.shape_cast %520 : vector<16xf32> to vector<16x1xf32>
    %522 = tpu.reciprocal %521 {approx = true} : vector<16x1xf32> -> vector<16x1xf32>
    %523 = vector.broadcast %522 : vector<16x1xf32> to vector<16x16xf32>
    %524 = arith.mulf %519, %523 : vector<16x16xf32>
    %525 = vector.extract_strided_slice %305 {offsets = [0, 28], sizes = [16, 4], strides = [1, 1]} : vector<16x32xf32> to vector<16x4xf32>
    %cst_168 = arith.constant dense<0.000000e+00> : vector<16x4xf32>
    %526 = tpu.matmul %524, %525, %cst_168 {dimension_numbers = #tpu.dot_dimension_numbers<[1], [0], [0], [1], [0, 0, 1, 1], [], []>} : vector<16x16xf32>, vector<16x4xf32>, vector<16x4xf32> -> vector<16x4xf32>
    %527 = arith.addf %337, %364 : vector<16x4xf32>
    %528 = arith.addf %527, %391 : vector<16x4xf32>
    %529 = arith.addf %528, %418 : vector<16x4xf32>
    %530 = arith.addf %529, %445 : vector<16x4xf32>
    %531 = arith.addf %530, %472 : vector<16x4xf32>
    %532 = arith.addf %531, %499 : vector<16x4xf32>
    %533 = arith.addf %532, %526 : vector<16x4xf32>
    %cst_169 = arith.constant 1.250000e-01 : f32
    %534 = vector.broadcast %cst_169 : f32 to vector<16x4xf32>
    %535 = arith.mulf %533, %534 : vector<16x4xf32>
    %c0_170 = arith.constant 0 : index
    %c0_171 = arith.constant 0 : index
    %536 = vector.load %arg11[%c0_170, %c0_171] : memref<16x4xf32, #tpu.memory_space<vmem>>, vector<16x4xf32>
    tpu.vector_store %arg11[%c0_170, %c0_171], %535 {strides = array<i32>} : memref<16x4xf32, #tpu.memory_space<vmem>>, vector<16x4xf32>,
    return
  }
  func.func @transform_0(%arg0: i32) -> (i32, i32) {
    %c0_i32 = arith.constant 0 : i32
    %c0_i32_0 = arith.constant 0 : i32
    %c0_i32_1 = arith.constant 0 : i32
    return %c0_i32, %c0_i32_0 : i32, i32
  }
  func.func @transform_1(%arg0: i32) -> (i32, i32) {
    %c0_i32 = arith.constant 0 : i32
    %c0_i32_0 = arith.constant 0 : i32
    %c0_i32_1 = arith.constant 0 : i32
    return %c0_i32, %c0_i32_0 : i32, i32
  }
  func.func @transform_2(%arg0: i32) -> (i32, i32) {
    %c0_i32 = arith.constant 0 : i32
    %c0_i32_0 = arith.constant 0 : i32
    %c0_i32_1 = arith.constant 0 : i32
    return %c0_i32, %c0_i32_0 : i32, i32
  }
  func.func @transform_3(%arg0: i32) -> (i32, i32) {
    %c0_i32 = arith.constant 0 : i32
    %c0_i32_0 = arith.constant 0 : i32
    %c0_i32_1 = arith.constant 0 : i32
    return %c0_i32, %c0_i32_0 : i32, i32
  }
  func.func @transform_4(%arg0: i32) -> (i32, i32) {
    %c0_i32 = arith.constant 0 : i32
    %c0_i32_0 = arith.constant 0 : i32
    %c0_i32_1 = arith.constant 0 : i32
    return %c0_i32, %c0_i32_0 : i32, i32
  }
  func.func @transform_5(%arg0: i32) -> (i32, i32) {
    %c0_i32 = arith.constant 0 : i32
    %c0_i32_0 = arith.constant 0 : i32
    %c0_i32_1 = arith.constant 0 : i32
    return %c0_i32, %c0_i32_0 : i32, i32
  }
  func.func @transform_6(%arg0: i32) -> (i32, i32) {
    %c0_i32 = arith.constant 0 : i32
    %c0_i32_0 = arith.constant 0 : i32
    %c0_i32_1 = arith.constant 0 : i32
    return %c0_i32, %c0_i32_0 : i32, i32
  }
  func.func @transform_7(%arg0: i32) -> (i32, i32) {
    %c0_i32 = arith.constant 0 : i32
    %c0_i32_0 = arith.constant 0 : i32
    %c0_i32_1 = arith.constant 0 : i32
    return %c0_i32, %c0_i32_0 : i32, i32
  }
  func.func @transform_8(%arg0: i32) -> (i32, i32) {
    %c0_i32 = arith.constant 0 : i32
    %c0_i32_0 = arith.constant 0 : i32
    %c0_i32_1 = arith.constant 0 : i32
    return %c0_i32, %c0_i32_0 : i32, i32
  }
  func.func @transform_9(%arg0: i32) -> (i32, i32) {
    %c0_i32 = arith.constant 0 : i32
    %c0_i32_0 = arith.constant 0 : i32
    %c0_i32_1 = arith.constant 0 : i32
    return %c0_i32, %c0_i32_0 : i32, i32
  }
  func.func @transform_10(%arg0: i32) -> (i32, i32) {
    %c0_i32 = arith.constant 0 : i32
    %c0_i32_0 = arith.constant 0 : i32
    %c0_i32_1 = arith.constant 0 : i32
    return %c0_i32, %c0_i32_0 : i32, i32
  }
}

</mosaic_0001>

<llo_original>
// kernel: tpu_custom_call.1
$region0: #{tpu_custom_call.1}
  #allocation0 [shape = 'u32[]', space=smem, size = 0x4, offset = 0x4, fixed_abs, tag = 'smem constant byte address 0x4 - core index']
  #allocation1 [shape = 'u32[144,128]{1,0:T(1,128)}', space=vmem, size = 0x12000, scoped, tag = 'internal scratch']
  #allocation2 [shape = 'f32[16,64]{1,0:T(8,128)}', space=vmem, size = 0x2000, scoped, tag = 'scratch operand']
  %s0 = inlined_call_operand.vmem [shape: f32[16,16], index: 0, kind: input, shape index: {}]
  %s1 = inlined_call_operand.vmem [shape: f32[16,16], index: 1, kind: input, shape index: {}]
  %s2 = inlined_call_operand.vmem [shape: f32[16,64], index: 2, kind: input, shape index: {}]
  %s3 = inlined_call_operand.vmem [shape: f32[1,64], index: 3, kind: input, shape index: {}]
  %s4 = inlined_call_operand.vmem [shape: f32[64,16], index: 4, kind: input, shape index: {}]
  %s5 = inlined_call_operand.vmem [shape: f32[1,16], index: 5, kind: input, shape index: {}]
  %s6 = inlined_call_operand.vmem [shape: f32[64,32], index: 6, kind: input, shape index: {}]
  %s7 = inlined_call_operand.vmem [shape: f32[1,32], index: 7, kind: input, shape index: {}]
  %s8 = inlined_call_operand.vmem [shape: f32[32,16], index: 8, kind: input, shape index: {}]
  %s9 = inlined_call_operand.vmem [shape: f32[1,16], index: 9, kind: input, shape index: {}]
  %s10 = inlined_call_operand.vmem [shape: f32[16,4], index: 10, kind: output, shape index: {}]
  %s11 = sld [smem:[#allocation0]]
  $region50: #{tpu_custom_call.1} parent=0
    _
  %s13 = ssub.s32 1, %s11
  %s14 = scalar_select 0, %s13, %s11
  // Predicated region
  $region2: #{tpu_custom_call.1} parent=0 // pred_check
    _
  $region3: #{tpu_custom_call.1} parent=0 // pred_check_branch
    %16 = sbr.rel (0) target = $region5
  $region4: #{tpu_custom_call.1} parent=0 // pred_region
    _
  $region5: #{tpu_custom_call.1} parent=0 // pred_fallthru
    _
  // Predicated region
  $region6: #{tpu_custom_call.1} parent=0 // pred_check
    _
  $region7: #{tpu_custom_call.1} parent=0 // pred_check_branch
    %18 = sbr.rel (0) target = $region9
  $region8: #{tpu_custom_call.1} parent=0 // pred_region
    _
  $region9: #{tpu_custom_call.1} parent=0 // pred_fallthru
    _
  // Predicated region
  $region10: #{tpu_custom_call.1} parent=0 // pred_check
    _
  $region11: #{tpu_custom_call.1} parent=0 // pred_check_branch
    %20 = sbr.rel (0) target = $region13
  $region12: #{tpu_custom_call.1} parent=0 // pred_region
    _
  $region13: #{tpu_custom_call.1} parent=0 // pred_fallthru
    _
  // Predicated region
  $region14: #{tpu_custom_call.1} parent=0 // pred_check
    _
  $region15: #{tpu_custom_call.1} parent=0 // pred_check_branch
    %22 = sbr.rel (0) target = $region17
  $region16: #{tpu_custom_call.1} parent=0 // pred_region
    _
  $region17: #{tpu_custom_call.1} parent=0 // pred_fallthru
    _
  // Predicated region
  $region18: #{tpu_custom_call.1} parent=0 // pred_check
    _
  $region19: #{tpu_custom_call.1} parent=0 // pred_check_branch
    %24 = sbr.rel (0) target = $region21
  $region20: #{tpu_custom_call.1} parent=0 // pred_region
    _
  $region21: #{tpu_custom_call.1} parent=0 // pred_fallthru
    _
  // Predicated region
  $region22: #{tpu_custom_call.1} parent=0 // pred_check
    _
  $region23: #{tpu_custom_call.1} parent=0 // pred_check_branch
    %26 = sbr.rel (0) target = $region25
  $region24: #{tpu_custom_call.1} parent=0 // pred_region
    _
  $region25: #{tpu_custom_call.1} parent=0 // pred_fallthru
    _
  // Predicated region
  $region26: #{tpu_custom_call.1} parent=0 // pred_check
    _
  $region27: #{tpu_custom_call.1} parent=0 // pred_check_branch
    %28 = sbr.rel (0) target = $region29
  $region28: #{tpu_custom_call.1} parent=0 // pred_region
    _
  $region29: #{tpu_custom_call.1} parent=0 // pred_fallthru
    _
  // Predicated region
  $region30: #{tpu_custom_call.1} parent=0 // pred_check
    _
  $region31: #{tpu_custom_call.1} parent=0 // pred_check_branch
    %30 = sbr.rel (0) target = $region33
  $region32: #{tpu_custom_call.1} parent=0 // pred_region
    _
  $region33: #{tpu_custom_call.1} parent=0 // pred_fallthru
    _
  // Predicated region
  $region34: #{tpu_custom_call.1} parent=0 // pred_check
    _
  $region35: #{tpu_custom_call.1} parent=0 // pred_check_branch
    %32 = sbr.rel (0) target = $region37
  $region36: #{tpu_custom_call.1} parent=0 // pred_region
    _
  $region37: #{tpu_custom_call.1} parent=0 // pred_fallthru
    _
  // Predicated region
  $region38: #{tpu_custom_call.1} parent=0 // pred_check
    _
  $region39: #{tpu_custom_call.1} parent=0 // pred_check_branch
    %34 = sbr.rel (0) target = $region41
  $region40: #{tpu_custom_call.1} parent=0 // pred_region
    _
  $region41: #{tpu_custom_call.1} parent=0 // pred_fallthru
    _
  %v35 = vld [vmem:[%s1] sm:$0xff]
  %v36 = vld [vmem:[%s1 + $0x8] sm:$0xff]
  %v37 = vld [vmem:[%s0] sm:$0xff]
  %v38 = vld [vmem:[%s0 + $0x8] sm:$0xff]
  %v39 = vld [vmem:[%s2] sm:$0xff]
  %v40 = vld [vmem:[%s2 + $0x8] sm:$0xff]
  %v41 = vld [vmem:[%s3] sm:$0x1]
  %v43 = vlaneseq
  %v44 = vshrl.u32 %v43, 7
  %v45 = vsub.s32 0, %v44
  %v46 = vrot.slane %v41, %v45
  %vm48 = vcmask 130048
  %v50 = vsel %vm48, %v37, 0
  %v53 = vsel %vm48, %v38, 0
  %55 = vmatprep.subr.mxu0 0.0
  %56 = vmatpush1.msra.mxu0 %v39
  %57 = vmatprep.subr.mxu0 0.0
  %58 = vmatpush1.msra.mxu0 %v40
  %59 = vmatprep.subr.mxu0 0.0
  %60 = vmatpush1.msra.mxu0 0.0
  %61 = vmatprep.subr.mxu0 0.0
  %62 = vmatpush1.msra.mxu0 0.0
  %63 = vmatprep.subr.mxu0 0.0
  %64 = vmatpush1.msra.mxu0 0.0
  %65 = vmatprep.subr.mxu0 0.0
  %66 = vmatpush1.msra.mxu0 0.0
  %67 = vmatprep.subr.mxu0 0.0
  %68 = vmatpush1.msra.mxu0 0.0
  %69 = vmatprep.subr.mxu0 0.0
  %70 = vmatpush1.msra.mxu0 0.0
  %71 = vmatprep.subr.mxu0 0.0
  %72 = vmatpush1.msra.mxu0 0.0
  %73 = vmatprep.subr.mxu0 0.0
  %74 = vmatpush1.msra.mxu0 0.0
  %75 = vmatprep.subr.mxu0 0.0
  %76 = vmatpush1.msra.mxu0 0.0
  %77 = vmatprep.subr.mxu0 0.0
  %78 = vmatpush1.msra.mxu0 0.0
  %79 = vmatprep.subr.mxu0 0.0
  %80 = vmatpush1.msra.mxu0 0.0
  %81 = vmatprep.subr.mxu0 0.0
  %82 = vmatpush1.msra.mxu0 0.0
  %83 = vmatprep.subr.mxu0 0.0
  %84 = vmatpush1.msra.mxu0 0.0
  %85 = vmatprep.subr.mxu0 0.0
  %86 = vmatpush1.msra.mxu0 0.0
  %87 = vmatprep.subr.mxu0 0.0
  %88 = vmatpush1.msra.mxu0 0.0
  %89 = vmatprep.subr.mxu0 0.0
  %90 = vmatpush1.msra.mxu0 0.0
  %91 = vmatprep.subr.mxu0 0.0
  %92 = vmatpush1.msra.mxu0 0.0
  %93 = vmatprep.subr.mxu0 0.0
  %94 = vmatpush1.msra.mxu0 0.0
  %95 = vmatprep.subr.mxu0 0.0
  %96 = vmatpush1.msra.mxu0 0.0
  %97 = vmatprep.subr.mxu0 0.0
  %98 = vmatpush1.msra.mxu0 0.0
  %99 = vmatprep.subr.mxu0 0.0
  %100 = vmatpush1.msra.mxu0 0.0
  %101 = vmatprep.subr.mxu0 0.0
  %102 = vmatpush1.msra.mxu0 0.0
  %103 = vmatprep.subr.mxu0 0.0
  %104 = vmatpush1.msra.mxu0 0.0
  %105 = vmatprep.subr.mxu0 0.0
  %106 = vmatpush1.msra.mxu0 0.0
  %107 = vmatprep.subr.mxu0 0.0
  %108 = vmatpush1.msra.mxu0 0.0
  %109 = vmatprep.subr.mxu0 0.0
  %110 = vmatpush1.msra.mxu0 0.0
  %111 = vmatprep.subr.mxu0 0.0
  %112 = vmatpush1.msra.mxu0 0.0
  %113 = vmatprep.subr.mxu0 0.0
  %114 = vmatpush1.msra.mxu0 0.0
  %115 = vmatprep.subr.mxu0 0.0
  %116 = vmatpush1.msra.mxu0 0.0
  %117 = vmatprep.subr.mxu0 0.0
  %118 = vmatpush1.msra.mxu0 0.0
  %119 = vmatprep.mubr.f32.mxu0 0.0
  %120 = vmatmul.mubr.f32.gmra.mrb[0].mxu0 %v50
  %v121 = vpop.f32.mrb[0].mxu0
  %v122 = vadd.f32 %v46, %v121
  %v123 = vpop.f32.mrb[0].mxu0
  %124 = vmatprep.mubr.f32.mxu0 0.0
  %125 = vmatmul.mubr.f32.gmra.mrb[0].mxu0 %v53
  %v126 = vpop.f32.mrb[0].mxu0
  %v127 = vadd.f32 %v46, %v126
  %v128 = vpop.f32.mrb[0].mxu0
  %129 = vdwg.mxu0
  %v130 = vld [vmem:[%s4] sm:$0xff]
  %v131 = vld [vmem:[%s4 + $0x8] sm:$0xff]
  %v132 = vld [vmem:[%s4 + $0x10] sm:$0xff]
  %v133 = vld [vmem:[%s4 + $0x18] sm:$0xff]
  %v134 = vld [vmem:[%s4 + $0x20] sm:$0xff]
  %v135 = vld [vmem:[%s4 + $0x28] sm:$0xff]
  %v136 = vld [vmem:[%s4 + $0x30] sm:$0xff]
  %v137 = vld [vmem:[%s4 + $0x38] sm:$0xff]
  %v138 = vld [vmem:[%s5] sm:$0x1]
  %v140 = vlaneseq
  %v141 = vshrl.u32 %v140, 7
  %v142 = vsub.s32 0, %v141
  %v143 = vrot.slane %v138, %v142
  %vm145 = vcmask 523264
  %v147 = vsel %vm145, %v122, 0
  %v150 = vsel %vm145, %v127, 0
  %152 = vmatprep.subr.mxu0 0.0
  %153 = vmatpush1.msra.mxu0 %v130
  %154 = vmatprep.subr.mxu0 0.0
  %155 = vmatpush1.msra.mxu0 %v131
  %156 = vmatprep.subr.mxu0 0.0
  %157 = vmatpush1.msra.mxu0 %v132
  %158 = vmatprep.subr.mxu0 0.0
  %159 = vmatpush1.msra.mxu0 %v133
  %160 = vmatprep.subr.mxu0 0.0
  %161 = vmatpush1.msra.mxu0 %v134
  %162 = vmatprep.subr.mxu0 0.0
  %163 = vmatpush1.msra.mxu0 %v135
  %164 = vmatprep.subr.mxu0 0.0
  %165 = vmatpush1.msra.mxu0 %v136
  %166 = vmatprep.subr.mxu0 0.0
  %167 = vmatpush1.msra.mxu0 %v137
  %168 = vmatprep.subr.mxu0 0.0
  %169 = vmatpush1.msra.mxu0 0.0
  %170 = vmatprep.subr.mxu0 0.0
  %171 = vmatpush1.msra.mxu0 0.0
  %172 = vmatprep.subr.mxu0 0.0
  %173 = vmatpush1.msra.mxu0 0.0
  %174 = vmatprep.subr.mxu0 0.0
  %175 = vmatpush1.msra.mxu0 0.0
  %176 = vmatprep.subr.mxu0 0.0
  %177 = vmatpush1.msra.mxu0 0.0
  %178 = vmatprep.subr.mxu0 0.0
  %179 = vmatpush1.msra.mxu0 0.0
  %180 = vmatprep.subr.mxu0 0.0
  %181 = vmatpush1.msra.mxu0 0.0
  %182 = vmatprep.subr.mxu0 0.0
  %183 = vmatpush1.msra.mxu0 0.0
  %184 = vmatprep.subr.mxu0 0.0
  %185 = vmatpush1.msra.mxu0 0.0
  %186 = vmatprep.subr.mxu0 0.0
  %187 = vmatpush1.msra.mxu0 0.0
  %188 = vmatprep.subr.mxu0 0.0
  %189 = vmatpush1.msra.mxu0 0.0
  %190 = vmatprep.subr.mxu0 0.0
  %191 = vmatpush1.msra.mxu0 0.0
  %192 = vmatprep.subr.mxu0 0.0
  %193 = vmatpush1.msra.mxu0 0.0
  %194 = vmatprep.subr.mxu0 0.0
  %195 = vmatpush1.msra.mxu0 0.0
  %196 = vmatprep.subr.mxu0 0.0
  %197 = vmatpush1.msra.mxu0 0.0
  %198 = vmatprep.subr.mxu0 0.0
  %199 = vmatpush1.msra.mxu0 0.0
  %200 = vmatprep.subr.mxu0 0.0
  %201 = vmatpush1.msra.mxu0 0.0
  %202 = vmatprep.subr.mxu0 0.0
  %203 = vmatpush1.msra.mxu0 0.0
  %204 = vmatprep.subr.mxu0 0.0
  %205 = vmatpush1.msra.mxu0 0.0
  %206 = vmatprep.subr.mxu0 0.0
  %207 = vmatpush1.msra.mxu0 0.0
  %208 = vmatprep.subr.mxu0 0.0
  %209 = vmatpush1.msra.mxu0 0.0
  %210 = vmatprep.subr.mxu0 0.0
  %211 = vmatpush1.msra.mxu0 0.0
  %212 = vmatprep.subr.mxu0 0.0
  %213 = vmatpush1.msra.mxu0 0.0
  %214 = vmatprep.subr.mxu0 0.0
  %215 = vmatpush1.msra.mxu0 0.0
  %216 = vmatprep.mubr.f32.mxu0 0.0
  %217 = vmatmul.mubr.f32.gmra.mrb[0].mxu0 %v147
  %v218 = vpop.f32.mrb[0].mxu0
  %v219 = vadd.f32 %v143, %v218
  %v220 = vpop.f32.mrb[0].mxu0
  %221 = vmatprep.mubr.f32.mxu0 0.0
  %222 = vmatmul.mubr.f32.gmra.mrb[0].mxu0 %v150
  %v223 = vpop.f32.mrb[0].mxu0
  %v224 = vadd.f32 %v143, %v223
  %v225 = vpop.f32.mrb[0].mxu0
  %226 = vdwg.mxu0
  %229 = vrot.lane.b32.xlu0 %v219, 120
  %v230 = vpop.permute.xlu0 %229
  %231 = vrot.lane.b32.xlu0 %v224, 120
  %v232 = vpop.permute.xlu0 %231
  %235 = vxpose.xlu0.b32.start [1/16] %v230, 128
  %236 = vxpose.xlu0.b32.cont [2/16] %v232, 128
  %237 = vxpose.xlu0.b32.cont [3/16] 0.0, 128
  %238 = vxpose.xlu0.b32.cont [4/16] 0.0, 128
  %239 = vxpose.xlu0.b32.cont [5/16] 0.0, 128
  %240 = vxpose.xlu0.b32.cont [6/16] 0.0, 128
  %241 = vxpose.xlu0.b32.cont [7/16] 0.0, 128
  %242 = vxpose.xlu0.b32.cont [8/16] 0.0, 128
  %243 = vxpose.xlu0.b32.cont [9/16] 0.0, 128
  %244 = vxpose.xlu0.b32.cont [10/16] 0.0, 128
  %245 = vxpose.xlu0.b32.cont [11/16] 0.0, 128
  %246 = vxpose.xlu0.b32.cont [12/16] 0.0, 128
  %247 = vxpose.xlu0.b32.cont [13/16] 0.0, 128
  %248 = vxpose.xlu0.b32.cont [14/16] 0.0, 128
  %249 = vxpose.xlu0.b32.cont [15/16] 0.0, 128
  %250 = vxpose.xlu0.b32.end [16/16] 0.0, 128
  %v251 = vpop.trf.xlu0
  %v252 = vpop.trf.xlu0
  %v253 = vpop.trf.xlu0
  %v254 = vpop.trf.xlu0
  %v255 = vpop.trf.xlu0
  %v256 = vpop.trf.xlu0
  %v257 = vpop.trf.xlu0
  %v258 = vpop.trf.xlu0
  %v259 = vpop.trf.xlu0
  %v260 = vpop.trf.xlu0
  %v261 = vpop.trf.xlu0
  %v262 = vpop.trf.xlu0
  %v263 = vpop.trf.xlu0
  %v264 = vpop.trf.xlu0
  %v265 = vpop.trf.xlu0
  %v266 = vpop.trf.xlu0
  %267 = vset.pattern.permute.xlu0 0
  %268 = vperm.xlu0 %267, %v219
  %v269 = vpop.permute.xlu0 %268
  %271 = vset.pattern.permute.xlu0 0
  %272 = vperm.xlu0 %271, %v224
  %v273 = vpop.permute.xlu0 %272
  %v275 = vlaneseq
  %v276 = vshrl.u32 %v275, 7
  %v277 = vsub.s32 0, %v276
  %v278 = vrot.slane %v251, %v277
  %v279 = vadd.f32 %v269, %v278
  %v280 = vadd.f32 %v273, %v278
  %vm281 = vcmp.gt.f32.partialorder %v279, 0.0
  %vm282 = vcmp.gt.f32.partialorder %v280, 0.0
  %v283 = vmul.f32 %v279, 0.2
  %v284 = vmul.f32 %v280, 0.2
  %v285 = vsel %vm281, %v279, %v283
  %v286 = vsel %vm282, %v280, %v284
  %vm287 = vcmp.gt.f32.partialorder %v35, 0.0
  %vm288 = vcmp.gt.f32.partialorder %v36, 0.0
  %v289 = vsel %vm287, %v285, -9e+15
  %v290 = vsel %vm288, %v286, -9e+15
  %v291 = vsel %vm48, %v289, -inf
  %292 = vmax.xlane.f32.xlu0 %v291
  %v293 = vpop.xlane.xlu0 %292
  %v294 = vsel %vm48, %v290, -inf
  %295 = vmax.xlane.f32.xlu0 %v294
  %v296 = vpop.xlane.xlu0 %295
  %v297 = vsub.f32 %v289, %v293
  %v298 = vsub.f32 %v290, %v296
  %v299 = vmul.f32 %v297, 1.442695
  %v300 = vpow.pop %v299
  %v301 = vmul.f32 %v298, 1.442695
  %v302 = vpow.pop %v301
  %v303 = vsel %vm48, %v300, 0.0
  %304 = vadd.xlane.f32.xlu0 %v303
  %v305 = vpop.xlane.xlu0 %304
  %v306 = vsel %vm48, %v302, 0.0
  %307 = vadd.xlane.f32.xlu0 %v306
  %v308 = vpop.xlane.xlu0 %307
  %v309 = vrcp.pop %v305
  %v310 = vrcp.pop %v308
  %v311 = vmul.f32 %v300, %v309
  %v312 = vmul.f32 %v302, %v310
  %v314 = vsel %vm48, %v311, 0
  %v317 = vsel %vm48, %v312, 0
  %319 = vmatprep.subr.mxu0 0.0
  %320 = vmatpush1.msra.mxu0 %v122
  %321 = vmatprep.subr.mxu0 0.0
  %322 = vmatpush1.msra.mxu0 %v127
  %323 = vmatprep.subr.mxu0 0.0
  %324 = vmatpush1.msra.mxu0 0.0
  %325 = vmatprep.subr.mxu0 0.0
  %326 = vmatpush1.msra.mxu0 0.0
  %327 = vmatprep.subr.mxu0 0.0
  %328 = vmatpush1.msra.mxu0 0.0
  %329 = vmatprep.subr.mxu0 0.0
  %330 = vmatpush1.msra.mxu0 0.0
  %331 = vmatprep.subr.mxu0 0.0
  %332 = vmatpush1.msra.mxu0 0.0
  %333 = vmatprep.subr.mxu0 0.0
  %334 = vmatpush1.msra.mxu0 0.0
  %335 = vmatprep.subr.mxu0 0.0
  %336 = vmatpush1.msra.mxu0 0.0
  %337 = vmatprep.subr.mxu0 0.0
  %338 = vmatpush1.msra.mxu0 0.0
  %339 = vmatprep.subr.mxu0 0.0
  %340 = vmatpush1.msra.mxu0 0.0
  %341 = vmatprep.subr.mxu0 0.0
  %342 = vmatpush1.msra.mxu0 0.0
  %343 = vmatprep.subr.mxu0 0.0
  %344 = vmatpush1.msra.mxu0 0.0
  %345 = vmatprep.subr.mxu0 0.0
  %346 = vmatpush1.msra.mxu0 0.0
  %347 = vmatprep.subr.mxu0 0.0
  %348 = vmatpush1.msra.mxu0 0.0
  %349 = vmatprep.subr.mxu0 0.0
  %350 = vmatpush1.msra.mxu0 0.0
  %351 = vmatprep.subr.mxu0 0.0
  %352 = vmatpush1.msra.mxu0 0.0
  %353 = vmatprep.subr.mxu0 0.0
  %354 = vmatpush1.msra.mxu0 0.0
  %355 = vmatprep.subr.mxu0 0.0
  %356 = vmatpush1.msra.mxu0 0.0
  %357 = vmatprep.subr.mxu0 0.0
  %358 = vmatpush1.msra.mxu0 0.0
  %359 = vmatprep.subr.mxu0 0.0
  %360 = vmatpush1.msra.mxu0 0.0
  %361 = vmatprep.subr.mxu0 0.0
  %362 = vmatpush1.msra.mxu0 0.0
  %363 = vmatprep.subr.mxu0 0.0
  %364 = vmatpush1.msra.mxu0 0.0
  %365 = vmatprep.subr.mxu0 0.0
  %366 = vmatpush1.msra.mxu0 0.0
  %367 = vmatprep.subr.mxu0 0.0
  %368 = vmatpush1.msra.mxu0 0.0
  %369 = vmatprep.subr.mxu0 0.0
  %370 = vmatpush1.msra.mxu0 0.0
  %371 = vmatprep.subr.mxu0 0.0
  %372 = vmatpush1.msra.mxu0 0.0
  %373 = vmatprep.subr.mxu0 0.0
  %374 = vmatpush1.msra.mxu0 0.0
  %375 = vmatprep.subr.mxu0 0.0
  %376 = vmatpush1.msra.mxu0 0.0
  %377 = vmatprep.subr.mxu0 0.0
  %378 = vmatpush1.msra.mxu0 0.0
  %379 = vmatprep.subr.mxu0 0.0
  %380 = vmatpush1.msra.mxu0 0.0
  %381 = vmatprep.subr.mxu0 0.0
  %382 = vmatpush1.msra.mxu0 0.0
  %383 = vmatprep.mubr.f32.mxu0 0.0
  %384 = vmatmul.mubr.f32.gmra.mrb[0].mxu0 %v314
  %v385 = vpop.f32.mrb[0].mxu0
  %v386 = vadd.f32 0.0, %v385
  %v387 = vpop.f32.mrb[0].mxu0
  %388 = vmatprep.mubr.f32.mxu0 0.0
  %389 = vmatmul.mubr.f32.gmra.mrb[0].mxu0 %v317
  %v390 = vpop.f32.mrb[0].mxu0
  %v391 = vadd.f32 0.0, %v390
  %v392 = vpop.f32.mrb[0].mxu0
  %393 = vdwg.mxu0
  %394 = vrot.lane.b32.xlu0 %v219, 119
  %v395 = vpop.permute.xlu0 %394
  %396 = vrot.lane.b32.xlu0 %v224, 119
  %v397 = vpop.permute.xlu0 %396
  %400 = vxpose.xlu0.b32.start [1/16] %v395, 128
  %401 = vxpose.xlu0.b32.cont [2/16] %v397, 128
  %402 = vxpose.xlu0.b32.cont [3/16] 0.0, 128
  %403 = vxpose.xlu0.b32.cont [4/16] 0.0, 128
  %404 = vxpose.xlu0.b32.cont [5/16] 0.0, 128
  %405 = vxpose.xlu0.b32.cont [6/16] 0.0, 128
  %406 = vxpose.xlu0.b32.cont [7/16] 0.0, 128
  %407 = vxpose.xlu0.b32.cont [8/16] 0.0, 128
  %408 = vxpose.xlu0.b32.cont [9/16] 0.0, 128
  %409 = vxpose.xlu0.b32.cont [10/16] 0.0, 128
  %410 = vxpose.xlu0.b32.cont [11/16] 0.0, 128
  %411 = vxpose.xlu0.b32.cont [12/16] 0.0, 128
  %412 = vxpose.xlu0.b32.cont [13/16] 0.0, 128
  %413 = vxpose.xlu0.b32.cont [14/16] 0.0, 128
  %414 = vxpose.xlu0.b32.cont [15/16] 0.0, 128
  %415 = vxpose.xlu0.b32.end [16/16] 0.0, 128
  %v416 = vpop.trf.xlu0
  %v417 = vpop.trf.xlu0
  %v418 = vpop.trf.xlu0
  %v419 = vpop.trf.xlu0
  %v420 = vpop.trf.xlu0
  %v421 = vpop.trf.xlu0
  %v422 = vpop.trf.xlu0
  %v423 = vpop.trf.xlu0
  %v424 = vpop.trf.xlu0
  %v425 = vpop.trf.xlu0
  %v426 = vpop.trf.xlu0
  %v427 = vpop.trf.xlu0
  %v428 = vpop.trf.xlu0
  %v429 = vpop.trf.xlu0
  %v430 = vpop.trf.xlu0
  %v431 = vpop.trf.xlu0
  %432 = vset.pattern.permute.xlu0 1
  %433 = vperm.xlu0 %432, %v219
  %v434 = vpop.permute.xlu0 %433
  %436 = vset.pattern.permute.xlu0 1
  %437 = vperm.xlu0 %436, %v224
  %v438 = vpop.permute.xlu0 %437
  %v440 = vlaneseq
  %v441 = vshrl.u32 %v440, 7
  %v442 = vsub.s32 0, %v441
  %v443 = vrot.slane %v416, %v442
  %v444 = vadd.f32 %v434, %v443
  %v445 = vadd.f32 %v438, %v443
  %vm446 = vcmp.gt.f32.partialorder %v444, 0.0
  %vm447 = vcmp.gt.f32.partialorder %v445, 0.0
  %v448 = vmul.f32 %v444, 0.2
  %v449 = vmul.f32 %v445, 0.2
  %v450 = vsel %vm446, %v444, %v448
  %v451 = vsel %vm447, %v445, %v449
  %v452 = vsel %vm287, %v450, -9e+15
  %v453 = vsel %vm288, %v451, -9e+15
  %v454 = vsel %vm48, %v452, -inf
  %455 = vmax.xlane.f32.xlu0 %v454
  %v456 = vpop.xlane.xlu0 %455
  %v457 = vsel %vm48, %v453, -inf
  %458 = vmax.xlane.f32.xlu0 %v457
  %v459 = vpop.xlane.xlu0 %458
  %v460 = vsub.f32 %v452, %v456
  %v461 = vsub.f32 %v453, %v459
  %v462 = vmul.f32 %v460, 1.442695
  %v463 = vpow.pop %v462
  %v464 = vmul.f32 %v461, 1.442695
  %v465 = vpow.pop %v464
  %v466 = vsel %vm48, %v463, 0.0
  %467 = vadd.xlane.f32.xlu0 %v466
  %v468 = vpop.xlane.xlu0 %467
  %v469 = vsel %vm48, %v465, 0.0
  %470 = vadd.xlane.f32.xlu0 %v469
  %v471 = vpop.xlane.xlu0 %470
  %v472 = vrcp.pop %v468
  %v473 = vrcp.pop %v471
  %v474 = vmul.f32 %v463, %v472
  %v475 = vmul.f32 %v465, %v473
  %476 = vrot.lane.b32.xlu0 %v122, 120
  %v477 = vpop.permute.xlu0 %476
  %478 = vrot.lane.b32.xlu0 %v127, 120
  %v479 = vpop.permute.xlu0 %478
  %v483 = vsel %vm48, %v474, 0
  %v486 = vsel %vm48, %v475, 0
  %488 = vmatprep.subr.mxu0 0.0
  %489 = vmatpush1.msra.mxu0 %v477
  %490 = vmatprep.subr.mxu0 0.0
  %491 = vmatpush1.msra.mxu0 %v479
  %492 = vmatprep.subr.mxu0 0.0
  %493 = vmatpush1.msra.mxu0 0.0
  %494 = vmatprep.subr.mxu0 0.0
  %495 = vmatpush1.msra.mxu0 0.0
  %496 = vmatprep.subr.mxu0 0.0
  %497 = vmatpush1.msra.mxu0 0.0
  %498 = vmatprep.subr.mxu0 0.0
  %499 = vmatpush1.msra.mxu0 0.0
  %500 = vmatprep.subr.mxu0 0.0
  %501 = vmatpush1.msra.mxu0 0.0
  %502 = vmatprep.subr.mxu0 0.0
  %503 = vmatpush1.msra.mxu0 0.0
  %504 = vmatprep.subr.mxu0 0.0
  %505 = vmatpush1.msra.mxu0 0.0
  %506 = vmatprep.subr.mxu0 0.0
  %507 = vmatpush1.msra.mxu0 0.0
  %508 = vmatprep.subr.mxu0 0.0
  %509 = vmatpush1.msra.mxu0 0.0
  %510 = vmatprep.subr.mxu0 0.0
  %511 = vmatpush1.msra.mxu0 0.0
  %512 = vmatprep.subr.mxu0 0.0
  %513 = vmatpush1.msra.mxu0 0.0
  %514 = vmatprep.subr.mxu0 0.0
  %515 = vmatpush1.msra.mxu0 0.0
  %516 = vmatprep.subr.mxu0 0.0
  %517 = vmatpush1.msra.mxu0 0.0
  %518 = vmatprep.subr.mxu0 0.0
  %519 = vmatpush1.msra.mxu0 0.0
  %520 = vmatprep.subr.mxu0 0.0
  %521 = vmatpush1.msra.mxu0 0.0
  %522 = vmatprep.subr.mxu0 0.0
  %523 = vmatpush1.msra.mxu0 0.0
  %524 = vmatprep.subr.mxu0 0.0
  %525 = vmatpush1.msra.mxu0 0.0
  %526 = vmatprep.subr.mxu0 0.0
  %527 = vmatpush1.msra.mxu0 0.0
  %528 = vmatprep.subr.mxu0 0.0
  %529 = vmatpush1.msra.mxu0 0.0
  %530 = vmatprep.subr.mxu0 0.0
  %531 = vmatpush1.msra.mxu0 0.0
  %532 = vmatprep.subr.mxu0 0.0
  %533 = vmatpush1.msra.mxu0 0.0
  %534 = vmatprep.subr.mxu0 0.0
  %535 = vmatpush1.msra.mxu0 0.0
  %536 = vmatprep.subr.mxu0 0.0
  %537 = vmatpush1.msra.mxu0 0.0
  %538 = vmatprep.subr.mxu0 0.0
  %539 = vmatpush1.msra.mxu0 0.0
  %540 = vmatprep.subr.mxu0 0.0
  %541 = vmatpush1.msra.mxu0 0.0
  %542 = vmatprep.subr.mxu0 0.0
  %543 = vmatpush1.msra.mxu0 0.0
  %544 = vmatprep.subr.mxu0 0.0
  %545 = vmatpush1.msra.mxu0 0.0
  %546 = vmatprep.subr.mxu0 0.0
  %547 = vmatpush1.msra.mxu0 0.0
  %548 = vmatprep.subr.mxu0 0.0
  %549 = vmatpush1.msra.mxu0 0.0
  %550 = vmatprep.subr.mxu0 0.0
  %551 = vmatpush1.msra.mxu0 0.0
  %552 = vmatprep.mubr.f32.mxu0 0.0
  %553 = vmatmul.mubr.f32.gmra.mrb[0].mxu0 %v483
  %v554 = vpop.f32.mrb[0].mxu0
  %v555 = vadd.f32 0.0, %v554
  %v556 = vpop.f32.mrb[0].mxu0
  %557 = vmatprep.mubr.f32.mxu0 0.0
  %558 = vmatmul.mubr.f32.gmra.mrb[0].mxu0 %v486
  %v559 = vpop.f32.mrb[0].mxu0
  %v560 = vadd.f32 0.0, %v559
  %v561 = vpop.f32.mrb[0].mxu0
  %562 = vdwg.mxu0
  %563 = vrot.lane.b32.xlu0 %v219, 118
  %v564 = vpop.permute.xlu0 %563
  %565 = vrot.lane.b32.xlu0 %v224, 118
  %v566 = vpop.permute.xlu0 %565
  %569 = vxpose.xlu0.b32.start [1/16] %v564, 128
  %570 = vxpose.xlu0.b32.cont [2/16] %v566, 128
  %571 = vxpose.xlu0.b32.cont [3/16] 0.0, 128
  %572 = vxpose.xlu0.b32.cont [4/16] 0.0, 128
  %573 = vxpose.xlu0.b32.cont [5/16] 0.0, 128
  %574 = vxpose.xlu0.b32.cont [6/16] 0.0, 128
  %575 = vxpose.xlu0.b32.cont [7/16] 0.0, 128
  %576 = vxpose.xlu0.b32.cont [8/16] 0.0, 128
  %577 = vxpose.xlu0.b32.cont [9/16] 0.0, 128
  %578 = vxpose.xlu0.b32.cont [10/16] 0.0, 128
  %579 = vxpose.xlu0.b32.cont [11/16] 0.0, 128
  %580 = vxpose.xlu0.b32.cont [12/16] 0.0, 128
  %581 = vxpose.xlu0.b32.cont [13/16] 0.0, 128
  %582 = vxpose.xlu0.b32.cont [14/16] 0.0, 128
  %583 = vxpose.xlu0.b32.cont [15/16] 0.0, 128
  %584 = vxpose.xlu0.b32.end [16/16] 0.0, 128
  %v585 = vpop.trf.xlu0
  %v586 = vpop.trf.xlu0
  %v587 = vpop.trf.xlu0
  %v588 = vpop.trf.xlu0
  %v589 = vpop.trf.xlu0
  %v590 = vpop.trf.xlu0
  %v591 = vpop.trf.xlu0
  %v592 = vpop.trf.xlu0
  %v593 = vpop.trf.xlu0
  %v594 = vpop.trf.xlu0
  %v595 = vpop.trf.xlu0
  %v596 = vpop.trf.xlu0
  %v597 = vpop.trf.xlu0
  %v598 = vpop.trf.xlu0
  %v599 = vpop.trf.xlu0
  %v600 = vpop.trf.xlu0
  %601 = vset.pattern.permute.xlu0 2
  %602 = vperm.xlu0 %601, %v219
  %v603 = vpop.permute.xlu0 %602
  %605 = vset.pattern.permute.xlu0 2
  %606 = vperm.xlu0 %605, %v224
  %v607 = vpop.permute.xlu0 %606
  %v609 = vlaneseq
  %v610 = vshrl.u32 %v609, 7
  %v611 = vsub.s32 0, %v610
  %v612 = vrot.slane %v585, %v611
  %v613 = vadd.f32 %v603, %v612
  %v614 = vadd.f32 %v607, %v612
  %vm615 = vcmp.gt.f32.partialorder %v613, 0.0
  %vm616 = vcmp.gt.f32.partialorder %v614, 0.0
  %v617 = vmul.f32 %v613, 0.2
  %v618 = vmul.f32 %v614, 0.2
  %v619 = vsel %vm615, %v613, %v617
  %v620 = vsel %vm616, %v614, %v618
  %v621 = vsel %vm287, %v619, -9e+15
  %v622 = vsel %vm288, %v620, -9e+15
  %v623 = vsel %vm48, %v621, -inf
  %624 = vmax.xlane.f32.xlu0 %v623
  %v625 = vpop.xlane.xlu0 %624
  %v626 = vsel %vm48, %v622, -inf
  %627 = vmax.xlane.f32.xlu0 %v626
  %v628 = vpop.xlane.xlu0 %627
  %v629 = vsub.f32 %v621, %v625
  %v630 = vsub.f32 %v622, %v628
  %v631 = vmul.f32 %v629, 1.442695
  %v632 = vpow.pop %v631
  %v633 = vmul.f32 %v630, 1.442695
  %v634 = vpow.pop %v633
  %v635 = vsel %vm48, %v632, 0.0
  %636 = vadd.xlane.f32.xlu0 %v635
  %v637 = vpop.xlane.xlu0 %636
  %v638 = vsel %vm48, %v634, 0.0
  %639 = vadd.xlane.f32.xlu0 %v638
  %v640 = vpop.xlane.xlu0 %639
  %v641 = vrcp.pop %v637
  %v642 = vrcp.pop %v640
  %v643 = vmul.f32 %v632, %v641
  %v644 = vmul.f32 %v634, %v642
  %645 = vrot.lane.b32.xlu0 %v122, 112
  %v646 = vpop.permute.xlu0 %645
  %647 = vrot.lane.b32.xlu0 %v127, 112
  %v648 = vpop.permute.xlu0 %647
  %v652 = vsel %vm48, %v643, 0
  %v655 = vsel %vm48, %v644, 0
  %657 = vmatprep.subr.mxu0 0.0
  %658 = vmatpush1.msra.mxu0 %v646
  %659 = vmatprep.subr.mxu0 0.0
  %660 = vmatpush1.msra.mxu0 %v648
  %661 = vmatprep.subr.mxu0 0.0
  %662 = vmatpush1.msra.mxu0 0.0
  %663 = vmatprep.subr.mxu0 0.0
  %664 = vmatpush1.msra.mxu0 0.0
  %665 = vmatprep.subr.mxu0 0.0
  %666 = vmatpush1.msra.mxu0 0.0
  %667 = vmatprep.subr.mxu0 0.0
  %668 = vmatpush1.msra.mxu0 0.0
  %669 = vmatprep.subr.mxu0 0.0
  %670 = vmatpush1.msra.mxu0 0.0
  %671 = vmatprep.subr.mxu0 0.0
  %672 = vmatpush1.msra.mxu0 0.0
  %673 = vmatprep.subr.mxu0 0.0
  %674 = vmatpush1.msra.mxu0 0.0
  %675 = vmatprep.subr.mxu0 0.0
  %676 = vmatpush1.msra.mxu0 0.0
  %677 = vmatprep.subr.mxu0 0.0
  %678 = vmatpush1.msra.mxu0 0.0
  %679 = vmatprep.subr.mxu0 0.0
  %680 = vmatpush1.msra.mxu0 0.0
  %681 = vmatprep.subr.mxu0 0.0
  %682 = vmatpush1.msra.mxu0 0.0
  %683 = vmatprep.subr.mxu0 0.0
  %684 = vmatpush1.msra.mxu0 0.0
  %685 = vmatprep.subr.mxu0 0.0
  %686 = vmatpush1.msra.mxu0 0.0
  %687 = vmatprep.subr.mxu0 0.0
  %688 = vmatpush1.msra.mxu0 0.0
  %689 = vmatprep.subr.mxu0 0.0
  %690 = vmatpush1.msra.mxu0 0.0
  %691 = vmatprep.subr.mxu0 0.0
  %692 = vmatpush1.msra.mxu0 0.0
  %693 = vmatprep.subr.mxu0 0.0
  %694 = vmatpush1.msra.mxu0 0.0
  %695 = vmatprep.subr.mxu0 0.0
  %696 = vmatpush1.msra.mxu0 0.0
  %697 = vmatprep.subr.mxu0 0.0
  %698 = vmatpush1.msra.mxu0 0.0
  %699 = vmatprep.subr.mxu0 0.0
  %700 = vmatpush1.msra.mxu0 0.0
  %701 = vmatprep.subr.mxu0 0.0
  %702 = vmatpush1.msra.mxu0 0.0
  %703 = vmatprep.subr.mxu0 0.0
  %704 = vmatpush1.msra.mxu0 0.0
  %705 = vmatprep.subr.mxu0 0.0
  %706 = vmatpush1.msra.mxu0 0.0
  %707 = vmatprep.subr.mxu0 0.0
  %708 = vmatpush1.msra.mxu0 0.0
  %709 = vmatprep.subr.mxu0 0.0
  %710 = vmatpush1.msra.mxu0 0.0
  %711 = vmatprep.subr.mxu0 0.0
  %712 = vmatpush1.msra.mxu0 0.0
  %713 = vmatprep.subr.mxu0 0.0
  %714 = vmatpush1.msra.mxu0 0.0
  %715 = vmatprep.subr.mxu0 0.0
  %716 = vmatpush1.msra.mxu0 0.0
  %717 = vmatprep.subr.mxu0 0.0
  %718 = vmatpush1.msra.mxu0 0.0
  %719 = vmatprep.subr.mxu0 0.0
  %720 = vmatpush1.msra.mxu0 0.0
  %721 = vmatprep.mubr.f32.mxu0 0.0
  %722 = vmatmul.mubr.f32.gmra.mrb[0].mxu0 %v652
  %v723 = vpop.f32.mrb[0].mxu0
  %v724 = vadd.f32 0.0, %v723
  %v725 = vpop.f32.mrb[0].mxu0
  %726 = vmatprep.mubr.f32.mxu0 0.0
  %727 = vmatmul.mubr.f32.gmra.mrb[0].mxu0 %v655
  %v728 = vpop.f32.mrb[0].mxu0
  %v729 = vadd.f32 0.0, %v728
  %v730 = vpop.f32.mrb[0].mxu0
  %731 = vdwg.mxu0
  %732 = vrot.lane.b32.xlu0 %v219, 117
  %v733 = vpop.permute.xlu0 %732
  %734 = vrot.lane.b32.xlu0 %v224, 117
  %v735 = vpop.permute.xlu0 %734
  %738 = vxpose.xlu0.b32.start [1/16] %v733, 128
  %739 = vxpose.xlu0.b32.cont [2/16] %v735, 128
  %740 = vxpose.xlu0.b32.cont [3/16] 0.0, 128
  %741 = vxpose.xlu0.b32.cont [4/16] 0.0, 128
  %742 = vxpose.xlu0.b32.cont [5/16] 0.0, 128
  %743 = vxpose.xlu0.b32.cont [6/16] 0.0, 128
  %744 = vxpose.xlu0.b32.cont [7/16] 0.0, 128
  %745 = vxpose.xlu0.b32.cont [8/16] 0.0, 128
  %746 = vxpose.xlu0.b32.cont [9/16] 0.0, 128
  %747 = vxpose.xlu0.b32.cont [10/16] 0.0, 128
  %748 = vxpose.xlu0.b32.cont [11/16] 0.0, 128
  %749 = vxpose.xlu0.b32.cont [12/16] 0.0, 128
  %750 = vxpose.xlu0.b32.cont [13/16] 0.0, 128
  %751 = vxpose.xlu0.b32.cont [14/16] 0.0, 128
  %752 = vxpose.xlu0.b32.cont [15/16] 0.0, 128
  %753 = vxpose.xlu0.b32.end [16/16] 0.0, 128
  %v754 = vpop.trf.xlu0
  %v755 = vpop.trf.xlu0
  %v756 = vpop.trf.xlu0
  %v757 = vpop.trf.xlu0
  %v758 = vpop.trf.xlu0
  %v759 = vpop.trf.xlu0
  %v760 = vpop.trf.xlu0
  %v761 = vpop.trf.xlu0
  %v762 = vpop.trf.xlu0
  %v763 = vpop.trf.xlu0
  %v764 = vpop.trf.xlu0
  %v765 = vpop.trf.xlu0
  %v766 = vpop.trf.xlu0
  %v767 = vpop.trf.xlu0
  %v768 = vpop.trf.xlu0
  %v769 = vpop.trf.xlu0
  %770 = vset.pattern.permute.xlu0 3
  %771 = vperm.xlu0 %770, %v219
  %v772 = vpop.permute.xlu0 %771
  %774 = vset.pattern.permute.xlu0 3
  %775 = vperm.xlu0 %774, %v224
  %v776 = vpop.permute.xlu0 %775
  %v778 = vlaneseq
  %v779 = vshrl.u32 %v778, 7
  %v780 = vsub.s32 0, %v779
  %v781 = vrot.slane %v754, %v780
  %v782 = vadd.f32 %v772, %v781
  %v783 = vadd.f32 %v776, %v781
  %vm784 = vcmp.gt.f32.partialorder %v782, 0.0
  %vm785 = vcmp.gt.f32.partialorder %v783, 0.0
  %v786 = vmul.f32 %v782, 0.2
  %v787 = vmul.f32 %v783, 0.2
  %v788 = vsel %vm784, %v782, %v786
  %v789 = vsel %vm785, %v783, %v787
  %v790 = vsel %vm287, %v788, -9e+15
  %v791 = vsel %vm288, %v789, -9e+15
  %v792 = vsel %vm48, %v790, -inf
  %793 = vmax.xlane.f32.xlu0 %v792
  %v794 = vpop.xlane.xlu0 %793
  %v795 = vsel %vm48, %v791, -inf
  %796 = vmax.xlane.f32.xlu0 %v795
  %v797 = vpop.xlane.xlu0 %796
  %v798 = vsub.f32 %v790, %v794
  %v799 = vsub.f32 %v791, %v797
  %v800 = vmul.f32 %v798, 1.442695
  %v801 = vpow.pop %v800
  %v802 = vmul.f32 %v799, 1.442695
  %v803 = vpow.pop %v802
  %v804 = vsel %vm48, %v801, 0.0
  %805 = vadd.xlane.f32.xlu0 %v804
  %v806 = vpop.xlane.xlu0 %805
  %v807 = vsel %vm48, %v803, 0.0
  %808 = vadd.xlane.f32.xlu0 %v807
  %v809 = vpop.xlane.xlu0 %808
  %v810 = vrcp.pop %v806
  %v811 = vrcp.pop %v809
  %v812 = vmul.f32 %v801, %v810
  %v813 = vmul.f32 %v803, %v811
  %814 = vrot.lane.b32.xlu0 %v122, 104
  %v815 = vpop.permute.xlu0 %814
  %816 = vrot.lane.b32.xlu0 %v127, 104
  %v817 = vpop.permute.xlu0 %816
  %v821 = vsel %vm48, %v812, 0
  %v824 = vsel %vm48, %v813, 0
  %826 = vmatprep.subr.mxu0 0.0
  %827 = vmatpush1.msra.mxu0 %v815
  %828 = vmatprep.subr.mxu0 0.0
  %829 = vmatpush1.msra.mxu0 %v817
  %830 = vmatprep.subr.mxu0 0.0
  %831 = vmatpush1.msra.mxu0 0.0
  %832 = vmatprep.subr.mxu0 0.0
  %833 = vmatpush1.msra.mxu0 0.0
  %834 = vmatprep.subr.mxu0 0.0
  %835 = vmatpush1.msra.mxu0 0.0
  %836 = vmatprep.subr.mxu0 0.0
  %837 = vmatpush1.msra.mxu0 0.0
  %838 = vmatprep.subr.mxu0 0.0
  %839 = vmatpush1.msra.mxu0 0.0
  %840 = vmatprep.subr.mxu0 0.0
  %841 = vmatpush1.msra.mxu0 0.0
  %842 = vmatprep.subr.mxu0 0.0
  %843 = vmatpush1.msra.mxu0 0.0
  %844 = vmatprep.subr.mxu0 0.0
  %845 = vmatpush1.msra.mxu0 0.0
  %846 = vmatprep.subr.mxu0 0.0
  %847 = vmatpush1.msra.mxu0 0.0
  %848 = vmatprep.subr.mxu0 0.0
  %849 = vmatpush1.msra.mxu0 0.0
  %850 = vmatprep.subr.mxu0 0.0
  %851 = vmatpush1.msra.mxu0 0.0
  %852 = vmatprep.subr.mxu0 0.0
  %853 = vmatpush1.msra.mxu0 0.0
  %854 = vmatprep.subr.mxu0 0.0
  %855 = vmatpush1.msra.mxu0 0.0
  %856 = vmatprep.subr.mxu0 0.0
  %857 = vmatpush1.msra.mxu0 0.0
  %858 = vmatprep.subr.mxu0 0.0
  %859 = vmatpush1.msra.mxu0 0.0
  %860 = vmatprep.subr.mxu0 0.0
  %861 = vmatpush1.msra.mxu0 0.0
  %862 = vmatprep.subr.mxu0 0.0
  %863 = vmatpush1.msra.mxu0 0.0
  %864 = vmatprep.subr.mxu0 0.0
  %865 = vmatpush1.msra.mxu0 0.0
  %866 = vmatprep.subr.mxu0 0.0
  %867 = vmatpush1.msra.mxu0 0.0
  %868 = vmatprep.subr.mxu0 0.0
  %869 = vmatpush1.msra.mxu0 0.0
  %870 = vmatprep.subr.mxu0 0.0
  %871 = vmatpush1.msra.mxu0 0.0
  %872 = vmatprep.subr.mxu0 0.0
  %873 = vmatpush1.msra.mxu0 0.0
  %874 = vmatprep.subr.mxu0 0.0
  %875 = vmatpush1.msra.mxu0 0.0
  %876 = vmatprep.subr.mxu0 0.0
  %877 = vmatpush1.msra.mxu0 0.0
  %878 = vmatprep.subr.mxu0 0.0
  %879 = vmatpush1.msra.mxu0 0.0
  %880 = vmatprep.subr.mxu0 0.0
  %881 = vmatpush1.msra.mxu0 0.0
  %882 = vmatprep.subr.mxu0 0.0
  %883 = vmatpush1.msra.mxu0 0.0
  %884 = vmatprep.subr.mxu0 0.0
  %885 = vmatpush1.msra.mxu0 0.0
  %886 = vmatprep.subr.mxu0 0.0
  %887 = vmatpush1.msra.mxu0 0.0
  %888 = vmatprep.subr.mxu0 0.0
  %889 = vmatpush1.msra.mxu0 0.0
  %890 = vmatprep.mubr.f32.mxu0 0.0
  %891 = vmatmul.mubr.f32.gmra.mrb[0].mxu0 %v821
  %v892 = vpop.f32.mrb[0].mxu0
  %v893 = vadd.f32 0.0, %v892
  %v894 = vpop.f32.mrb[0].mxu0
  %895 = vmatprep.mubr.f32.mxu0 0.0
  %896 = vmatmul.mubr.f32.gmra.mrb[0].mxu0 %v824
  %v897 = vpop.f32.mrb[0].mxu0
  %v898 = vadd.f32 0.0, %v897
  %v899 = vpop.f32.mrb[0].mxu0
  %900 = vdwg.mxu0
  %901 = vrot.lane.b32.xlu0 %v219, 116
  %v902 = vpop.permute.xlu0 %901
  %903 = vrot.lane.b32.xlu0 %v224, 116
  %v904 = vpop.permute.xlu0 %903
  %907 = vxpose.xlu0.b32.start [1/16] %v902, 128
  %908 = vxpose.xlu0.b32.cont [2/16] %v904, 128
  %909 = vxpose.xlu0.b32.cont [3/16] 0.0, 128
  %910 = vxpose.xlu0.b32.cont [4/16] 0.0, 128
  %911 = vxpose.xlu0.b32.cont [5/16] 0.0, 128
  %912 = vxpose.xlu0.b32.cont [6/16] 0.0, 128
  %913 = vxpose.xlu0.b32.cont [7/16] 0.0, 128
  %914 = vxpose.xlu0.b32.cont [8/16] 0.0, 128
  %915 = vxpose.xlu0.b32.cont [9/16] 0.0, 128
  %916 = vxpose.xlu0.b32.cont [10/16] 0.0, 128
  %917 = vxpose.xlu0.b32.cont [11/16] 0.0, 128
  %918 = vxpose.xlu0.b32.cont [12/16] 0.0, 128
  %919 = vxpose.xlu0.b32.cont [13/16] 0.0, 128
  %920 = vxpose.xlu0.b32.cont [14/16] 0.0, 128
  %921 = vxpose.xlu0.b32.cont [15/16] 0.0, 128
  %922 = vxpose.xlu0.b32.end [16/16] 0.0, 128
  %v923 = vpop.trf.xlu0
  %v924 = vpop.trf.xlu0
  %v925 = vpop.trf.xlu0
  %v926 = vpop.trf.xlu0
  %v927 = vpop.trf.xlu0
  %v928 = vpop.trf.xlu0
  %v929 = vpop.trf.xlu0
  %v930 = vpop.trf.xlu0
  %v931 = vpop.trf.xlu0
  %v932 = vpop.trf.xlu0
  %v933 = vpop.trf.xlu0
  %v934 = vpop.trf.xlu0
  %v935 = vpop.trf.xlu0
  %v936 = vpop.trf.xlu0
  %v937 = vpop.trf.xlu0
  %v938 = vpop.trf.xlu0
  %939 = vset.pattern.permute.xlu0 4
  %940 = vperm.xlu0 %939, %v219
  %v941 = vpop.permute.xlu0 %940
  %943 = vset.pattern.permute.xlu0 4
  %944 = vperm.xlu0 %943, %v224
  %v945 = vpop.permute.xlu0 %944
  %v947 = vlaneseq
  %v948 = vshrl.u32 %v947, 7
  %v949 = vsub.s32 0, %v948
  %v950 = vrot.slane %v923, %v949
  %v951 = vadd.f32 %v941, %v950
  %v952 = vadd.f32 %v945, %v950
  %vm953 = vcmp.gt.f32.partialorder %v951, 0.0
  %vm954 = vcmp.gt.f32.partialorder %v952, 0.0
  %v955 = vmul.f32 %v951, 0.2
  %v956 = vmul.f32 %v952, 0.2
  %v957 = vsel %vm953, %v951, %v955
  %v958 = vsel %vm954, %v952, %v956
  %v959 = vsel %vm287, %v957, -9e+15
  %v960 = vsel %vm288, %v958, -9e+15
  %v961 = vsel %vm48, %v959, -inf
  %962 = vmax.xlane.f32.xlu0 %v961
  %v963 = vpop.xlane.xlu0 %962
  %v964 = vsel %vm48, %v960, -inf
  %965 = vmax.xlane.f32.xlu0 %v964
  %v966 = vpop.xlane.xlu0 %965
  %v967 = vsub.f32 %v959, %v963
  %v968 = vsub.f32 %v960, %v966
  %v969 = vmul.f32 %v967, 1.442695
  %v970 = vpow.pop %v969
  %v971 = vmul.f32 %v968, 1.442695
  %v972 = vpow.pop %v971
  %v973 = vsel %vm48, %v970, 0.0
  %974 = vadd.xlane.f32.xlu0 %v973
  %v975 = vpop.xlane.xlu0 %974
  %v976 = vsel %vm48, %v972, 0.0
  %977 = vadd.xlane.f32.xlu0 %v976
  %v978 = vpop.xlane.xlu0 %977
  %v979 = vrcp.pop %v975
  %v980 = vrcp.pop %v978
  %v981 = vmul.f32 %v970, %v979
  %v982 = vmul.f32 %v972, %v980
  %983 = vrot.lane.b32.xlu0 %v122, 96
  %v984 = vpop.permute.xlu0 %983
  %985 = vrot.lane.b32.xlu0 %v127, 96
  %v986 = vpop.permute.xlu0 %985
  %v990 = vsel %vm48, %v981, 0
  %v993 = vsel %vm48, %v982, 0
  %995 = vmatprep.subr.mxu0 0.0
  %996 = vmatpush1.msra.mxu0 %v984
  %997 = vmatprep.subr.mxu0 0.0
  %998 = vmatpush1.msra.mxu0 %v986
  %999 = vmatprep.subr.mxu0 0.0
  %1000 = vmatpush1.msra.mxu0 0.0
  %1001 = vmatprep.subr.mxu0 0.0
  %1002 = vmatpush1.msra.mxu0 0.0
  %1003 = vmatprep.subr.mxu0 0.0
  %1004 = vmatpush1.msra.mxu0 0.0
  %1005 = vmatprep.subr.mxu0 0.0
  %1006 = vmatpush1.msra.mxu0 0.0
  %1007 = vmatprep.subr.mxu0 0.0
  %1008 = vmatpush1.msra.mxu0 0.0
  %1009 = vmatprep.subr.mxu0 0.0
  %1010 = vmatpush1.msra.mxu0 0.0
  %1011 = vmatprep.subr.mxu0 0.0
  %1012 = vmatpush1.msra.mxu0 0.0
  %1013 = vmatprep.subr.mxu0 0.0
  %1014 = vmatpush1.msra.mxu0 0.0
  %1015 = vmatprep.subr.mxu0 0.0
  %1016 = vmatpush1.msra.mxu0 0.0
  %1017 = vmatprep.subr.mxu0 0.0
  %1018 = vmatpush1.msra.mxu0 0.0
  %1019 = vmatprep.subr.mxu0 0.0
  %1020 = vmatpush1.msra.mxu0 0.0
  %1021 = vmatprep.subr.mxu0 0.0
  %1022 = vmatpush1.msra.mxu0 0.0
  %1023 = vmatprep.subr.mxu0 0.0
  %1024 = vmatpush1.msra.mxu0 0.0
  %1025 = vmatprep.subr.mxu0 0.0
  %1026 = vmatpush1.msra.mxu0 0.0
  %1027 = vmatprep.subr.mxu0 0.0
  %1028 = vmatpush1.msra.mxu0 0.0
  %1029 = vmatprep.subr.mxu0 0.0
  %1030 = vmatpush1.msra.mxu0 0.0
  %1031 = vmatprep.subr.mxu0 0.0
  %1032 = vmatpush1.msra.mxu0 0.0
  %1033 = vmatprep.subr.mxu0 0.0
  %1034 = vmatpush1.msra.mxu0 0.0
  %1035 = vmatprep.subr.mxu0 0.0
  %1036 = vmatpush1.msra.mxu0 0.0
  %1037 = vmatprep.subr.mxu0 0.0
  %1038 = vmatpush1.msra.mxu0 0.0
  %1039 = vmatprep.subr.mxu0 0.0
  %1040 = vmatpush1.msra.mxu0 0.0
  %1041 = vmatprep.subr.mxu0 0.0
  %1042 = vmatpush1.msra.mxu0 0.0
  %1043 = vmatprep.subr.mxu0 0.0
  %1044 = vmatpush1.msra.mxu0 0.0
  %1045 = vmatprep.subr.mxu0 0.0
  %1046 = vmatpush1.msra.mxu0 0.0
  %1047 = vmatprep.subr.mxu0 0.0
  %1048 = vmatpush1.msra.mxu0 0.0
  %1049 = vmatprep.subr.mxu0 0.0
  %1050 = vmatpush1.msra.mxu0 0.0
  %1051 = vmatprep.subr.mxu0 0.0
  %1052 = vmatpush1.msra.mxu0 0.0
  %1053 = vmatprep.subr.mxu0 0.0
  %1054 = vmatpush1.msra.mxu0 0.0
  %1055 = vmatprep.subr.mxu0 0.0
  %1056 = vmatpush1.msra.mxu0 0.0
  %1057 = vmatprep.subr.mxu0 0.0
  %1058 = vmatpush1.msra.mxu0 0.0
  %1059 = vmatprep.mubr.f32.mxu0 0.0
  %1060 = vmatmul.mubr.f32.gmra.mrb[0].mxu0 %v990
  %v1061 = vpop.f32.mrb[0].mxu0
  %v1062 = vadd.f32 0.0, %v1061
  %v1063 = vpop.f32.mrb[0].mxu0
  %1064 = vmatprep.mubr.f32.mxu0 0.0
  %1065 = vmatmul.mubr.f32.gmra.mrb[0].mxu0 %v993
  %v1066 = vpop.f32.mrb[0].mxu0
  %v1067 = vadd.f32 0.0, %v1066
  %v1068 = vpop.f32.mrb[0].mxu0
  %1069 = vdwg.mxu0
  %1070 = vrot.lane.b32.xlu0 %v219, 115
  %v1071 = vpop.permute.xlu0 %1070
  %1072 = vrot.lane.b32.xlu0 %v224, 115
  %v1073 = vpop.permute.xlu0 %1072
  %1076 = vxpose.xlu0.b32.start [1/16] %v1071, 128
  %1077 = vxpose.xlu0.b32.cont [2/16] %v1073, 128
  %1078 = vxpose.xlu0.b32.cont [3/16] 0.0, 128
  %1079 = vxpose.xlu0.b32.cont [4/16] 0.0, 128
  %1080 = vxpose.xlu0.b32.cont [5/16] 0.0, 128
  %1081 = vxpose.xlu0.b32.cont [6/16] 0.0, 128
  %1082 = vxpose.xlu0.b32.cont [7/16] 0.0, 128
  %1083 = vxpose.xlu0.b32.cont [8/16] 0.0, 128
  %1084 = vxpose.xlu0.b32.cont [9/16] 0.0, 128
  %1085 = vxpose.xlu0.b32.cont [10/16] 0.0, 128
  %1086 = vxpose.xlu0.b32.cont [11/16] 0.0, 128
  %1087 = vxpose.xlu0.b32.cont [12/16] 0.0, 128
  %1088 = vxpose.xlu0.b32.cont [13/16] 0.0, 128
  %1089 = vxpose.xlu0.b32.cont [14/16] 0.0, 128
  %1090 = vxpose.xlu0.b32.cont [15/16] 0.0, 128
  %1091 = vxpose.xlu0.b32.end [16/16] 0.0, 128
  %v1092 = vpop.trf.xlu0
  %v1093 = vpop.trf.xlu0
  %v1094 = vpop.trf.xlu0
  %v1095 = vpop.trf.xlu0
  %v1096 = vpop.trf.xlu0
  %v1097 = vpop.trf.xlu0
  %v1098 = vpop.trf.xlu0
  %v1099 = vpop.trf.xlu0
  %v1100 = vpop.trf.xlu0
  %v1101 = vpop.trf.xlu0
  %v1102 = vpop.trf.xlu0
  %v1103 = vpop.trf.xlu0
  %v1104 = vpop.trf.xlu0
  %v1105 = vpop.trf.xlu0
  %v1106 = vpop.trf.xlu0
  %v1107 = vpop.trf.xlu0
  %1108 = vset.pattern.permute.xlu0 5
  %1109 = vperm.xlu0 %1108, %v219
  %v1110 = vpop.permute.xlu0 %1109
  %1112 = vset.pattern.permute.xlu0 5
  %1113 = vperm.xlu0 %1112, %v224
  %v1114 = vpop.permute.xlu0 %1113
  %v1116 = vlaneseq
  %v1117 = vshrl.u32 %v1116, 7
  %v1118 = vsub.s32 0, %v1117
  %v1119 = vrot.slane %v1092, %v1118
  %v1120 = vadd.f32 %v1110, %v1119
  %v1121 = vadd.f32 %v1114, %v1119
  %vm1122 = vcmp.gt.f32.partialorder %v1120, 0.0
  %vm1123 = vcmp.gt.f32.partialorder %v1121, 0.0
  %v1124 = vmul.f32 %v1120, 0.2
  %v1125 = vmul.f32 %v1121, 0.2
  %v1126 = vsel %vm1122, %v1120, %v1124
  %v1127 = vsel %vm1123, %v1121, %v1125
  %v1128 = vsel %vm287, %v1126, -9e+15
  %v1129 = vsel %vm288, %v1127, -9e+15
  %v1130 = vsel %vm48, %v1128, -inf
  %1131 = vmax.xlane.f32.xlu0 %v1130
  %v1132 = vpop.xlane.xlu0 %1131
  %v1133 = vsel %vm48, %v1129, -inf
  %1134 = vmax.xlane.f32.xlu0 %v1133
  %v1135 = vpop.xlane.xlu0 %1134
  %v1136 = vsub.f32 %v1128, %v1132
  %v1137 = vsub.f32 %v1129, %v1135
  %v1138 = vmul.f32 %v1136, 1.442695
  %v1139 = vpow.pop %v1138
  %v1140 = vmul.f32 %v1137, 1.442695
  %v1141 = vpow.pop %v1140
  %v1142 = vsel %vm48, %v1139, 0.0
  %1143 = vadd.xlane.f32.xlu0 %v1142
  %v1144 = vpop.xlane.xlu0 %1143
  %v1145 = vsel %vm48, %v1141, 0.0
  %1146 = vadd.xlane.f32.xlu0 %v1145
  %v1147 = vpop.xlane.xlu0 %1146
  %v1148 = vrcp.pop %v1144
  %v1149 = vrcp.pop %v1147
  %v1150 = vmul.f32 %v1139, %v1148
  %v1151 = vmul.f32 %v1141, %v1149
  %1152 = vrot.lane.b32.xlu0 %v122, 88
  %v1153 = vpop.permute.xlu0 %1152
  %1154 = vrot.lane.b32.xlu0 %v127, 88
  %v1155 = vpop.permute.xlu0 %1154
  %v1159 = vsel %vm48, %v1150, 0
  %v1162 = vsel %vm48, %v1151, 0
  %1164 = vmatprep.subr.mxu0 0.0
  %1165 = vmatpush1.msra.mxu0 %v1153
  %1166 = vmatprep.subr.mxu0 0.0
  %1167 = vmatpush1.msra.mxu0 %v1155
  %1168 = vmatprep.subr.mxu0 0.0
  %1169 = vmatpush1.msra.mxu0 0.0
  %1170 = vmatprep.subr.mxu0 0.0
  %1171 = vmatpush1.msra.mxu0 0.0
  %1172 = vmatprep.subr.mxu0 0.0
  %1173 = vmatpush1.msra.mxu0 0.0
  %1174 = vmatprep.subr.mxu0 0.0
  %1175 = vmatpush1.msra.mxu0 0.0
  %1176 = vmatprep.subr.mxu0 0.0
  %1177 = vmatpush1.msra.mxu0 0.0
  %1178 = vmatprep.subr.mxu0 0.0
  %1179 = vmatpush1.msra.mxu0 0.0
  %1180 = vmatprep.subr.mxu0 0.0
  %1181 = vmatpush1.msra.mxu0 0.0
  %1182 = vmatprep.subr.mxu0 0.0
  %1183 = vmatpush1.msra.mxu0 0.0
  %1184 = vmatprep.subr.mxu0 0.0
  %1185 = vmatpush1.msra.mxu0 0.0
  %1186 = vmatprep.subr.mxu0 0.0
  %1187 = vmatpush1.msra.mxu0 0.0
  %1188 = vmatprep.subr.mxu0 0.0
  %1189 = vmatpush1.msra.mxu0 0.0
  %1190 = vmatprep.subr.mxu0 0.0
  %1191 = vmatpush1.msra.mxu0 0.0
  %1192 = vmatprep.subr.mxu0 0.0
  %1193 = vmatpush1.msra.mxu0 0.0
  %1194 = vmatprep.subr.mxu0 0.0
  %1195 = vmatpush1.msra.mxu0 0.0
  %1196 = vmatprep.subr.mxu0 0.0
  %1197 = vmatpush1.msra.mxu0 0.0
  %1198 = vmatprep.subr.mxu0 0.0
  %1199 = vmatpush1.msra.mxu0 0.0
  %1200 = vmatprep.subr.mxu0 0.0
  %1201 = vmatpush1.msra.mxu0 0.0
  %1202 = vmatprep.subr.mxu0 0.0
  %1203 = vmatpush1.msra.mxu0 0.0
  %1204 = vmatprep.subr.mxu0 0.0
  %1205 = vmatpush1.msra.mxu0 0.0
  %1206 = vmatprep.subr.mxu0 0.0
  %1207 = vmatpush1.msra.mxu0 0.0
  %1208 = vmatprep.subr.mxu0 0.0
  %1209 = vmatpush1.msra.mxu0 0.0
  %1210 = vmatprep.subr.mxu0 0.0
  %1211 = vmatpush1.msra.mxu0 0.0
  %1212 = vmatprep.subr.mxu0 0.0
  %1213 = vmatpush1.msra.mxu0 0.0
  %1214 = vmatprep.subr.mxu0 0.0
  %1215 = vmatpush1.msra.mxu0 0.0
  %1216 = vmatprep.subr.mxu0 0.0
  %1217 = vmatpush1.msra.mxu0 0.0
  %1218 = vmatprep.subr.mxu0 0.0
  %1219 = vmatpush1.msra.mxu0 0.0
  %1220 = vmatprep.subr.mxu0 0.0
  %1221 = vmatpush1.msra.mxu0 0.0
  %1222 = vmatprep.subr.mxu0 0.0
  %1223 = vmatpush1.msra.mxu0 0.0
  %1224 = vmatprep.subr.mxu0 0.0
  %1225 = vmatpush1.msra.mxu0 0.0
  %1226 = vmatprep.subr.mxu0 0.0
  %1227 = vmatpush1.msra.mxu0 0.0
  %1228 = vmatprep.mubr.f32.mxu0 0.0
  %1229 = vmatmul.mubr.f32.gmra.mrb[0].mxu0 %v1159
  %v1230 = vpop.f32.mrb[0].mxu0
  %v1231 = vadd.f32 0.0, %v1230
  %v1232 = vpop.f32.mrb[0].mxu0
  %1233 = vmatprep.mubr.f32.mxu0 0.0
  %1234 = vmatmul.mubr.f32.gmra.mrb[0].mxu0 %v1162
  %v1235 = vpop.f32.mrb[0].mxu0
  %v1236 = vadd.f32 0.0, %v1235
  %v1237 = vpop.f32.mrb[0].mxu0
  %1238 = vdwg.mxu0
  %1239 = vrot.lane.b32.xlu0 %v219, 114
  %v1240 = vpop.permute.xlu0 %1239
  %1241 = vrot.lane.b32.xlu0 %v224, 114
  %v1242 = vpop.permute.xlu0 %1241
  %1245 = vxpose.xlu0.b32.start [1/16] %v1240, 128
  %1246 = vxpose.xlu0.b32.cont [2/16] %v1242, 128
  %1247 = vxpose.xlu0.b32.cont [3/16] 0.0, 128
  %1248 = vxpose.xlu0.b32.cont [4/16] 0.0, 128
  %1249 = vxpose.xlu0.b32.cont [5/16] 0.0, 128
  %1250 = vxpose.xlu0.b32.cont [6/16] 0.0, 128
  %1251 = vxpose.xlu0.b32.cont [7/16] 0.0, 128
  %1252 = vxpose.xlu0.b32.cont [8/16] 0.0, 128
  %1253 = vxpose.xlu0.b32.cont [9/16] 0.0, 128
  %1254 = vxpose.xlu0.b32.cont [10/16] 0.0, 128
  %1255 = vxpose.xlu0.b32.cont [11/16] 0.0, 128
  %1256 = vxpose.xlu0.b32.cont [12/16] 0.0, 128
  %1257 = vxpose.xlu0.b32.cont [13/16] 0.0, 128
  %1258 = vxpose.xlu0.b32.cont [14/16] 0.0, 128
  %1259 = vxpose.xlu0.b32.cont [15/16] 0.0, 128
  %1260 = vxpose.xlu0.b32.end [16/16] 0.0, 128
  %v1261 = vpop.trf.xlu0
  %v1262 = vpop.trf.xlu0
  %v1263 = vpop.trf.xlu0
  %v1264 = vpop.trf.xlu0
  %v1265 = vpop.trf.xlu0
  %v1266 = vpop.trf.xlu0
  %v1267 = vpop.trf.xlu0
  %v1268 = vpop.trf.xlu0
  %v1269 = vpop.trf.xlu0
  %v1270 = vpop.trf.xlu0
  %v1271 = vpop.trf.xlu0
  %v1272 = vpop.trf.xlu0
  %v1273 = vpop.trf.xlu0
  %v1274 = vpop.trf.xlu0
  %v1275 = vpop.trf.xlu0
  %v1276 = vpop.trf.xlu0
  %1277 = vset.pattern.permute.xlu0 6
  %1278 = vperm.xlu0 %1277, %v219
  %v1279 = vpop.permute.xlu0 %1278
  %1281 = vset.pattern.permute.xlu0 6
  %1282 = vperm.xlu0 %1281, %v224
  %v1283 = vpop.permute.xlu0 %1282
  %v1285 = vlaneseq
  %v1286 = vshrl.u32 %v1285, 7
  %v1287 = vsub.s32 0, %v1286
  %v1288 = vrot.slane %v1261, %v1287
  %v1289 = vadd.f32 %v1279, %v1288
  %v1290 = vadd.f32 %v1283, %v1288
  %vm1291 = vcmp.gt.f32.partialorder %v1289, 0.0
  %vm1292 = vcmp.gt.f32.partialorder %v1290, 0.0
  %v1293 = vmul.f32 %v1289, 0.2
  %v1294 = vmul.f32 %v1290, 0.2
  %v1295 = vsel %vm1291, %v1289, %v1293
  %v1296 = vsel %vm1292, %v1290, %v1294
  %v1297 = vsel %vm287, %v1295, -9e+15
  %v1298 = vsel %vm288, %v1296, -9e+15
  %v1299 = vsel %vm48, %v1297, -inf
  %1300 = vmax.xlane.f32.xlu0 %v1299
  %v1301 = vpop.xlane.xlu0 %1300
  %v1302 = vsel %vm48, %v1298, -inf
  %1303 = vmax.xlane.f32.xlu0 %v1302
  %v1304 = vpop.xlane.xlu0 %1303
  %v1305 = vsub.f32 %v1297, %v1301
  %v1306 = vsub.f32 %v1298, %v1304
  %v1307 = vmul.f32 %v1305, 1.442695
  %v1308 = vpow.pop %v1307
  %v1309 = vmul.f32 %v1306, 1.442695
  %v1310 = vpow.pop %v1309
  %v1311 = vsel %vm48, %v1308, 0.0
  %1312 = vadd.xlane.f32.xlu0 %v1311
  %v1313 = vpop.xlane.xlu0 %1312
  %v1314 = vsel %vm48, %v1310, 0.0
  %1315 = vadd.xlane.f32.xlu0 %v1314
  %v1316 = vpop.xlane.xlu0 %1315
  %v1317 = vrcp.pop %v1313
  %v1318 = vrcp.pop %v1316
  %v1319 = vmul.f32 %v1308, %v1317
  %v1320 = vmul.f32 %v1310, %v1318
  %1321 = vrot.lane.b32.xlu0 %v122, 80
  %v1322 = vpop.permute.xlu0 %1321
  %1323 = vrot.lane.b32.xlu0 %v127, 80
  %v1324 = vpop.permute.xlu0 %1323
  %v1328 = vsel %vm48, %v1319, 0
  %v1331 = vsel %vm48, %v1320, 0
  %1333 = vmatprep.subr.mxu0 0.0
  %1334 = vmatpush1.msra.mxu0 %v1322
  %1335 = vmatprep.subr.mxu0 0.0
  %1336 = vmatpush1.msra.mxu0 %v1324
  %1337 = vmatprep.subr.mxu0 0.0
  %1338 = vmatpush1.msra.mxu0 0.0
  %1339 = vmatprep.subr.mxu0 0.0
  %1340 = vmatpush1.msra.mxu0 0.0
  %1341 = vmatprep.subr.mxu0 0.0
  %1342 = vmatpush1.msra.mxu0 0.0
  %1343 = vmatprep.subr.mxu0 0.0
  %1344 = vmatpush1.msra.mxu0 0.0
  %1345 = vmatprep.subr.mxu0 0.0
  %1346 = vmatpush1.msra.mxu0 0.0
  %1347 = vmatprep.subr.mxu0 0.0
  %1348 = vmatpush1.msra.mxu0 0.0
  %1349 = vmatprep.subr.mxu0 0.0
  %1350 = vmatpush1.msra.mxu0 0.0
  %1351 = vmatprep.subr.mxu0 0.0
  %1352 = vmatpush1.msra.mxu0 0.0
  %1353 = vmatprep.subr.mxu0 0.0
  %1354 = vmatpush1.msra.mxu0 0.0
  %1355 = vmatprep.subr.mxu0 0.0
  %1356 = vmatpush1.msra.mxu0 0.0
  %1357 = vmatprep.subr.mxu0 0.0
  %1358 = vmatpush1.msra.mxu0 0.0
  %1359 = vmatprep.subr.mxu0 0.0
  %1360 = vmatpush1.msra.mxu0 0.0
  %1361 = vmatprep.subr.mxu0 0.0
  %1362 = vmatpush1.msra.mxu0 0.0
  %1363 = vmatprep.subr.mxu0 0.0
  %1364 = vmatpush1.msra.mxu0 0.0
  %1365 = vmatprep.subr.mxu0 0.0
  %1366 = vmatpush1.msra.mxu0 0.0
  %1367 = vmatprep.subr.mxu0 0.0
  %1368 = vmatpush1.msra.mxu0 0.0
  %1369 = vmatprep.subr.mxu0 0.0
  %1370 = vmatpush1.msra.mxu0 0.0
  %1371 = vmatprep.subr.mxu0 0.0
  %1372 = vmatpush1.msra.mxu0 0.0
  %1373 = vmatprep.subr.mxu0 0.0
  %1374 = vmatpush1.msra.mxu0 0.0
  %1375 = vmatprep.subr.mxu0 0.0
  %1376 = vmatpush1.msra.mxu0 0.0
  %1377 = vmatprep.subr.mxu0 0.0
  %1378 = vmatpush1.msra.mxu0 0.0
  %1379 = vmatprep.subr.mxu0 0.0
  %1380 = vmatpush1.msra.mxu0 0.0
  %1381 = vmatprep.subr.mxu0 0.0
  %1382 = vmatpush1.msra.mxu0 0.0
  %1383 = vmatprep.subr.mxu0 0.0
  %1384 = vmatpush1.msra.mxu0 0.0
  %1385 = vmatprep.subr.mxu0 0.0
  %1386 = vmatpush1.msra.mxu0 0.0
  %1387 = vmatprep.subr.mxu0 0.0
  %1388 = vmatpush1.msra.mxu0 0.0
  %1389 = vmatprep.subr.mxu0 0.0
  %1390 = vmatpush1.msra.mxu0 0.0
  %1391 = vmatprep.subr.mxu0 0.0
  %1392 = vmatpush1.msra.mxu0 0.0
  %1393 = vmatprep.subr.mxu0 0.0
  %1394 = vmatpush1.msra.mxu0 0.0
  %1395 = vmatprep.subr.mxu0 0.0
  %1396 = vmatpush1.msra.mxu0 0.0
  %1397 = vmatprep.mubr.f32.mxu0 0.0
  %1398 = vmatmul.mubr.f32.gmra.mrb[0].mxu0 %v1328
  %v1399 = vpop.f32.mrb[0].mxu0
  %v1400 = vadd.f32 0.0, %v1399
  %v1401 = vpop.f32.mrb[0].mxu0
  %1402 = vmatprep.mubr.f32.mxu0 0.0
  %1403 = vmatmul.mubr.f32.gmra.mrb[0].mxu0 %v1331
  %v1404 = vpop.f32.mrb[0].mxu0
  %v1405 = vadd.f32 0.0, %v1404
  %v1406 = vpop.f32.mrb[0].mxu0
  %1407 = vdwg.mxu0
  %1408 = vrot.lane.b32.xlu0 %v219, 113
  %v1409 = vpop.permute.xlu0 %1408
  %1410 = vrot.lane.b32.xlu0 %v224, 113
  %v1411 = vpop.permute.xlu0 %1410
  %1414 = vxpose.xlu0.b32.start [1/16] %v1409, 128
  %1415 = vxpose.xlu0.b32.cont [2/16] %v1411, 128
  %1416 = vxpose.xlu0.b32.cont [3/16] 0.0, 128
  %1417 = vxpose.xlu0.b32.cont [4/16] 0.0, 128
  %1418 = vxpose.xlu0.b32.cont [5/16] 0.0, 128
  %1419 = vxpose.xlu0.b32.cont [6/16] 0.0, 128
  %1420 = vxpose.xlu0.b32.cont [7/16] 0.0, 128
  %1421 = vxpose.xlu0.b32.cont [8/16] 0.0, 128
  %1422 = vxpose.xlu0.b32.cont [9/16] 0.0, 128
  %1423 = vxpose.xlu0.b32.cont [10/16] 0.0, 128
  %1424 = vxpose.xlu0.b32.cont [11/16] 0.0, 128
  %1425 = vxpose.xlu0.b32.cont [12/16] 0.0, 128
  %1426 = vxpose.xlu0.b32.cont [13/16] 0.0, 128
  %1427 = vxpose.xlu0.b32.cont [14/16] 0.0, 128
  %1428 = vxpose.xlu0.b32.cont [15/16] 0.0, 128
  %1429 = vxpose.xlu0.b32.end [16/16] 0.0, 128
  %v1430 = vpop.trf.xlu0
  %v1431 = vpop.trf.xlu0
  %v1432 = vpop.trf.xlu0
  %v1433 = vpop.trf.xlu0
  %v1434 = vpop.trf.xlu0
  %v1435 = vpop.trf.xlu0
  %v1436 = vpop.trf.xlu0
  %v1437 = vpop.trf.xlu0
  %v1438 = vpop.trf.xlu0
  %v1439 = vpop.trf.xlu0
  %v1440 = vpop.trf.xlu0
  %v1441 = vpop.trf.xlu0
  %v1442 = vpop.trf.xlu0
  %v1443 = vpop.trf.xlu0
  %v1444 = vpop.trf.xlu0
  %v1445 = vpop.trf.xlu0
  %1446 = vset.pattern.permute.xlu0 7
  %1447 = vperm.xlu0 %1446, %v219
  %v1448 = vpop.permute.xlu0 %1447
  %1450 = vset.pattern.permute.xlu0 7
  %1451 = vperm.xlu0 %1450, %v224
  %v1452 = vpop.permute.xlu0 %1451
  %v1454 = vlaneseq
  %v1455 = vshrl.u32 %v1454, 7
  %v1456 = vsub.s32 0, %v1455
  %v1457 = vrot.slane %v1430, %v1456
  %v1458 = vadd.f32 %v1448, %v1457
  %v1459 = vadd.f32 %v1452, %v1457
  %vm1460 = vcmp.gt.f32.partialorder %v1458, 0.0
  %vm1461 = vcmp.gt.f32.partialorder %v1459, 0.0
  %v1462 = vmul.f32 %v1458, 0.2
  %v1463 = vmul.f32 %v1459, 0.2
  %v1464 = vsel %vm1460, %v1458, %v1462
  %v1465 = vsel %vm1461, %v1459, %v1463
  %v1466 = vsel %vm287, %v1464, -9e+15
  %v1467 = vsel %vm288, %v1465, -9e+15
  %v1468 = vsel %vm48, %v1466, -inf
  %1469 = vmax.xlane.f32.xlu0 %v1468
  %v1470 = vpop.xlane.xlu0 %1469
  %v1471 = vsel %vm48, %v1467, -inf
  %1472 = vmax.xlane.f32.xlu0 %v1471
  %v1473 = vpop.xlane.xlu0 %1472
  %v1474 = vsub.f32 %v1466, %v1470
  %v1475 = vsub.f32 %v1467, %v1473
  %v1476 = vmul.f32 %v1474, 1.442695
  %v1477 = vpow.pop %v1476
  %v1478 = vmul.f32 %v1475, 1.442695
  %v1479 = vpow.pop %v1478
  %v1480 = vsel %vm48, %v1477, 0.0
  %1481 = vadd.xlane.f32.xlu0 %v1480
  %v1482 = vpop.xlane.xlu0 %1481
  %v1483 = vsel %vm48, %v1479, 0.0
  %1484 = vadd.xlane.f32.xlu0 %v1483
  %v1485 = vpop.xlane.xlu0 %1484
  %v1486 = vrcp.pop %v1482
  %v1487 = vrcp.pop %v1485
  %v1488 = vmul.f32 %v1477, %v1486
  %v1489 = vmul.f32 %v1479, %v1487
  %1490 = vrot.lane.b32.xlu0 %v122, 72
  %v1491 = vpop.permute.xlu0 %1490
  %1492 = vrot.lane.b32.xlu0 %v127, 72
  %v1493 = vpop.permute.xlu0 %1492
  %v1497 = vsel %vm48, %v1488, 0
  %v1500 = vsel %vm48, %v1489, 0
  %1502 = vmatprep.subr.mxu0 0.0
  %1503 = vmatpush1.msra.mxu0 %v1491
  %1504 = vmatprep.subr.mxu0 0.0
  %1505 = vmatpush1.msra.mxu0 %v1493
  %1506 = vmatprep.subr.mxu0 0.0
  %1507 = vmatpush1.msra.mxu0 0.0
  %1508 = vmatprep.subr.mxu0 0.0
  %1509 = vmatpush1.msra.mxu0 0.0
  %1510 = vmatprep.subr.mxu0 0.0
  %1511 = vmatpush1.msra.mxu0 0.0
  %1512 = vmatprep.subr.mxu0 0.0
  %1513 = vmatpush1.msra.mxu0 0.0
  %1514 = vmatprep.subr.mxu0 0.0
  %1515 = vmatpush1.msra.mxu0 0.0
  %1516 = vmatprep.subr.mxu0 0.0
  %1517 = vmatpush1.msra.mxu0 0.0
  %1518 = vmatprep.subr.mxu0 0.0
  %1519 = vmatpush1.msra.mxu0 0.0
  %1520 = vmatprep.subr.mxu0 0.0
  %1521 = vmatpush1.msra.mxu0 0.0
  %1522 = vmatprep.subr.mxu0 0.0
  %1523 = vmatpush1.msra.mxu0 0.0
  %1524 = vmatprep.subr.mxu0 0.0
  %1525 = vmatpush1.msra.mxu0 0.0
  %1526 = vmatprep.subr.mxu0 0.0
  %1527 = vmatpush1.msra.mxu0 0.0
  %1528 = vmatprep.subr.mxu0 0.0
  %1529 = vmatpush1.msra.mxu0 0.0
  %1530 = vmatprep.subr.mxu0 0.0
  %1531 = vmatpush1.msra.mxu0 0.0
  %1532 = vmatprep.subr.mxu0 0.0
  %1533 = vmatpush1.msra.mxu0 0.0
  %1534 = vmatprep.subr.mxu0 0.0
  %1535 = vmatpush1.msra.mxu0 0.0
  %1536 = vmatprep.subr.mxu0 0.0
  %1537 = vmatpush1.msra.mxu0 0.0
  %1538 = vmatprep.subr.mxu0 0.0
  %1539 = vmatpush1.msra.mxu0 0.0
  %1540 = vmatprep.subr.mxu0 0.0
  %1541 = vmatpush1.msra.mxu0 0.0
  %1542 = vmatprep.subr.mxu0 0.0
  %1543 = vmatpush1.msra.mxu0 0.0
  %1544 = vmatprep.subr.mxu0 0.0
  %1545 = vmatpush1.msra.mxu0 0.0
  %1546 = vmatprep.subr.mxu0 0.0
  %1547 = vmatpush1.msra.mxu0 0.0
  %1548 = vmatprep.subr.mxu0 0.0
  %1549 = vmatpush1.msra.mxu0 0.0
  %1550 = vmatprep.subr.mxu0 0.0
  %1551 = vmatpush1.msra.mxu0 0.0
  %1552 = vmatprep.subr.mxu0 0.0
  %1553 = vmatpush1.msra.mxu0 0.0
  %1554 = vmatprep.subr.mxu0 0.0
  %1555 = vmatpush1.msra.mxu0 0.0
  %1556 = vmatprep.subr.mxu0 0.0
  %1557 = vmatpush1.msra.mxu0 0.0
  %1558 = vmatprep.subr.mxu0 0.0
  %1559 = vmatpush1.msra.mxu0 0.0
  %1560 = vmatprep.subr.mxu0 0.0
  %1561 = vmatpush1.msra.mxu0 0.0
  %1562 = vmatprep.subr.mxu0 0.0
  %1563 = vmatpush1.msra.mxu0 0.0
  %1564 = vmatprep.subr.mxu0 0.0
  %1565 = vmatpush1.msra.mxu0 0.0
  %1566 = vmatprep.mubr.f32.mxu0 0.0
  %1567 = vmatmul.mubr.f32.gmra.mrb[0].mxu0 %v1497
  %v1568 = vpop.f32.mrb[0].mxu0
  %v1569 = vadd.f32 0.0, %v1568
  %v1570 = vpop.f32.mrb[0].mxu0
  %1571 = vmatprep.mubr.f32.mxu0 0.0
  %1572 = vmatmul.mubr.f32.gmra.mrb[0].mxu0 %v1500
  %v1573 = vpop.f32.mrb[0].mxu0
  %v1574 = vadd.f32 0.0, %v1573
  %v1575 = vpop.f32.mrb[0].mxu0
  %1576 = vdwg.mxu0
  %vm1577 = vcmp.gt.f32.partialorder %v386, 0.0
  %vm1578 = vcmp.gt.f32.partialorder %v391, 0.0
  %v1579 = vmin.f32 %v386, 0.0
  %v1580 = vmin.f32 %v391, 0.0
  %v1581 = vmul.f32 %v1579, 1.442695
  %v1582 = vpow.pop %v1581
  %v1583 = vmul.f32 %v1580, 1.442695
  %v1584 = vpow.pop %v1583
  %v1585 = vsub.f32 %v1582, 1.0
  %v1586 = vsub.f32 %v1584, 1.0
  %v1587 = vsel %vm1577, %v386, %v1585
  %v1588 = vsel %vm1578, %v391, %v1586
  %vm1589 = vcmask 64512
  %1590 = vst.msk [vmem:[#allocation2] sm:$0xff] %vm1589, %v1587
  %1591 = vst.msk [vmem:[#allocation2 + $0x8] sm:$0xff] %vm1589, %v1588
  %vm1592 = vcmp.gt.f32.partialorder %v555, 0.0
  %vm1593 = vcmp.gt.f32.partialorder %v560, 0.0
  %v1594 = vmin.f32 %v555, 0.0
  %v1595 = vmin.f32 %v560, 0.0
  %v1596 = vmul.f32 %v1594, 1.442695
  %v1597 = vpow.pop %v1596
  %v1598 = vmul.f32 %v1595, 1.442695
  %v1599 = vpow.pop %v1598
  %v1600 = vsub.f32 %v1597, 1.0
  %v1601 = vsub.f32 %v1599, 1.0
  %v1602 = vsel %vm1592, %v555, %v1600
  %v1603 = vsel %vm1593, %v560, %v1601
  %1606 = vrot.lane.b32.xlu0 %v1602, 8
  %v1607 = vpop.permute.xlu0 %1606
  %1608 = vrot.lane.b32.xlu0 %v1603, 8
  %v1609 = vpop.permute.xlu0 %1608
  %vm1612 = vcmask 130112
  %1613 = vst.msk [vmem:[#allocation2] sm:$0xff] %vm1612, %v1607
  %1614 = vst.msk [vmem:[#allocation2 + $0x8] sm:$0xff] %vm1612, %v1609
  %vm1615 = vcmp.gt.f32.partialorder %v724, 0.0
  %vm1616 = vcmp.gt.f32.partialorder %v729, 0.0
  %v1617 = vmin.f32 %v724, 0.0
  %v1618 = vmin.f32 %v729, 0.0
  %v1619 = vmul.f32 %v1617, 1.442695
  %v1620 = vpow.pop %v1619
  %v1621 = vmul.f32 %v1618, 1.442695
  %v1622 = vpow.pop %v1621
  %v1623 = vsub.f32 %v1620, 1.0
  %v1624 = vsub.f32 %v1622, 1.0
  %v1625 = vsel %vm1615, %v724, %v1623
  %v1626 = vsel %vm1616, %v729, %v1624
  %1629 = vrot.lane.b32.xlu0 %v1625, 16
  %v1630 = vpop.permute.xlu0 %1629
  %1631 = vrot.lane.b32.xlu0 %v1626, 16
  %v1632 = vpop.permute.xlu0 %1631
  %vm1635 = vcmask 195712
  %1636 = vst.msk [vmem:[#allocation2] sm:$0xff] %vm1635, %v1630
  %1637 = vst.msk [vmem:[#allocation2 + $0x8] sm:$0xff] %vm1635, %v1632
  %vm1638 = vcmp.gt.f32.partialorder %v893, 0.0
  %vm1639 = vcmp.gt.f32.partialorder %v898, 0.0
  %v1640 = vmin.f32 %v893, 0.0
  %v1641 = vmin.f32 %v898, 0.0
  %v1642 = vmul.f32 %v1640, 1.442695
  %v1643 = vpow.pop %v1642
  %v1644 = vmul.f32 %v1641, 1.442695
  %v1645 = vpow.pop %v1644
  %v1646 = vsub.f32 %v1643, 1.0
  %v1647 = vsub.f32 %v1645, 1.0
  %v1648 = vsel %vm1638, %v893, %v1646
  %v1649 = vsel %vm1639, %v898, %v1647
  %1652 = vrot.lane.b32.xlu0 %v1648, 24
  %v1653 = vpop.permute.xlu0 %1652
  %1654 = vrot.lane.b32.xlu0 %v1649, 24
  %v1655 = vpop.permute.xlu0 %1654
  %vm1658 = vcmask 261312
  %1659 = vst.msk [vmem:[#allocation2] sm:$0xff] %vm1658, %v1653
  %1660 = vst.msk [vmem:[#allocation2 + $0x8] sm:$0xff] %vm1658, %v1655
  %vm1661 = vcmp.gt.f32.partialorder %v1062, 0.0
  %vm1662 = vcmp.gt.f32.partialorder %v1067, 0.0
  %v1663 = vmin.f32 %v1062, 0.0
  %v1664 = vmin.f32 %v1067, 0.0
  %v1665 = vmul.f32 %v1663, 1.442695
  %v1666 = vpow.pop %v1665
  %v1667 = vmul.f32 %v1664, 1.442695
  %v1668 = vpow.pop %v1667
  %v1669 = vsub.f32 %v1666, 1.0
  %v1670 = vsub.f32 %v1668, 1.0
  %v1671 = vsel %vm1661, %v1062, %v1669
  %v1672 = vsel %vm1662, %v1067, %v1670
  %1675 = vrot.lane.b32.xlu0 %v1671, 32
  %v1676 = vpop.permute.xlu0 %1675
  %1677 = vrot.lane.b32.xlu0 %v1672, 32
  %v1678 = vpop.permute.xlu0 %1677
  %vm1681 = vcmask 326912
  %1682 = vst.msk [vmem:[#allocation2] sm:$0xff] %vm1681, %v1676
  %1683 = vst.msk [vmem:[#allocation2 + $0x8] sm:$0xff] %vm1681, %v1678
  %vm1684 = vcmp.gt.f32.partialorder %v1231, 0.0
  %vm1685 = vcmp.gt.f32.partialorder %v1236, 0.0
  %v1686 = vmin.f32 %v1231, 0.0
  %v1687 = vmin.f32 %v1236, 0.0
  %v1688 = vmul.f32 %v1686, 1.442695
  %v1689 = vpow.pop %v1688
  %v1690 = vmul.f32 %v1687, 1.442695
  %v1691 = vpow.pop %v1690
  %v1692 = vsub.f32 %v1689, 1.0
  %v1693 = vsub.f32 %v1691, 1.0
  %v1694 = vsel %vm1684, %v1231, %v1692
  %v1695 = vsel %vm1685, %v1236, %v1693
  %1698 = vrot.lane.b32.xlu0 %v1694, 40
  %v1699 = vpop.permute.xlu0 %1698
  %1700 = vrot.lane.b32.xlu0 %v1695, 40
  %v1701 = vpop.permute.xlu0 %1700
  %vm1704 = vcmask 392512
  %1705 = vst.msk [vmem:[#allocation2] sm:$0xff] %vm1704, %v1699
  %1706 = vst.msk [vmem:[#allocation2 + $0x8] sm:$0xff] %vm1704, %v1701
  %vm1707 = vcmp.gt.f32.partialorder %v1400, 0.0
  %vm1708 = vcmp.gt.f32.partialorder %v1405, 0.0
  %v1709 = vmin.f32 %v1400, 0.0
  %v1710 = vmin.f32 %v1405, 0.0
  %v1711 = vmul.f32 %v1709, 1.442695
  %v1712 = vpow.pop %v1711
  %v1713 = vmul.f32 %v1710, 1.442695
  %v1714 = vpow.pop %v1713
  %v1715 = vsub.f32 %v1712, 1.0
  %v1716 = vsub.f32 %v1714, 1.0
  %v1717 = vsel %vm1707, %v1400, %v1715
  %v1718 = vsel %vm1708, %v1405, %v1716
  %1721 = vrot.lane.b32.xlu0 %v1717, 48
  %v1722 = vpop.permute.xlu0 %1721
  %1723 = vrot.lane.b32.xlu0 %v1718, 48
  %v1724 = vpop.permute.xlu0 %1723
  %vm1727 = vcmask 458112
  %1728 = vst.msk [vmem:[#allocation2] sm:$0xff] %vm1727, %v1722
  %1729 = vst.msk [vmem:[#allocation2 + $0x8] sm:$0xff] %vm1727, %v1724
  %vm1730 = vcmp.gt.f32.partialorder %v1569, 0.0
  %vm1731 = vcmp.gt.f32.partialorder %v1574, 0.0
  %v1732 = vmin.f32 %v1569, 0.0
  %v1733 = vmin.f32 %v1574, 0.0
  %v1734 = vmul.f32 %v1732, 1.442695
  %v1735 = vpow.pop %v1734
  %v1736 = vmul.f32 %v1733, 1.442695
  %v1737 = vpow.pop %v1736
  %v1738 = vsub.f32 %v1735, 1.0
  %v1739 = vsub.f32 %v1737, 1.0
  %v1740 = vsel %vm1730, %v1569, %v1738
  %v1741 = vsel %vm1731, %v1574, %v1739
  %1744 = vrot.lane.b32.xlu0 %v1740, 56
  %v1745 = vpop.permute.xlu0 %1744
  %1746 = vrot.lane.b32.xlu0 %v1741, 56
  %v1747 = vpop.permute.xlu0 %1746
  %vm1750 = vcmask 523712
  %1751 = vst.msk [vmem:[#allocation2] sm:$0xff] %vm1750, %v1745
  %1752 = vst.msk [vmem:[#allocation2 + $0x8] sm:$0xff] %vm1750, %v1747
  %v1753 = vld [vmem:[#allocation2] sm:$0xff]
  %v1754 = vld [vmem:[#allocation2 + $0x8] sm:$0xff]
  %v1755 = vld [vmem:[%s6] sm:$0xff]
  %v1756 = vld [vmem:[%s6 + $0x8] sm:$0xff]
  %v1757 = vld [vmem:[%s6 + $0x10] sm:$0xff]
  %v1758 = vld [vmem:[%s6 + $0x18] sm:$0xff]
  %v1759 = vld [vmem:[%s6 + $0x20] sm:$0xff]
  %v1760 = vld [vmem:[%s6 + $0x28] sm:$0xff]
  %v1761 = vld [vmem:[%s6 + $0x30] sm:$0xff]
  %v1762 = vld [vmem:[%s6 + $0x38] sm:$0xff]
  %v1763 = vld [vmem:[%s7] sm:$0x1]
  %v1765 = vlaneseq
  %v1766 = vshrl.u32 %v1765, 7
  %v1767 = vsub.s32 0, %v1766
  %v1768 = vrot.slane %v1763, %v1767
  %v1771 = vsel %vm145, %v1753, 0
  %v1774 = vsel %vm145, %v1754, 0
  %1776 = vmatprep.subr.mxu0 0.0
  %1777 = vmatpush1.msra.mxu0 %v1755
  %1778 = vmatprep.subr.mxu0 0.0
  %1779 = vmatpush1.msra.mxu0 %v1756
  %1780 = vmatprep.subr.mxu0 0.0
  %1781 = vmatpush1.msra.mxu0 %v1757
  %1782 = vmatprep.subr.mxu0 0.0
  %1783 = vmatpush1.msra.mxu0 %v1758
  %1784 = vmatprep.subr.mxu0 0.0
  %1785 = vmatpush1.msra.mxu0 %v1759
  %1786 = vmatprep.subr.mxu0 0.0
  %1787 = vmatpush1.msra.mxu0 %v1760
  %1788 = vmatprep.subr.mxu0 0.0
  %1789 = vmatpush1.msra.mxu0 %v1761
  %1790 = vmatprep.subr.mxu0 0.0
  %1791 = vmatpush1.msra.mxu0 %v1762
  %1792 = vmatprep.subr.mxu0 0.0
  %1793 = vmatpush1.msra.mxu0 0.0
  %1794 = vmatprep.subr.mxu0 0.0
  %1795 = vmatpush1.msra.mxu0 0.0
  %1796 = vmatprep.subr.mxu0 0.0
  %1797 = vmatpush1.msra.mxu0 0.0
  %1798 = vmatprep.subr.mxu0 0.0
  %1799 = vmatpush1.msra.mxu0 0.0
  %1800 = vmatprep.subr.mxu0 0.0
  %1801 = vmatpush1.msra.mxu0 0.0
  %1802 = vmatprep.subr.mxu0 0.0
  %1803 = vmatpush1.msra.mxu0 0.0
  %1804 = vmatprep.subr.mxu0 0.0
  %1805 = vmatpush1.msra.mxu0 0.0
  %1806 = vmatprep.subr.mxu0 0.0
  %1807 = vmatpush1.msra.mxu0 0.0
  %1808 = vmatprep.subr.mxu0 0.0
  %1809 = vmatpush1.msra.mxu0 0.0
  %1810 = vmatprep.subr.mxu0 0.0
  %1811 = vmatpush1.msra.mxu0 0.0
  %1812 = vmatprep.subr.mxu0 0.0
  %1813 = vmatpush1.msra.mxu0 0.0
  %1814 = vmatprep.subr.mxu0 0.0
  %1815 = vmatpush1.msra.mxu0 0.0
  %1816 = vmatprep.subr.mxu0 0.0
  %1817 = vmatpush1.msra.mxu0 0.0
  %1818 = vmatprep.subr.mxu0 0.0
  %1819 = vmatpush1.msra.mxu0 0.0
  %1820 = vmatprep.subr.mxu0 0.0
  %1821 = vmatpush1.msra.mxu0 0.0
  %1822 = vmatprep.subr.mxu0 0.0
  %1823 = vmatpush1.msra.mxu0 0.0
  %1824 = vmatprep.subr.mxu0 0.0
  %1825 = vmatpush1.msra.mxu0 0.0
  %1826 = vmatprep.subr.mxu0 0.0
  %1827 = vmatpush1.msra.mxu0 0.0
  %1828 = vmatprep.subr.mxu0 0.0
  %1829 = vmatpush1.msra.mxu0 0.0
  %1830 = vmatprep.subr.mxu0 0.0
  %1831 = vmatpush1.msra.mxu0 0.0
  %1832 = vmatprep.subr.mxu0 0.0
  %1833 = vmatpush1.msra.mxu0 0.0
  %1834 = vmatprep.subr.mxu0 0.0
  %1835 = vmatpush1.msra.mxu0 0.0
  %1836 = vmatprep.subr.mxu0 0.0
  %1837 = vmatpush1.msra.mxu0 0.0
  %1838 = vmatprep.subr.mxu0 0.0
  %1839 = vmatpush1.msra.mxu0 0.0
  %1840 = vmatprep.mubr.f32.mxu0 0.0
  %1841 = vmatmul.mubr.f32.gmra.mrb[0].mxu0 %v1771
  %v1842 = vpop.f32.mrb[0].mxu0
  %v1843 = vadd.f32 %v1768, %v1842
  %v1844 = vpop.f32.mrb[0].mxu0
  %1845 = vmatprep.mubr.f32.mxu0 0.0
  %1846 = vmatmul.mubr.f32.gmra.mrb[0].mxu0 %v1774
  %v1847 = vpop.f32.mrb[0].mxu0
  %v1848 = vadd.f32 %v1768, %v1847
  %v1849 = vpop.f32.mrb[0].mxu0
  %1850 = vdwg.mxu0
  %v1851 = vld [vmem:[%s8] sm:$0xff]
  %v1852 = vld [vmem:[%s8 + $0x8] sm:$0xff]
  %v1853 = vld [vmem:[%s8 + $0x10] sm:$0xff]
  %v1854 = vld [vmem:[%s8 + $0x18] sm:$0xff]
  %v1855 = vld [vmem:[%s9] sm:$0x1]
  %v1857 = vlaneseq
  %v1858 = vshrl.u32 %v1857, 7
  %v1859 = vsub.s32 0, %v1858
  %v1860 = vrot.slane %v1855, %v1859
  %vm1862 = vcmask 261120
  %v1864 = vsel %vm1862, %v1843, 0
  %v1867 = vsel %vm1862, %v1848, 0
  %1869 = vmatprep.subr.mxu0 0.0
  %1870 = vmatpush1.msra.mxu0 %v1851
  %1871 = vmatprep.subr.mxu0 0.0
  %1872 = vmatpush1.msra.mxu0 %v1852
  %1873 = vmatprep.subr.mxu0 0.0
  %1874 = vmatpush1.msra.mxu0 %v1853
  %1875 = vmatprep.subr.mxu0 0.0
  %1876 = vmatpush1.msra.mxu0 %v1854
  %1877 = vmatprep.subr.mxu0 0.0
  %1878 = vmatpush1.msra.mxu0 0.0
  %1879 = vmatprep.subr.mxu0 0.0
  %1880 = vmatpush1.msra.mxu0 0.0
  %1881 = vmatprep.subr.mxu0 0.0
  %1882 = vmatpush1.msra.mxu0 0.0
  %1883 = vmatprep.subr.mxu0 0.0
  %1884 = vmatpush1.msra.mxu0 0.0
  %1885 = vmatprep.subr.mxu0 0.0
  %1886 = vmatpush1.msra.mxu0 0.0
  %1887 = vmatprep.subr.mxu0 0.0
  %1888 = vmatpush1.msra.mxu0 0.0
  %1889 = vmatprep.subr.mxu0 0.0
  %1890 = vmatpush1.msra.mxu0 0.0
  %1891 = vmatprep.subr.mxu0 0.0
  %1892 = vmatpush1.msra.mxu0 0.0
  %1893 = vmatprep.subr.mxu0 0.0
  %1894 = vmatpush1.msra.mxu0 0.0
  %1895 = vmatprep.subr.mxu0 0.0
  %1896 = vmatpush1.msra.mxu0 0.0
  %1897 = vmatprep.subr.mxu0 0.0
  %1898 = vmatpush1.msra.mxu0 0.0
  %1899 = vmatprep.subr.mxu0 0.0
  %1900 = vmatpush1.msra.mxu0 0.0
  %1901 = vmatprep.subr.mxu0 0.0
  %1902 = vmatpush1.msra.mxu0 0.0
  %1903 = vmatprep.subr.mxu0 0.0
  %1904 = vmatpush1.msra.mxu0 0.0
  %1905 = vmatprep.subr.mxu0 0.0
  %1906 = vmatpush1.msra.mxu0 0.0
  %1907 = vmatprep.subr.mxu0 0.0
  %1908 = vmatpush1.msra.mxu0 0.0
  %1909 = vmatprep.subr.mxu0 0.0
  %1910 = vmatpush1.msra.mxu0 0.0
  %1911 = vmatprep.subr.mxu0 0.0
  %1912 = vmatpush1.msra.mxu0 0.0
  %1913 = vmatprep.subr.mxu0 0.0
  %1914 = vmatpush1.msra.mxu0 0.0
  %1915 = vmatprep.subr.mxu0 0.0
  %1916 = vmatpush1.msra.mxu0 0.0
  %1917 = vmatprep.subr.mxu0 0.0
  %1918 = vmatpush1.msra.mxu0 0.0
  %1919 = vmatprep.subr.mxu0 0.0
  %1920 = vmatpush1.msra.mxu0 0.0
  %1921 = vmatprep.subr.mxu0 0.0
  %1922 = vmatpush1.msra.mxu0 0.0
  %1923 = vmatprep.subr.mxu0 0.0
  %1924 = vmatpush1.msra.mxu0 0.0
  %1925 = vmatprep.subr.mxu0 0.0
  %1926 = vmatpush1.msra.mxu0 0.0
  %1927 = vmatprep.subr.mxu0 0.0
  %1928 = vmatpush1.msra.mxu0 0.0
  %1929 = vmatprep.subr.mxu0 0.0
  %1930 = vmatpush1.msra.mxu0 0.0
  %1931 = vmatprep.subr.mxu0 0.0
  %1932 = vmatpush1.msra.mxu0 0.0
  %1933 = vmatprep.mubr.f32.mxu0 0.0
  %1934 = vmatmul.mubr.f32.gmra.mrb[0].mxu0 %v1864
  %v1935 = vpop.f32.mrb[0].mxu0
  %v1936 = vadd.f32 %v1860, %v1935
  %v1937 = vpop.f32.mrb[0].mxu0
  %1938 = vmatprep.mubr.f32.mxu0 0.0
  %1939 = vmatmul.mubr.f32.gmra.mrb[0].mxu0 %v1867
  %v1940 = vpop.f32.mrb[0].mxu0
  %v1941 = vadd.f32 %v1860, %v1940
  %v1942 = vpop.f32.mrb[0].mxu0
  %1943 = vdwg.mxu0
  %1946 = vrot.lane.b32.xlu0 %v1936, 120
  %v1947 = vpop.permute.xlu0 %1946
  %1948 = vrot.lane.b32.xlu0 %v1941, 120
  %v1949 = vpop.permute.xlu0 %1948
  %1952 = vxpose.xlu0.b32.start [1/16] %v1947, 128
  %1953 = vxpose.xlu0.b32.cont [2/16] %v1949, 128
  %1954 = vxpose.xlu0.b32.cont [3/16] 0.0, 128
  %1955 = vxpose.xlu0.b32.cont [4/16] 0.0, 128
  %1956 = vxpose.xlu0.b32.cont [5/16] 0.0, 128
  %1957 = vxpose.xlu0.b32.cont [6/16] 0.0, 128
  %1958 = vxpose.xlu0.b32.cont [7/16] 0.0, 128
  %1959 = vxpose.xlu0.b32.cont [8/16] 0.0, 128
  %1960 = vxpose.xlu0.b32.cont [9/16] 0.0, 128
  %1961 = vxpose.xlu0.b32.cont [10/16] 0.0, 128
  %1962 = vxpose.xlu0.b32.cont [11/16] 0.0, 128
  %1963 = vxpose.xlu0.b32.cont [12/16] 0.0, 128
  %1964 = vxpose.xlu0.b32.cont [13/16] 0.0, 128
  %1965 = vxpose.xlu0.b32.cont [14/16] 0.0, 128
  %1966 = vxpose.xlu0.b32.cont [15/16] 0.0, 128
  %1967 = vxpose.xlu0.b32.end [16/16] 0.0, 128
  %v1968 = vpop.trf.xlu0
  %v1969 = vpop.trf.xlu0
  %v1970 = vpop.trf.xlu0
  %v1971 = vpop.trf.xlu0
  %v1972 = vpop.trf.xlu0
  %v1973 = vpop.trf.xlu0
  %v1974 = vpop.trf.xlu0
  %v1975 = vpop.trf.xlu0
  %v1976 = vpop.trf.xlu0
  %v1977 = vpop.trf.xlu0
  %v1978 = vpop.trf.xlu0
  %v1979 = vpop.trf.xlu0
  %v1980 = vpop.trf.xlu0
  %v1981 = vpop.trf.xlu0
  %v1982 = vpop.trf.xlu0
  %v1983 = vpop.trf.xlu0
  %1984 = vset.pattern.permute.xlu0 0
  %1985 = vperm.xlu0 %1984, %v1936
  %v1986 = vpop.permute.xlu0 %1985
  %1988 = vset.pattern.permute.xlu0 0
  %1989 = vperm.xlu0 %1988, %v1941
  %v1990 = vpop.permute.xlu0 %1989
  %v1992 = vlaneseq
  %v1993 = vshrl.u32 %v1992, 7
  %v1994 = vsub.s32 0, %v1993
  %v1995 = vrot.slane %v1968, %v1994
  %v1996 = vadd.f32 %v1986, %v1995
  %v1997 = vadd.f32 %v1990, %v1995
  %vm1998 = vcmp.gt.f32.partialorder %v1996, 0.0
  %vm1999 = vcmp.gt.f32.partialorder %v1997, 0.0
  %v2000 = vmul.f32 %v1996, 0.2
  %v2001 = vmul.f32 %v1997, 0.2
  %v2002 = vsel %vm1998, %v1996, %v2000
  %v2003 = vsel %vm1999, %v1997, %v2001
  %v2004 = vsel %vm287, %v2002, -9e+15
  %v2005 = vsel %vm288, %v2003, -9e+15
  %v2006 = vsel %vm48, %v2004, -inf
  %2007 = vmax.xlane.f32.xlu0 %v2006
  %v2008 = vpop.xlane.xlu0 %2007
  %v2009 = vsel %vm48, %v2005, -inf
  %2010 = vmax.xlane.f32.xlu0 %v2009
  %v2011 = vpop.xlane.xlu0 %2010
  %v2012 = vsub.f32 %v2004, %v2008
  %v2013 = vsub.f32 %v2005, %v2011
  %v2014 = vmul.f32 %v2012, 1.442695
  %v2015 = vpow.pop %v2014
  %v2016 = vmul.f32 %v2013, 1.442695
  %v2017 = vpow.pop %v2016
  %v2018 = vsel %vm48, %v2015, 0.0
  %2019 = vadd.xlane.f32.xlu0 %v2018
  %v2020 = vpop.xlane.xlu0 %2019
  %v2021 = vsel %vm48, %v2017, 0.0
  %2022 = vadd.xlane.f32.xlu0 %v2021
  %v2023 = vpop.xlane.xlu0 %2022
  %v2024 = vrcp.pop %v2020
  %v2025 = vrcp.pop %v2023
  %v2026 = vmul.f32 %v2015, %v2024
  %v2027 = vmul.f32 %v2017, %v2025
  %2028 = vrot.lane.b32.xlu0 %v1936, 119
  %v2029 = vpop.permute.xlu0 %2028
  %2030 = vrot.lane.b32.xlu0 %v1941, 119
  %v2031 = vpop.permute.xlu0 %2030
  %2034 = vxpose.xlu0.b32.start [1/16] %v2029, 128
  %2035 = vxpose.xlu0.b32.cont [2/16] %v2031, 128
  %2036 = vxpose.xlu0.b32.cont [3/16] 0.0, 128
  %2037 = vxpose.xlu0.b32.cont [4/16] 0.0, 128
  %2038 = vxpose.xlu0.b32.cont [5/16] 0.0, 128
  %2039 = vxpose.xlu0.b32.cont [6/16] 0.0, 128
  %2040 = vxpose.xlu0.b32.cont [7/16] 0.0, 128
  %2041 = vxpose.xlu0.b32.cont [8/16] 0.0, 128
  %2042 = vxpose.xlu0.b32.cont [9/16] 0.0, 128
  %2043 = vxpose.xlu0.b32.cont [10/16] 0.0, 128
  %2044 = vxpose.xlu0.b32.cont [11/16] 0.0, 128
  %2045 = vxpose.xlu0.b32.cont [12/16] 0.0, 128
  %2046 = vxpose.xlu0.b32.cont [13/16] 0.0, 128
  %2047 = vxpose.xlu0.b32.cont [14/16] 0.0, 128
  %2048 = vxpose.xlu0.b32.cont [15/16] 0.0, 128
  %2049 = vxpose.xlu0.b32.end [16/16] 0.0, 128
  %v2050 = vpop.trf.xlu0
  %v2051 = vpop.trf.xlu0
  %v2052 = vpop.trf.xlu0
  %v2053 = vpop.trf.xlu0
  %v2054 = vpop.trf.xlu0
  %v2055 = vpop.trf.xlu0
  %v2056 = vpop.trf.xlu0
  %v2057 = vpop.trf.xlu0
  %v2058 = vpop.trf.xlu0
  %v2059 = vpop.trf.xlu0
  %v2060 = vpop.trf.xlu0
  %v2061 = vpop.trf.xlu0
  %v2062 = vpop.trf.xlu0
  %v2063 = vpop.trf.xlu0
  %v2064 = vpop.trf.xlu0
  %v2065 = vpop.trf.xlu0
  %2066 = vset.pattern.permute.xlu0 1
  %2067 = vperm.xlu0 %2066, %v1936
  %v2068 = vpop.permute.xlu0 %2067
  %2070 = vset.pattern.permute.xlu0 1
  %2071 = vperm.xlu0 %2070, %v1941
  %v2072 = vpop.permute.xlu0 %2071
  %v2074 = vlaneseq
  %v2075 = vshrl.u32 %v2074, 7
  %v2076 = vsub.s32 0, %v2075
  %v2077 = vrot.slane %v2050, %v2076
  %v2078 = vadd.f32 %v2068, %v2077
  %v2079 = vadd.f32 %v2072, %v2077
  %vm2080 = vcmp.gt.f32.partialorder %v2078, 0.0
  %vm2081 = vcmp.gt.f32.partialorder %v2079, 0.0
  %v2082 = vmul.f32 %v2078, 0.2
  %v2083 = vmul.f32 %v2079, 0.2
  %v2084 = vsel %vm2080, %v2078, %v2082
  %v2085 = vsel %vm2081, %v2079, %v2083
  %v2086 = vsel %vm287, %v2084, -9e+15
  %v2087 = vsel %vm288, %v2085, -9e+15
  %v2088 = vsel %vm48, %v2086, -inf
  %2089 = vmax.xlane.f32.xlu0 %v2088
  %v2090 = vpop.xlane.xlu0 %2089
  %v2091 = vsel %vm48, %v2087, -inf
  %2092 = vmax.xlane.f32.xlu0 %v2091
  %v2093 = vpop.xlane.xlu0 %2092
  %v2094 = vsub.f32 %v2086, %v2090
  %v2095 = vsub.f32 %v2087, %v2093
  %v2096 = vmul.f32 %v2094, 1.442695
  %v2097 = vpow.pop %v2096
  %v2098 = vmul.f32 %v2095, 1.442695
  %v2099 = vpow.pop %v2098
  %v2100 = vsel %vm48, %v2097, 0.0
  %2101 = vadd.xlane.f32.xlu0 %v2100
  %v2102 = vpop.xlane.xlu0 %2101
  %v2103 = vsel %vm48, %v2099, 0.0
  %2104 = vadd.xlane.f32.xlu0 %v2103
  %v2105 = vpop.xlane.xlu0 %2104
  %v2106 = vrcp.pop %v2102
  %v2107 = vrcp.pop %v2105
  %v2108 = vmul.f32 %v2097, %v2106
  %v2109 = vmul.f32 %v2099, %v2107
  %2110 = vrot.lane.b32.xlu0 %v1843, 124
  %v2111 = vpop.permute.xlu0 %2110
  %2112 = vrot.lane.b32.xlu0 %v1848, 124
  %v2113 = vpop.permute.xlu0 %2112
  %v2117 = vsel %vm48, %v2108, 0
  %v2120 = vsel %vm48, %v2109, 0
  %2122 = vmatprep.subr.mxu0 0.0
  %2123 = vmatpush1.msra.mxu0 %v2111
  %2124 = vmatprep.subr.mxu0 0.0
  %2125 = vmatpush1.msra.mxu0 %v2113
  %2126 = vmatprep.subr.mxu0 0.0
  %2127 = vmatpush1.msra.mxu0 0.0
  %2128 = vmatprep.subr.mxu0 0.0
  %2129 = vmatpush1.msra.mxu0 0.0
  %2130 = vmatprep.subr.mxu0 0.0
  %2131 = vmatpush1.msra.mxu0 0.0
  %2132 = vmatprep.subr.mxu0 0.0
  %2133 = vmatpush1.msra.mxu0 0.0
  %2134 = vmatprep.subr.mxu0 0.0
  %2135 = vmatpush1.msra.mxu0 0.0
  %2136 = vmatprep.subr.mxu0 0.0
  %2137 = vmatpush1.msra.mxu0 0.0
  %2138 = vmatprep.subr.mxu0 0.0
  %2139 = vmatpush1.msra.mxu0 0.0
  %2140 = vmatprep.subr.mxu0 0.0
  %2141 = vmatpush1.msra.mxu0 0.0
  %2142 = vmatprep.subr.mxu0 0.0
  %2143 = vmatpush1.msra.mxu0 0.0
  %2144 = vmatprep.subr.mxu0 0.0
  %2145 = vmatpush1.msra.mxu0 0.0
  %2146 = vmatprep.subr.mxu0 0.0
  %2147 = vmatpush1.msra.mxu0 0.0
  %2148 = vmatprep.subr.mxu0 0.0
  %2149 = vmatpush1.msra.mxu0 0.0
  %2150 = vmatprep.subr.mxu0 0.0
  %2151 = vmatpush1.msra.mxu0 0.0
  %2152 = vmatprep.subr.mxu0 0.0
  %2153 = vmatpush1.msra.mxu0 0.0
  %2154 = vmatprep.subr.mxu0 0.0
  %2155 = vmatpush1.msra.mxu0 0.0
  %2156 = vmatprep.subr.mxu0 0.0
  %2157 = vmatpush1.msra.mxu0 0.0
  %2158 = vmatprep.subr.mxu0 0.0
  %2159 = vmatpush1.msra.mxu0 0.0
  %2160 = vmatprep.subr.mxu0 0.0
  %2161 = vmatpush1.msra.mxu0 0.0
  %2162 = vmatprep.subr.mxu0 0.0
  %2163 = vmatpush1.msra.mxu0 0.0
  %2164 = vmatprep.subr.mxu0 0.0
  %2165 = vmatpush1.msra.mxu0 0.0
  %2166 = vmatprep.subr.mxu0 0.0
  %2167 = vmatpush1.msra.mxu0 0.0
  %2168 = vmatprep.subr.mxu0 0.0
  %2169 = vmatpush1.msra.mxu0 0.0
  %2170 = vmatprep.subr.mxu0 0.0
  %2171 = vmatpush1.msra.mxu0 0.0
  %2172 = vmatprep.subr.mxu0 0.0
  %2173 = vmatpush1.msra.mxu0 0.0
  %2174 = vmatprep.subr.mxu0 0.0
  %2175 = vmatpush1.msra.mxu0 0.0
  %2176 = vmatprep.subr.mxu0 0.0
  %2177 = vmatpush1.msra.mxu0 0.0
  %2178 = vmatprep.subr.mxu0 0.0
  %2179 = vmatpush1.msra.mxu0 0.0
  %2180 = vmatprep.subr.mxu0 0.0
  %2181 = vmatpush1.msra.mxu0 0.0
  %2182 = vmatprep.subr.mxu0 0.0
  %2183 = vmatpush1.msra.mxu0 0.0
  %2184 = vmatprep.subr.mxu0 0.0
  %2185 = vmatpush1.msra.mxu0 0.0
  %2186 = vmatprep.mubr.f32.mxu0 0.0
  %2187 = vmatmul.mubr.f32.gmra.mrb[0].mxu0 %v2117
  %v2188 = vpop.f32.mrb[0].mxu0
  %v2189 = vadd.f32 0.0, %v2188
  %v2190 = vpop.f32.mrb[0].mxu0
  %2191 = vmatprep.mubr.f32.mxu0 0.0
  %2192 = vmatmul.mubr.f32.gmra.mrb[0].mxu0 %v2120
  %v2193 = vpop.f32.mrb[0].mxu0
  %v2194 = vadd.f32 0.0, %v2193
  %v2195 = vpop.f32.mrb[0].mxu0
  %2196 = vdwg.mxu0
  %2197 = vrot.lane.b32.xlu0 %v1936, 118
  %v2198 = vpop.permute.xlu0 %2197
  %2199 = vrot.lane.b32.xlu0 %v1941, 118
  %v2200 = vpop.permute.xlu0 %2199
  %2203 = vxpose.xlu0.b32.start [1/16] %v2198, 128
  %2204 = vxpose.xlu0.b32.cont [2/16] %v2200, 128
  %2205 = vxpose.xlu0.b32.cont [3/16] 0.0, 128
  %2206 = vxpose.xlu0.b32.cont [4/16] 0.0, 128
  %2207 = vxpose.xlu0.b32.cont [5/16] 0.0, 128
  %2208 = vxpose.xlu0.b32.cont [6/16] 0.0, 128
  %2209 = vxpose.xlu0.b32.cont [7/16] 0.0, 128
  %2210 = vxpose.xlu0.b32.cont [8/16] 0.0, 128
  %2211 = vxpose.xlu0.b32.cont [9/16] 0.0, 128
  %2212 = vxpose.xlu0.b32.cont [10/16] 0.0, 128
  %2213 = vxpose.xlu0.b32.cont [11/16] 0.0, 128
  %2214 = vxpose.xlu0.b32.cont [12/16] 0.0, 128
  %2215 = vxpose.xlu0.b32.cont [13/16] 0.0, 128
  %2216 = vxpose.xlu0.b32.cont [14/16] 0.0, 128
  %2217 = vxpose.xlu0.b32.cont [15/16] 0.0, 128
  %2218 = vxpose.xlu0.b32.end [16/16] 0.0, 128
  %v2219 = vpop.trf.xlu0
  %v2220 = vpop.trf.xlu0
  %v2221 = vpop.trf.xlu0
  %v2222 = vpop.trf.xlu0
  %v2223 = vpop.trf.xlu0
  %v2224 = vpop.trf.xlu0
  %v2225 = vpop.trf.xlu0
  %v2226 = vpop.trf.xlu0
  %v2227 = vpop.trf.xlu0
  %v2228 = vpop.trf.xlu0
  %v2229 = vpop.trf.xlu0
  %v2230 = vpop.trf.xlu0
  %v2231 = vpop.trf.xlu0
  %v2232 = vpop.trf.xlu0
  %v2233 = vpop.trf.xlu0
  %v2234 = vpop.trf.xlu0
  %2235 = vset.pattern.permute.xlu0 2
  %2236 = vperm.xlu0 %2235, %v1936
  %v2237 = vpop.permute.xlu0 %2236
  %2239 = vset.pattern.permute.xlu0 2
  %2240 = vperm.xlu0 %2239, %v1941
  %v2241 = vpop.permute.xlu0 %2240
  %v2243 = vlaneseq
  %v2244 = vshrl.u32 %v2243, 7
  %v2245 = vsub.s32 0, %v2244
  %v2246 = vrot.slane %v2219, %v2245
  %v2247 = vadd.f32 %v2237, %v2246
  %v2248 = vadd.f32 %v2241, %v2246
  %vm2249 = vcmp.gt.f32.partialorder %v2247, 0.0
  %vm2250 = vcmp.gt.f32.partialorder %v2248, 0.0
  %v2251 = vmul.f32 %v2247, 0.2
  %v2252 = vmul.f32 %v2248, 0.2
  %v2253 = vsel %vm2249, %v2247, %v2251
  %v2254 = vsel %vm2250, %v2248, %v2252
  %v2255 = vsel %vm287, %v2253, -9e+15
  %v2256 = vsel %vm288, %v2254, -9e+15
  %v2257 = vsel %vm48, %v2255, -inf
  %2258 = vmax.xlane.f32.xlu0 %v2257
  %v2259 = vpop.xlane.xlu0 %2258
  %v2260 = vsel %vm48, %v2256, -inf
  %2261 = vmax.xlane.f32.xlu0 %v2260
  %v2262 = vpop.xlane.xlu0 %2261
  %v2263 = vsub.f32 %v2255, %v2259
  %v2264 = vsub.f32 %v2256, %v2262
  %v2265 = vmul.f32 %v2263, 1.442695
  %v2266 = vpow.pop %v2265
  %v2267 = vmul.f32 %v2264, 1.442695
  %v2268 = vpow.pop %v2267
  %v2269 = vsel %vm48, %v2266, 0.0
  %2270 = vadd.xlane.f32.xlu0 %v2269
  %v2271 = vpop.xlane.xlu0 %2270
  %v2272 = vsel %vm48, %v2268, 0.0
  %2273 = vadd.xlane.f32.xlu0 %v2272
  %v2274 = vpop.xlane.xlu0 %2273
  %v2275 = vrcp.pop %v2271
  %v2276 = vrcp.pop %v2274
  %v2277 = vmul.f32 %v2266, %v2275
  %v2278 = vmul.f32 %v2268, %v2276
  %2279 = vrot.lane.b32.xlu0 %v1843, 120
  %v2280 = vpop.permute.xlu0 %2279
  %2281 = vrot.lane.b32.xlu0 %v1848, 120
  %v2282 = vpop.permute.xlu0 %2281
  %v2286 = vsel %vm48, %v2277, 0
  %v2289 = vsel %vm48, %v2278, 0
  %2291 = vmatprep.subr.mxu0 0.0
  %2292 = vmatpush1.msra.mxu0 %v2280
  %2293 = vmatprep.subr.mxu0 0.0
  %2294 = vmatpush1.msra.mxu0 %v2282
  %2295 = vmatprep.subr.mxu0 0.0
  %2296 = vmatpush1.msra.mxu0 0.0
  %2297 = vmatprep.subr.mxu0 0.0
  %2298 = vmatpush1.msra.mxu0 0.0
  %2299 = vmatprep.subr.mxu0 0.0
  %2300 = vmatpush1.msra.mxu0 0.0
  %2301 = vmatprep.subr.mxu0 0.0
  %2302 = vmatpush1.msra.mxu0 0.0
  %2303 = vmatprep.subr.mxu0 0.0
  %2304 = vmatpush1.msra.mxu0 0.0
  %2305 = vmatprep.subr.mxu0 0.0
  %2306 = vmatpush1.msra.mxu0 0.0
  %2307 = vmatprep.subr.mxu0 0.0
  %2308 = vmatpush1.msra.mxu0 0.0
  %2309 = vmatprep.subr.mxu0 0.0
  %2310 = vmatpush1.msra.mxu0 0.0
  %2311 = vmatprep.subr.mxu0 0.0
  %2312 = vmatpush1.msra.mxu0 0.0
  %2313 = vmatprep.subr.mxu0 0.0
  %2314 = vmatpush1.msra.mxu0 0.0
  %2315 = vmatprep.subr.mxu0 0.0
  %2316 = vmatpush1.msra.mxu0 0.0
  %2317 = vmatprep.subr.mxu0 0.0
  %2318 = vmatpush1.msra.mxu0 0.0
  %2319 = vmatprep.subr.mxu0 0.0
  %2320 = vmatpush1.msra.mxu0 0.0
  %2321 = vmatprep.subr.mxu0 0.0
  %2322 = vmatpush1.msra.mxu0 0.0
  %2323 = vmatprep.subr.mxu0 0.0
  %2324 = vmatpush1.msra.mxu0 0.0
  %2325 = vmatprep.subr.mxu0 0.0
  %2326 = vmatpush1.msra.mxu0 0.0
  %2327 = vmatprep.subr.mxu0 0.0
  %2328 = vmatpush1.msra.mxu0 0.0
  %2329 = vmatprep.subr.mxu0 0.0
  %2330 = vmatpush1.msra.mxu0 0.0
  %2331 = vmatprep.subr.mxu0 0.0
  %2332 = vmatpush1.msra.mxu0 0.0
  %2333 = vmatprep.subr.mxu0 0.0
  %2334 = vmatpush1.msra.mxu0 0.0
  %2335 = vmatprep.subr.mxu0 0.0
  %2336 = vmatpush1.msra.mxu0 0.0
  %2337 = vmatprep.subr.mxu0 0.0
  %2338 = vmatpush1.msra.mxu0 0.0
  %2339 = vmatprep.subr.mxu0 0.0
  %2340 = vmatpush1.msra.mxu0 0.0
  %2341 = vmatprep.subr.mxu0 0.0
  %2342 = vmatpush1.msra.mxu0 0.0
  %2343 = vmatprep.subr.mxu0 0.0
  %2344 = vmatpush1.msra.mxu0 0.0
  %2345 = vmatprep.subr.mxu0 0.0
  %2346 = vmatpush1.msra.mxu0 0.0
  %2347 = vmatprep.subr.mxu0 0.0
  %2348 = vmatpush1.msra.mxu0 0.0
  %2349 = vmatprep.subr.mxu0 0.0
  %2350 = vmatpush1.msra.mxu0 0.0
  %2351 = vmatprep.subr.mxu0 0.0
  %2352 = vmatpush1.msra.mxu0 0.0
  %2353 = vmatprep.subr.mxu0 0.0
  %2354 = vmatpush1.msra.mxu0 0.0
  %2355 = vmatprep.mubr.f32.mxu0 0.0
  %2356 = vmatmul.mubr.f32.gmra.mrb[0].mxu0 %v2286
  %v2357 = vpop.f32.mrb[0].mxu0
  %v2358 = vadd.f32 0.0, %v2357
  %v2359 = vpop.f32.mrb[0].mxu0
  %2360 = vmatprep.mubr.f32.mxu0 0.0
  %2361 = vmatmul.mubr.f32.gmra.mrb[0].mxu0 %v2289
  %v2362 = vpop.f32.mrb[0].mxu0
  %v2363 = vadd.f32 0.0, %v2362
  %v2364 = vpop.f32.mrb[0].mxu0
  %2365 = vdwg.mxu0
  %2366 = vrot.lane.b32.xlu0 %v1936, 117
  %v2367 = vpop.permute.xlu0 %2366
  %2368 = vrot.lane.b32.xlu0 %v1941, 117
  %v2369 = vpop.permute.xlu0 %2368
  %2372 = vxpose.xlu0.b32.start [1/16] %v2367, 128
  %2373 = vxpose.xlu0.b32.cont [2/16] %v2369, 128
  %2374 = vxpose.xlu0.b32.cont [3/16] 0.0, 128
  %2375 = vxpose.xlu0.b32.cont [4/16] 0.0, 128
  %2376 = vxpose.xlu0.b32.cont [5/16] 0.0, 128
  %2377 = vxpose.xlu0.b32.cont [6/16] 0.0, 128
  %2378 = vxpose.xlu0.b32.cont [7/16] 0.0, 128
  %2379 = vxpose.xlu0.b32.cont [8/16] 0.0, 128
  %2380 = vxpose.xlu0.b32.cont [9/16] 0.0, 128
  %2381 = vxpose.xlu0.b32.cont [10/16] 0.0, 128
  %2382 = vxpose.xlu0.b32.cont [11/16] 0.0, 128
  %2383 = vxpose.xlu0.b32.cont [12/16] 0.0, 128
  %2384 = vxpose.xlu0.b32.cont [13/16] 0.0, 128
  %2385 = vxpose.xlu0.b32.cont [14/16] 0.0, 128
  %2386 = vxpose.xlu0.b32.cont [15/16] 0.0, 128
  %2387 = vxpose.xlu0.b32.end [16/16] 0.0, 128
  %v2388 = vpop.trf.xlu0
  %v2389 = vpop.trf.xlu0
  %v2390 = vpop.trf.xlu0
  %v2391 = vpop.trf.xlu0
  %v2392 = vpop.trf.xlu0
  %v2393 = vpop.trf.xlu0
  %v2394 = vpop.trf.xlu0
  %v2395 = vpop.trf.xlu0
  %v2396 = vpop.trf.xlu0
  %v2397 = vpop.trf.xlu0
  %v2398 = vpop.trf.xlu0
  %v2399 = vpop.trf.xlu0
  %v2400 = vpop.trf.xlu0
  %v2401 = vpop.trf.xlu0
  %v2402 = vpop.trf.xlu0
  %v2403 = vpop.trf.xlu0
  %2404 = vset.pattern.permute.xlu0 3
  %2405 = vperm.xlu0 %2404, %v1936
  %v2406 = vpop.permute.xlu0 %2405
  %2408 = vset.pattern.permute.xlu0 3
  %2409 = vperm.xlu0 %2408, %v1941
  %v2410 = vpop.permute.xlu0 %2409
  %v2412 = vlaneseq
  %v2413 = vshrl.u32 %v2412, 7
  %v2414 = vsub.s32 0, %v2413
  %v2415 = vrot.slane %v2388, %v2414
  %v2416 = vadd.f32 %v2406, %v2415
  %v2417 = vadd.f32 %v2410, %v2415
  %vm2418 = vcmp.gt.f32.partialorder %v2416, 0.0
  %vm2419 = vcmp.gt.f32.partialorder %v2417, 0.0
  %v2420 = vmul.f32 %v2416, 0.2
  %v2421 = vmul.f32 %v2417, 0.2
  %v2422 = vsel %vm2418, %v2416, %v2420
  %v2423 = vsel %vm2419, %v2417, %v2421
  %v2424 = vsel %vm287, %v2422, -9e+15
  %v2425 = vsel %vm288, %v2423, -9e+15
  %v2426 = vsel %vm48, %v2424, -inf
  %2427 = vmax.xlane.f32.xlu0 %v2426
  %v2428 = vpop.xlane.xlu0 %2427
  %v2429 = vsel %vm48, %v2425, -inf
  %2430 = vmax.xlane.f32.xlu0 %v2429
  %v2431 = vpop.xlane.xlu0 %2430
  %v2432 = vsub.f32 %v2424, %v2428
  %v2433 = vsub.f32 %v2425, %v2431
  %v2434 = vmul.f32 %v2432, 1.442695
  %v2435 = vpow.pop %v2434
  %v2436 = vmul.f32 %v2433, 1.442695
  %v2437 = vpow.pop %v2436
  %v2438 = vsel %vm48, %v2435, 0.0
  %2439 = vadd.xlane.f32.xlu0 %v2438
  %v2440 = vpop.xlane.xlu0 %2439
  %v2441 = vsel %vm48, %v2437, 0.0
  %2442 = vadd.xlane.f32.xlu0 %v2441
  %v2443 = vpop.xlane.xlu0 %2442
  %v2444 = vrcp.pop %v2440
  %v2445 = vrcp.pop %v2443
  %v2446 = vmul.f32 %v2435, %v2444
  %v2447 = vmul.f32 %v2437, %v2445
  %2448 = vrot.lane.b32.xlu0 %v1843, 116
  %v2449 = vpop.permute.xlu0 %2448
  %2450 = vrot.lane.b32.xlu0 %v1848, 116
  %v2451 = vpop.permute.xlu0 %2450
  %v2455 = vsel %vm48, %v2446, 0
  %v2458 = vsel %vm48, %v2447, 0
  %2460 = vmatprep.subr.mxu0 0.0
  %2461 = vmatpush1.msra.mxu0 %v2449
  %2462 = vmatprep.subr.mxu0 0.0
  %2463 = vmatpush1.msra.mxu0 %v2451
  %2464 = vmatprep.subr.mxu0 0.0
  %2465 = vmatpush1.msra.mxu0 0.0
  %2466 = vmatprep.subr.mxu0 0.0
  %2467 = vmatpush1.msra.mxu0 0.0
  %2468 = vmatprep.subr.mxu0 0.0
  %2469 = vmatpush1.msra.mxu0 0.0
  %2470 = vmatprep.subr.mxu0 0.0
  %2471 = vmatpush1.msra.mxu0 0.0
  %2472 = vmatprep.subr.mxu0 0.0
  %2473 = vmatpush1.msra.mxu0 0.0
  %2474 = vmatprep.subr.mxu0 0.0
  %2475 = vmatpush1.msra.mxu0 0.0
  %2476 = vmatprep.subr.mxu0 0.0
  %2477 = vmatpush1.msra.mxu0 0.0
  %2478 = vmatprep.subr.mxu0 0.0
  %2479 = vmatpush1.msra.mxu0 0.0
  %2480 = vmatprep.subr.mxu0 0.0
  %2481 = vmatpush1.msra.mxu0 0.0
  %2482 = vmatprep.subr.mxu0 0.0
  %2483 = vmatpush1.msra.mxu0 0.0
  %2484 = vmatprep.subr.mxu0 0.0
  %2485 = vmatpush1.msra.mxu0 0.0
  %2486 = vmatprep.subr.mxu0 0.0
  %2487 = vmatpush1.msra.mxu0 0.0
  %2488 = vmatprep.subr.mxu0 0.0
  %2489 = vmatpush1.msra.mxu0 0.0
  %2490 = vmatprep.subr.mxu0 0.0
  %2491 = vmatpush1.msra.mxu0 0.0
  %2492 = vmatprep.subr.mxu0 0.0
  %2493 = vmatpush1.msra.mxu0 0.0
  %2494 = vmatprep.subr.mxu0 0.0
  %2495 = vmatpush1.msra.mxu0 0.0
  %2496 = vmatprep.subr.mxu0 0.0
  %2497 = vmatpush1.msra.mxu0 0.0
  %2498 = vmatprep.subr.mxu0 0.0
  %2499 = vmatpush1.msra.mxu0 0.0
  %2500 = vmatprep.subr.mxu0 0.0
  %2501 = vmatpush1.msra.mxu0 0.0
  %2502 = vmatprep.subr.mxu0 0.0
  %2503 = vmatpush1.msra.mxu0 0.0
  %2504 = vmatprep.subr.mxu0 0.0
  %2505 = vmatpush1.msra.mxu0 0.0
  %2506 = vmatprep.subr.mxu0 0.0
  %2507 = vmatpush1.msra.mxu0 0.0
  %2508 = vmatprep.subr.mxu0 0.0
  %2509 = vmatpush1.msra.mxu0 0.0
  %2510 = vmatprep.subr.mxu0 0.0
  %2511 = vmatpush1.msra.mxu0 0.0
  %2512 = vmatprep.subr.mxu0 0.0
  %2513 = vmatpush1.msra.mxu0 0.0
  %2514 = vmatprep.subr.mxu0 0.0
  %2515 = vmatpush1.msra.mxu0 0.0
  %2516 = vmatprep.subr.mxu0 0.0
  %2517 = vmatpush1.msra.mxu0 0.0
  %2518 = vmatprep.subr.mxu0 0.0
  %2519 = vmatpush1.msra.mxu0 0.0
  %2520 = vmatprep.subr.mxu0 0.0
  %2521 = vmatpush1.msra.mxu0 0.0
  %2522 = vmatprep.subr.mxu0 0.0
  %2523 = vmatpush1.msra.mxu0 0.0
  %2524 = vmatprep.mubr.f32.mxu0 0.0
  %2525 = vmatmul.mubr.f32.gmra.mrb[0].mxu0 %v2455
  %v2526 = vpop.f32.mrb[0].mxu0
  %v2527 = vadd.f32 0.0, %v2526
  %v2528 = vpop.f32.mrb[0].mxu0
  %2529 = vmatprep.mubr.f32.mxu0 0.0
  %2530 = vmatmul.mubr.f32.gmra.mrb[0].mxu0 %v2458
  %v2531 = vpop.f32.mrb[0].mxu0
  %v2532 = vadd.f32 0.0, %v2531
  %v2533 = vpop.f32.mrb[0].mxu0
  %2534 = vdwg.mxu0
  %2535 = vrot.lane.b32.xlu0 %v1936, 116
  %v2536 = vpop.permute.xlu0 %2535
  %2537 = vrot.lane.b32.xlu0 %v1941, 116
  %v2538 = vpop.permute.xlu0 %2537
  %2541 = vxpose.xlu0.b32.start [1/16] %v2536, 128
  %2542 = vxpose.xlu0.b32.cont [2/16] %v2538, 128
  %2543 = vxpose.xlu0.b32.cont [3/16] 0.0, 128
  %2544 = vxpose.xlu0.b32.cont [4/16] 0.0, 128
  %2545 = vxpose.xlu0.b32.cont [5/16] 0.0, 128
  %2546 = vxpose.xlu0.b32.cont [6/16] 0.0, 128
  %2547 = vxpose.xlu0.b32.cont [7/16] 0.0, 128
  %2548 = vxpose.xlu0.b32.cont [8/16] 0.0, 128
  %2549 = vxpose.xlu0.b32.cont [9/16] 0.0, 128
  %2550 = vxpose.xlu0.b32.cont [10/16] 0.0, 128
  %2551 = vxpose.xlu0.b32.cont [11/16] 0.0, 128
  %2552 = vxpose.xlu0.b32.cont [12/16] 0.0, 128
  %2553 = vxpose.xlu0.b32.cont [13/16] 0.0, 128
  %2554 = vxpose.xlu0.b32.cont [14/16] 0.0, 128
  %2555 = vxpose.xlu0.b32.cont [15/16] 0.0, 128
  %2556 = vxpose.xlu0.b32.end [16/16] 0.0, 128
  %v2557 = vpop.trf.xlu0
  %v2558 = vpop.trf.xlu0
  %v2559 = vpop.trf.xlu0
  %v2560 = vpop.trf.xlu0
  %v2561 = vpop.trf.xlu0
  %v2562 = vpop.trf.xlu0
  %v2563 = vpop.trf.xlu0
  %v2564 = vpop.trf.xlu0
  %v2565 = vpop.trf.xlu0
  %v2566 = vpop.trf.xlu0
  %v2567 = vpop.trf.xlu0
  %v2568 = vpop.trf.xlu0
  %v2569 = vpop.trf.xlu0
  %v2570 = vpop.trf.xlu0
  %v2571 = vpop.trf.xlu0
  %v2572 = vpop.trf.xlu0
  %2573 = vset.pattern.permute.xlu0 4
  %2574 = vperm.xlu0 %2573, %v1936
  %v2575 = vpop.permute.xlu0 %2574
  %2577 = vset.pattern.permute.xlu0 4
  %2578 = vperm.xlu0 %2577, %v1941
  %v2579 = vpop.permute.xlu0 %2578
  %v2581 = vlaneseq
  %v2582 = vshrl.u32 %v2581, 7
  %v2583 = vsub.s32 0, %v2582
  %v2584 = vrot.slane %v2557, %v2583
  %v2585 = vadd.f32 %v2575, %v2584
  %v2586 = vadd.f32 %v2579, %v2584
  %vm2587 = vcmp.gt.f32.partialorder %v2585, 0.0
  %vm2588 = vcmp.gt.f32.partialorder %v2586, 0.0
  %v2589 = vmul.f32 %v2585, 0.2
  %v2590 = vmul.f32 %v2586, 0.2
  %v2591 = vsel %vm2587, %v2585, %v2589
  %v2592 = vsel %vm2588, %v2586, %v2590
  %v2593 = vsel %vm287, %v2591, -9e+15
  %v2594 = vsel %vm288, %v2592, -9e+15
  %v2595 = vsel %vm48, %v2593, -inf
  %2596 = vmax.xlane.f32.xlu0 %v2595
  %v2597 = vpop.xlane.xlu0 %2596
  %v2598 = vsel %vm48, %v2594, -inf
  %2599 = vmax.xlane.f32.xlu0 %v2598
  %v2600 = vpop.xlane.xlu0 %2599
  %v2601 = vsub.f32 %v2593, %v2597
  %v2602 = vsub.f32 %v2594, %v2600
  %v2603 = vmul.f32 %v2601, 1.442695
  %v2604 = vpow.pop %v2603
  %v2605 = vmul.f32 %v2602, 1.442695
  %v2606 = vpow.pop %v2605
  %v2607 = vsel %vm48, %v2604, 0.0
  %2608 = vadd.xlane.f32.xlu0 %v2607
  %v2609 = vpop.xlane.xlu0 %2608
  %v2610 = vsel %vm48, %v2606, 0.0
  %2611 = vadd.xlane.f32.xlu0 %v2610
  %v2612 = vpop.xlane.xlu0 %2611
  %v2613 = vrcp.pop %v2609
  %v2614 = vrcp.pop %v2612
  %v2615 = vmul.f32 %v2604, %v2613
  %v2616 = vmul.f32 %v2606, %v2614
  %2617 = vrot.lane.b32.xlu0 %v1843, 112
  %v2618 = vpop.permute.xlu0 %2617
  %2619 = vrot.lane.b32.xlu0 %v1848, 112
  %v2620 = vpop.permute.xlu0 %2619
  %v2624 = vsel %vm48, %v2615, 0
  %v2627 = vsel %vm48, %v2616, 0
  %2629 = vmatprep.subr.mxu0 0.0
  %2630 = vmatpush1.msra.mxu0 %v2618
  %2631 = vmatprep.subr.mxu0 0.0
  %2632 = vmatpush1.msra.mxu0 %v2620
  %2633 = vmatprep.subr.mxu0 0.0
  %2634 = vmatpush1.msra.mxu0 0.0
  %2635 = vmatprep.subr.mxu0 0.0
  %2636 = vmatpush1.msra.mxu0 0.0
  %2637 = vmatprep.subr.mxu0 0.0
  %2638 = vmatpush1.msra.mxu0 0.0
  %2639 = vmatprep.subr.mxu0 0.0
  %2640 = vmatpush1.msra.mxu0 0.0
  %2641 = vmatprep.subr.mxu0 0.0
  %2642 = vmatpush1.msra.mxu0 0.0
  %2643 = vmatprep.subr.mxu0 0.0
  %2644 = vmatpush1.msra.mxu0 0.0
  %2645 = vmatprep.subr.mxu0 0.0
  %2646 = vmatpush1.msra.mxu0 0.0
  %2647 = vmatprep.subr.mxu0 0.0
  %2648 = vmatpush1.msra.mxu0 0.0
  %2649 = vmatprep.subr.mxu0 0.0
  %2650 = vmatpush1.msra.mxu0 0.0
  %2651 = vmatprep.subr.mxu0 0.0
  %2652 = vmatpush1.msra.mxu0 0.0
  %2653 = vmatprep.subr.mxu0 0.0
  %2654 = vmatpush1.msra.mxu0 0.0
  %2655 = vmatprep.subr.mxu0 0.0
  %2656 = vmatpush1.msra.mxu0 0.0
  %2657 = vmatprep.subr.mxu0 0.0
  %2658 = vmatpush1.msra.mxu0 0.0
  %2659 = vmatprep.subr.mxu0 0.0
  %2660 = vmatpush1.msra.mxu0 0.0
  %2661 = vmatprep.subr.mxu0 0.0
  %2662 = vmatpush1.msra.mxu0 0.0
  %2663 = vmatprep.subr.mxu0 0.0
  %2664 = vmatpush1.msra.mxu0 0.0
  %2665 = vmatprep.subr.mxu0 0.0
  %2666 = vmatpush1.msra.mxu0 0.0
  %2667 = vmatprep.subr.mxu0 0.0
  %2668 = vmatpush1.msra.mxu0 0.0
  %2669 = vmatprep.subr.mxu0 0.0
  %2670 = vmatpush1.msra.mxu0 0.0
  %2671 = vmatprep.subr.mxu0 0.0
  %2672 = vmatpush1.msra.mxu0 0.0
  %2673 = vmatprep.subr.mxu0 0.0
  %2674 = vmatpush1.msra.mxu0 0.0
  %2675 = vmatprep.subr.mxu0 0.0
  %2676 = vmatpush1.msra.mxu0 0.0
  %2677 = vmatprep.subr.mxu0 0.0
  %2678 = vmatpush1.msra.mxu0 0.0
  %2679 = vmatprep.subr.mxu0 0.0
  %2680 = vmatpush1.msra.mxu0 0.0
  %2681 = vmatprep.subr.mxu0 0.0
  %2682 = vmatpush1.msra.mxu0 0.0
  %2683 = vmatprep.subr.mxu0 0.0
  %2684 = vmatpush1.msra.mxu0 0.0
  %2685 = vmatprep.subr.mxu0 0.0
  %2686 = vmatpush1.msra.mxu0 0.0
  %2687 = vmatprep.subr.mxu0 0.0
  %2688 = vmatpush1.msra.mxu0 0.0
  %2689 = vmatprep.subr.mxu0 0.0
  %2690 = vmatpush1.msra.mxu0 0.0
  %2691 = vmatprep.subr.mxu0 0.0
  %2692 = vmatpush1.msra.mxu0 0.0
  %2693 = vmatprep.mubr.f32.mxu0 0.0
  %2694 = vmatmul.mubr.f32.gmra.mrb[0].mxu0 %v2624
  %v2695 = vpop.f32.mrb[0].mxu0
  %v2696 = vadd.f32 0.0, %v2695
  %v2697 = vpop.f32.mrb[0].mxu0
  %2698 = vmatprep.mubr.f32.mxu0 0.0
  %2699 = vmatmul.mubr.f32.gmra.mrb[0].mxu0 %v2627
  %v2700 = vpop.f32.mrb[0].mxu0
  %v2701 = vadd.f32 0.0, %v2700
  %v2702 = vpop.f32.mrb[0].mxu0
  %2703 = vdwg.mxu0
  %2704 = vrot.lane.b32.xlu0 %v1936, 115
  %v2705 = vpop.permute.xlu0 %2704
  %2706 = vrot.lane.b32.xlu0 %v1941, 115
  %v2707 = vpop.permute.xlu0 %2706
  %2710 = vxpose.xlu0.b32.start [1/16] %v2705, 128
  %2711 = vxpose.xlu0.b32.cont [2/16] %v2707, 128
  %2712 = vxpose.xlu0.b32.cont [3/16] 0.0, 128
  %2713 = vxpose.xlu0.b32.cont [4/16] 0.0, 128
  %2714 = vxpose.xlu0.b32.cont [5/16] 0.0, 128
  %2715 = vxpose.xlu0.b32.cont [6/16] 0.0, 128
  %2716 = vxpose.xlu0.b32.cont [7/16] 0.0, 128
  %2717 = vxpose.xlu0.b32.cont [8/16] 0.0, 128
  %2718 = vxpose.xlu0.b32.cont [9/16] 0.0, 128
  %2719 = vxpose.xlu0.b32.cont [10/16] 0.0, 128
  %2720 = vxpose.xlu0.b32.cont [11/16] 0.0, 128
  %2721 = vxpose.xlu0.b32.cont [12/16] 0.0, 128
  %2722 = vxpose.xlu0.b32.cont [13/16] 0.0, 128
  %2723 = vxpose.xlu0.b32.cont [14/16] 0.0, 128
  %2724 = vxpose.xlu0.b32.cont [15/16] 0.0, 128
  %2725 = vxpose.xlu0.b32.end [16/16] 0.0, 128
  %v2726 = vpop.trf.xlu0
  %v2727 = vpop.trf.xlu0
  %v2728 = vpop.trf.xlu0
  %v2729 = vpop.trf.xlu0
  %v2730 = vpop.trf.xlu0
  %v2731 = vpop.trf.xlu0
  %v2732 = vpop.trf.xlu0
  %v2733 = vpop.trf.xlu0
  %v2734 = vpop.trf.xlu0
  %v2735 = vpop.trf.xlu0
  %v2736 = vpop.trf.xlu0
  %v2737 = vpop.trf.xlu0
  %v2738 = vpop.trf.xlu0
  %v2739 = vpop.trf.xlu0
  %v2740 = vpop.trf.xlu0
  %v2741 = vpop.trf.xlu0
  %2742 = vset.pattern.permute.xlu0 5
  %2743 = vperm.xlu0 %2742, %v1936
  %v2744 = vpop.permute.xlu0 %2743
  %2746 = vset.pattern.permute.xlu0 5
  %2747 = vperm.xlu0 %2746, %v1941
  %v2748 = vpop.permute.xlu0 %2747
  %v2750 = vlaneseq
  %v2751 = vshrl.u32 %v2750, 7
  %v2752 = vsub.s32 0, %v2751
  %v2753 = vrot.slane %v2726, %v2752
  %v2754 = vadd.f32 %v2744, %v2753
  %v2755 = vadd.f32 %v2748, %v2753
  %vm2756 = vcmp.gt.f32.partialorder %v2754, 0.0
  %vm2757 = vcmp.gt.f32.partialorder %v2755, 0.0
  %v2758 = vmul.f32 %v2754, 0.2
  %v2759 = vmul.f32 %v2755, 0.2
  %v2760 = vsel %vm2756, %v2754, %v2758
  %v2761 = vsel %vm2757, %v2755, %v2759
  %v2762 = vsel %vm287, %v2760, -9e+15
  %v2763 = vsel %vm288, %v2761, -9e+15
  %v2764 = vsel %vm48, %v2762, -inf
  %2765 = vmax.xlane.f32.xlu0 %v2764
  %v2766 = vpop.xlane.xlu0 %2765
  %v2767 = vsel %vm48, %v2763, -inf
  %2768 = vmax.xlane.f32.xlu0 %v2767
  %v2769 = vpop.xlane.xlu0 %2768
  %v2770 = vsub.f32 %v2762, %v2766
  %v2771 = vsub.f32 %v2763, %v2769
  %v2772 = vmul.f32 %v2770, 1.442695
  %v2773 = vpow.pop %v2772
  %v2774 = vmul.f32 %v2771, 1.442695
  %v2775 = vpow.pop %v2774
  %v2776 = vsel %vm48, %v2773, 0.0
  %2777 = vadd.xlane.f32.xlu0 %v2776
  %v2778 = vpop.xlane.xlu0 %2777
  %v2779 = vsel %vm48, %v2775, 0.0
  %2780 = vadd.xlane.f32.xlu0 %v2779
  %v2781 = vpop.xlane.xlu0 %2780
  %v2782 = vrcp.pop %v2778
  %v2783 = vrcp.pop %v2781
  %v2784 = vmul.f32 %v2773, %v2782
  %v2785 = vmul.f32 %v2775, %v2783
  %2786 = vrot.lane.b32.xlu0 %v1843, 108
  %v2787 = vpop.permute.xlu0 %2786
  %2788 = vrot.lane.b32.xlu0 %v1848, 108
  %v2789 = vpop.permute.xlu0 %2788
  %v2793 = vsel %vm48, %v2784, 0
  %v2796 = vsel %vm48, %v2785, 0
  %2798 = vmatprep.subr.mxu0 0.0
  %2799 = vmatpush1.msra.mxu0 %v2787
  %2800 = vmatprep.subr.mxu0 0.0
  %2801 = vmatpush1.msra.mxu0 %v2789
  %2802 = vmatprep.subr.mxu0 0.0
  %2803 = vmatpush1.msra.mxu0 0.0
  %2804 = vmatprep.subr.mxu0 0.0
  %2805 = vmatpush1.msra.mxu0 0.0
  %2806 = vmatprep.subr.mxu0 0.0
  %2807 = vmatpush1.msra.mxu0 0.0
  %2808 = vmatprep.subr.mxu0 0.0
  %2809 = vmatpush1.msra.mxu0 0.0
  %2810 = vmatprep.subr.mxu0 0.0
  %2811 = vmatpush1.msra.mxu0 0.0
  %2812 = vmatprep.subr.mxu0 0.0
  %2813 = vmatpush1.msra.mxu0 0.0
  %2814 = vmatprep.subr.mxu0 0.0
  %2815 = vmatpush1.msra.mxu0 0.0
  %2816 = vmatprep.subr.mxu0 0.0
  %2817 = vmatpush1.msra.mxu0 0.0
  %2818 = vmatprep.subr.mxu0 0.0
  %2819 = vmatpush1.msra.mxu0 0.0
  %2820 = vmatprep.subr.mxu0 0.0
  %2821 = vmatpush1.msra.mxu0 0.0
  %2822 = vmatprep.subr.mxu0 0.0
  %2823 = vmatpush1.msra.mxu0 0.0
  %2824 = vmatprep.subr.mxu0 0.0
  %2825 = vmatpush1.msra.mxu0 0.0
  %2826 = vmatprep.subr.mxu0 0.0
  %2827 = vmatpush1.msra.mxu0 0.0
  %2828 = vmatprep.subr.mxu0 0.0
  %2829 = vmatpush1.msra.mxu0 0.0
  %2830 = vmatprep.subr.mxu0 0.0
  %2831 = vmatpush1.msra.mxu0 0.0
  %2832 = vmatprep.subr.mxu0 0.0
  %2833 = vmatpush1.msra.mxu0 0.0
  %2834 = vmatprep.subr.mxu0 0.0
  %2835 = vmatpush1.msra.mxu0 0.0
  %2836 = vmatprep.subr.mxu0 0.0
  %2837 = vmatpush1.msra.mxu0 0.0
  %2838 = vmatprep.subr.mxu0 0.0
  %2839 = vmatpush1.msra.mxu0 0.0
  %2840 = vmatprep.subr.mxu0 0.0
  %2841 = vmatpush1.msra.mxu0 0.0
  %2842 = vmatprep.subr.mxu0 0.0
  %2843 = vmatpush1.msra.mxu0 0.0
  %2844 = vmatprep.subr.mxu0 0.0
  %2845 = vmatpush1.msra.mxu0 0.0
  %2846 = vmatprep.subr.mxu0 0.0
  %2847 = vmatpush1.msra.mxu0 0.0
  %2848 = vmatprep.subr.mxu0 0.0
  %2849 = vmatpush1.msra.mxu0 0.0
  %2850 = vmatprep.subr.mxu0 0.0
  %2851 = vmatpush1.msra.mxu0 0.0
  %2852 = vmatprep.subr.mxu0 0.0
  %2853 = vmatpush1.msra.mxu0 0.0
  %2854 = vmatprep.subr.mxu0 0.0
  %2855 = vmatpush1.msra.mxu0 0.0
  %2856 = vmatprep.subr.mxu0 0.0
  %2857 = vmatpush1.msra.mxu0 0.0
  %2858 = vmatprep.subr.mxu0 0.0
  %2859 = vmatpush1.msra.mxu0 0.0
  %2860 = vmatprep.subr.mxu0 0.0
  %2861 = vmatpush1.msra.mxu0 0.0
  %2862 = vmatprep.mubr.f32.mxu0 0.0
  %2863 = vmatmul.mubr.f32.gmra.mrb[0].mxu0 %v2793
  %v2864 = vpop.f32.mrb[0].mxu0
  %v2865 = vadd.f32 0.0, %v2864
  %v2866 = vpop.f32.mrb[0].mxu0
  %2867 = vmatprep.mubr.f32.mxu0 0.0
  %2868 = vmatmul.mubr.f32.gmra.mrb[0].mxu0 %v2796
  %v2869 = vpop.f32.mrb[0].mxu0
  %v2870 = vadd.f32 0.0, %v2869
  %v2871 = vpop.f32.mrb[0].mxu0
  %2872 = vdwg.mxu0
  %2873 = vrot.lane.b32.xlu0 %v1936, 114
  %v2874 = vpop.permute.xlu0 %2873
  %2875 = vrot.lane.b32.xlu0 %v1941, 114
  %v2876 = vpop.permute.xlu0 %2875
  %2879 = vxpose.xlu0.b32.start [1/16] %v2874, 128
  %2880 = vxpose.xlu0.b32.cont [2/16] %v2876, 128
  %2881 = vxpose.xlu0.b32.cont [3/16] 0.0, 128
  %2882 = vxpose.xlu0.b32.cont [4/16] 0.0, 128
  %2883 = vxpose.xlu0.b32.cont [5/16] 0.0, 128
  %2884 = vxpose.xlu0.b32.cont [6/16] 0.0, 128
  %2885 = vxpose.xlu0.b32.cont [7/16] 0.0, 128
  %2886 = vxpose.xlu0.b32.cont [8/16] 0.0, 128
  %2887 = vxpose.xlu0.b32.cont [9/16] 0.0, 128
  %2888 = vxpose.xlu0.b32.cont [10/16] 0.0, 128
  %2889 = vxpose.xlu0.b32.cont [11/16] 0.0, 128
  %2890 = vxpose.xlu0.b32.cont [12/16] 0.0, 128
  %2891 = vxpose.xlu0.b32.cont [13/16] 0.0, 128
  %2892 = vxpose.xlu0.b32.cont [14/16] 0.0, 128
  %2893 = vxpose.xlu0.b32.cont [15/16] 0.0, 128
  %2894 = vxpose.xlu0.b32.end [16/16] 0.0, 128
  %v2895 = vpop.trf.xlu0
  %v2896 = vpop.trf.xlu0
  %v2897 = vpop.trf.xlu0
  %v2898 = vpop.trf.xlu0
  %v2899 = vpop.trf.xlu0
  %v2900 = vpop.trf.xlu0
  %v2901 = vpop.trf.xlu0
  %v2902 = vpop.trf.xlu0
  %v2903 = vpop.trf.xlu0
  %v2904 = vpop.trf.xlu0
  %v2905 = vpop.trf.xlu0
  %v2906 = vpop.trf.xlu0
  %v2907 = vpop.trf.xlu0
  %v2908 = vpop.trf.xlu0
  %v2909 = vpop.trf.xlu0
  %v2910 = vpop.trf.xlu0
  %2911 = vset.pattern.permute.xlu0 6
  %2912 = vperm.xlu0 %2911, %v1936
  %v2913 = vpop.permute.xlu0 %2912
  %2915 = vset.pattern.permute.xlu0 6
  %2916 = vperm.xlu0 %2915, %v1941
  %v2917 = vpop.permute.xlu0 %2916
  %v2919 = vlaneseq
  %v2920 = vshrl.u32 %v2919, 7
  %v2921 = vsub.s32 0, %v2920
  %v2922 = vrot.slane %v2895, %v2921
  %v2923 = vadd.f32 %v2913, %v2922
  %v2924 = vadd.f32 %v2917, %v2922
  %vm2925 = vcmp.gt.f32.partialorder %v2923, 0.0
  %vm2926 = vcmp.gt.f32.partialorder %v2924, 0.0
  %v2927 = vmul.f32 %v2923, 0.2
  %v2928 = vmul.f32 %v2924, 0.2
  %v2929 = vsel %vm2925, %v2923, %v2927
  %v2930 = vsel %vm2926, %v2924, %v2928
  %v2931 = vsel %vm287, %v2929, -9e+15
  %v2932 = vsel %vm288, %v2930, -9e+15
  %v2933 = vsel %vm48, %v2931, -inf
  %2934 = vmax.xlane.f32.xlu0 %v2933
  %v2935 = vpop.xlane.xlu0 %2934
  %v2936 = vsel %vm48, %v2932, -inf
  %2937 = vmax.xlane.f32.xlu0 %v2936
  %v2938 = vpop.xlane.xlu0 %2937
  %v2939 = vsub.f32 %v2931, %v2935
  %v2940 = vsub.f32 %v2932, %v2938
  %v2941 = vmul.f32 %v2939, 1.442695
  %v2942 = vpow.pop %v2941
  %v2943 = vmul.f32 %v2940, 1.442695
  %v2944 = vpow.pop %v2943
  %v2945 = vsel %vm48, %v2942, 0.0
  %2946 = vadd.xlane.f32.xlu0 %v2945
  %v2947 = vpop.xlane.xlu0 %2946
  %v2948 = vsel %vm48, %v2944, 0.0
  %2949 = vadd.xlane.f32.xlu0 %v2948
  %v2950 = vpop.xlane.xlu0 %2949
  %v2951 = vrcp.pop %v2947
  %v2952 = vrcp.pop %v2950
  %v2953 = vmul.f32 %v2942, %v2951
  %v2954 = vmul.f32 %v2944, %v2952
  %2955 = vrot.lane.b32.xlu0 %v1843, 104
  %v2956 = vpop.permute.xlu0 %2955
  %2957 = vrot.lane.b32.xlu0 %v1848, 104
  %v2958 = vpop.permute.xlu0 %2957
  %v2962 = vsel %vm48, %v2953, 0
  %v2965 = vsel %vm48, %v2954, 0
  %2967 = vmatprep.subr.mxu0 0.0
  %2968 = vmatpush1.msra.mxu0 %v2956
  %2969 = vmatprep.subr.mxu0 0.0
  %2970 = vmatpush1.msra.mxu0 %v2958
  %2971 = vmatprep.subr.mxu0 0.0
  %2972 = vmatpush1.msra.mxu0 0.0
  %2973 = vmatprep.subr.mxu0 0.0
  %2974 = vmatpush1.msra.mxu0 0.0
  %2975 = vmatprep.subr.mxu0 0.0
  %2976 = vmatpush1.msra.mxu0 0.0
  %2977 = vmatprep.subr.mxu0 0.0
  %2978 = vmatpush1.msra.mxu0 0.0
  %2979 = vmatprep.subr.mxu0 0.0
  %2980 = vmatpush1.msra.mxu0 0.0
  %2981 = vmatprep.subr.mxu0 0.0
  %2982 = vmatpush1.msra.mxu0 0.0
  %2983 = vmatprep.subr.mxu0 0.0
  %2984 = vmatpush1.msra.mxu0 0.0
  %2985 = vmatprep.subr.mxu0 0.0
  %2986 = vmatpush1.msra.mxu0 0.0
  %2987 = vmatprep.subr.mxu0 0.0
  %2988 = vmatpush1.msra.mxu0 0.0
  %2989 = vmatprep.subr.mxu0 0.0
  %2990 = vmatpush1.msra.mxu0 0.0
  %2991 = vmatprep.subr.mxu0 0.0
  %2992 = vmatpush1.msra.mxu0 0.0
  %2993 = vmatprep.subr.mxu0 0.0
  %2994 = vmatpush1.msra.mxu0 0.0
  %2995 = vmatprep.subr.mxu0 0.0
  %2996 = vmatpush1.msra.mxu0 0.0
  %2997 = vmatprep.subr.mxu0 0.0
  %2998 = vmatpush1.msra.mxu0 0.0
  %2999 = vmatprep.subr.mxu0 0.0
  %3000 = vmatpush1.msra.mxu0 0.0
  %3001 = vmatprep.subr.mxu0 0.0
  %3002 = vmatpush1.msra.mxu0 0.0
  %3003 = vmatprep.subr.mxu0 0.0
  %3004 = vmatpush1.msra.mxu0 0.0
  %3005 = vmatprep.subr.mxu0 0.0
  %3006 = vmatpush1.msra.mxu0 0.0
  %3007 = vmatprep.subr.mxu0 0.0
  %3008 = vmatpush1.msra.mxu0 0.0
  %3009 = vmatprep.subr.mxu0 0.0
  %3010 = vmatpush1.msra.mxu0 0.0
  %3011 = vmatprep.subr.mxu0 0.0
  %3012 = vmatpush1.msra.mxu0 0.0
  %3013 = vmatprep.subr.mxu0 0.0
  %3014 = vmatpush1.msra.mxu0 0.0
  %3015 = vmatprep.subr.mxu0 0.0
  %3016 = vmatpush1.msra.mxu0 0.0
  %3017 = vmatprep.subr.mxu0 0.0
  %3018 = vmatpush1.msra.mxu0 0.0
  %3019 = vmatprep.subr.mxu0 0.0
  %3020 = vmatpush1.msra.mxu0 0.0
  %3021 = vmatprep.subr.mxu0 0.0
  %3022 = vmatpush1.msra.mxu0 0.0
  %3023 = vmatprep.subr.mxu0 0.0
  %3024 = vmatpush1.msra.mxu0 0.0
  %3025 = vmatprep.subr.mxu0 0.0
  %3026 = vmatpush1.msra.mxu0 0.0
  %3027 = vmatprep.subr.mxu0 0.0
  %3028 = vmatpush1.msra.mxu0 0.0
  %3029 = vmatprep.subr.mxu0 0.0
  %3030 = vmatpush1.msra.mxu0 0.0
  %3031 = vmatprep.mubr.f32.mxu0 0.0
  %3032 = vmatmul.mubr.f32.gmra.mrb[0].mxu0 %v2962
  %v3033 = vpop.f32.mrb[0].mxu0
  %v3034 = vadd.f32 0.0, %v3033
  %v3035 = vpop.f32.mrb[0].mxu0
  %3036 = vmatprep.mubr.f32.mxu0 0.0
  %3037 = vmatmul.mubr.f32.gmra.mrb[0].mxu0 %v2965
  %v3038 = vpop.f32.mrb[0].mxu0
  %v3039 = vadd.f32 0.0, %v3038
  %v3040 = vpop.f32.mrb[0].mxu0
  %3041 = vdwg.mxu0
  %3042 = vrot.lane.b32.xlu0 %v1936, 113
  %v3043 = vpop.permute.xlu0 %3042
  %3044 = vrot.lane.b32.xlu0 %v1941, 113
  %v3045 = vpop.permute.xlu0 %3044
  %3048 = vxpose.xlu0.b32.start [1/16] %v3043, 128
  %3049 = vxpose.xlu0.b32.cont [2/16] %v3045, 128
  %3050 = vxpose.xlu0.b32.cont [3/16] 0.0, 128
  %3051 = vxpose.xlu0.b32.cont [4/16] 0.0, 128
  %3052 = vxpose.xlu0.b32.cont [5/16] 0.0, 128
  %3053 = vxpose.xlu0.b32.cont [6/16] 0.0, 128
  %3054 = vxpose.xlu0.b32.cont [7/16] 0.0, 128
  %3055 = vxpose.xlu0.b32.cont [8/16] 0.0, 128
  %3056 = vxpose.xlu0.b32.cont [9/16] 0.0, 128
  %3057 = vxpose.xlu0.b32.cont [10/16] 0.0, 128
  %3058 = vxpose.xlu0.b32.cont [11/16] 0.0, 128
  %3059 = vxpose.xlu0.b32.cont [12/16] 0.0, 128
  %3060 = vxpose.xlu0.b32.cont [13/16] 0.0, 128
  %3061 = vxpose.xlu0.b32.cont [14/16] 0.0, 128
  %3062 = vxpose.xlu0.b32.cont [15/16] 0.0, 128
  %3063 = vxpose.xlu0.b32.end [16/16] 0.0, 128
  %v3064 = vpop.trf.xlu0
  %v3065 = vpop.trf.xlu0
  %v3066 = vpop.trf.xlu0
  %v3067 = vpop.trf.xlu0
  %v3068 = vpop.trf.xlu0
  %v3069 = vpop.trf.xlu0
  %v3070 = vpop.trf.xlu0
  %v3071 = vpop.trf.xlu0
  %v3072 = vpop.trf.xlu0
  %v3073 = vpop.trf.xlu0
  %v3074 = vpop.trf.xlu0
  %v3075 = vpop.trf.xlu0
  %v3076 = vpop.trf.xlu0
  %v3077 = vpop.trf.xlu0
  %v3078 = vpop.trf.xlu0
  %v3079 = vpop.trf.xlu0
  %3080 = vset.pattern.permute.xlu0 7
  %3081 = vperm.xlu0 %3080, %v1936
  %v3082 = vpop.permute.xlu0 %3081
  %3084 = vset.pattern.permute.xlu0 7
  %3085 = vperm.xlu0 %3084, %v1941
  %v3086 = vpop.permute.xlu0 %3085
  %v3088 = vlaneseq
  %v3089 = vshrl.u32 %v3088, 7
  %v3090 = vsub.s32 0, %v3089
  %v3091 = vrot.slane %v3064, %v3090
  %v3092 = vadd.f32 %v3082, %v3091
  %v3093 = vadd.f32 %v3086, %v3091
  %vm3094 = vcmp.gt.f32.partialorder %v3092, 0.0
  %vm3095 = vcmp.gt.f32.partialorder %v3093, 0.0
  %v3096 = vmul.f32 %v3092, 0.2
  %v3097 = vmul.f32 %v3093, 0.2
  %v3098 = vsel %vm3094, %v3092, %v3096
  %v3099 = vsel %vm3095, %v3093, %v3097
  %v3100 = vsel %vm287, %v3098, -9e+15
  %v3101 = vsel %vm288, %v3099, -9e+15
  %v3102 = vsel %vm48, %v3100, -inf
  %3103 = vmax.xlane.f32.xlu0 %v3102
  %v3104 = vpop.xlane.xlu0 %3103
  %v3105 = vsel %vm48, %v3101, -inf
  %3106 = vmax.xlane.f32.xlu0 %v3105
  %v3107 = vpop.xlane.xlu0 %3106
  %v3108 = vsub.f32 %v3100, %v3104
  %v3109 = vsub.f32 %v3101, %v3107
  %v3110 = vmul.f32 %v3108, 1.442695
  %v3111 = vpow.pop %v3110
  %v3112 = vmul.f32 %v3109, 1.442695
  %v3113 = vpow.pop %v3112
  %v3114 = vsel %vm48, %v3111, 0.0
  %3115 = vadd.xlane.f32.xlu0 %v3114
  %v3116 = vpop.xlane.xlu0 %3115
  %v3117 = vsel %vm48, %v3113, 0.0
  %3118 = vadd.xlane.f32.xlu0 %v3117
  %v3119 = vpop.xlane.xlu0 %3118
  %v3120 = vrcp.pop %v3116
  %v3121 = vrcp.pop %v3119
  %v3122 = vmul.f32 %v3111, %v3120
  %v3123 = vmul.f32 %v3113, %v3121
  %3124 = vrot.lane.b32.xlu0 %v1843, 100
  %v3125 = vpop.permute.xlu0 %3124
  %3126 = vrot.lane.b32.xlu0 %v1848, 100
  %v3127 = vpop.permute.xlu0 %3126
  %v3131 = vsel %vm48, %v3122, 0
  %v3134 = vsel %vm48, %v3123, 0
  %3136 = vmatprep.subr.mxu0 0.0
  %3137 = vmatpush1.msra.mxu0 %v3125
  %3138 = vmatprep.subr.mxu0 0.0
  %3139 = vmatpush1.msra.mxu0 %v3127
  %3140 = vmatprep.subr.mxu0 0.0
  %3141 = vmatpush1.msra.mxu0 0.0
  %3142 = vmatprep.subr.mxu0 0.0
  %3143 = vmatpush1.msra.mxu0 0.0
  %3144 = vmatprep.subr.mxu0 0.0
  %3145 = vmatpush1.msra.mxu0 0.0
  %3146 = vmatprep.subr.mxu0 0.0
  %3147 = vmatpush1.msra.mxu0 0.0
  %3148 = vmatprep.subr.mxu0 0.0
  %3149 = vmatpush1.msra.mxu0 0.0
  %3150 = vmatprep.subr.mxu0 0.0
  %3151 = vmatpush1.msra.mxu0 0.0
  %3152 = vmatprep.subr.mxu0 0.0
  %3153 = vmatpush1.msra.mxu0 0.0
  %3154 = vmatprep.subr.mxu0 0.0
  %3155 = vmatpush1.msra.mxu0 0.0
  %3156 = vmatprep.subr.mxu0 0.0
  %3157 = vmatpush1.msra.mxu0 0.0
  %3158 = vmatprep.subr.mxu0 0.0
  %3159 = vmatpush1.msra.mxu0 0.0
  %3160 = vmatprep.subr.mxu0 0.0
  %3161 = vmatpush1.msra.mxu0 0.0
  %3162 = vmatprep.subr.mxu0 0.0
  %3163 = vmatpush1.msra.mxu0 0.0
  %3164 = vmatprep.subr.mxu0 0.0
  %3165 = vmatpush1.msra.mxu0 0.0
  %3166 = vmatprep.subr.mxu0 0.0
  %3167 = vmatpush1.msra.mxu0 0.0
  %3168 = vmatprep.subr.mxu0 0.0
  %3169 = vmatpush1.msra.mxu0 0.0
  %3170 = vmatprep.subr.mxu0 0.0
  %3171 = vmatpush1.msra.mxu0 0.0
  %3172 = vmatprep.subr.mxu0 0.0
  %3173 = vmatpush1.msra.mxu0 0.0
  %3174 = vmatprep.subr.mxu0 0.0
  %3175 = vmatpush1.msra.mxu0 0.0
  %3176 = vmatprep.subr.mxu0 0.0
  %3177 = vmatpush1.msra.mxu0 0.0
  %3178 = vmatprep.subr.mxu0 0.0
  %3179 = vmatpush1.msra.mxu0 0.0
  %3180 = vmatprep.subr.mxu0 0.0
  %3181 = vmatpush1.msra.mxu0 0.0
  %3182 = vmatprep.subr.mxu0 0.0
  %3183 = vmatpush1.msra.mxu0 0.0
  %3184 = vmatprep.subr.mxu0 0.0
  %3185 = vmatpush1.msra.mxu0 0.0
  %3186 = vmatprep.subr.mxu0 0.0
  %3187 = vmatpush1.msra.mxu0 0.0
  %3188 = vmatprep.subr.mxu0 0.0
  %3189 = vmatpush1.msra.mxu0 0.0
  %3190 = vmatprep.subr.mxu0 0.0
  %3191 = vmatpush1.msra.mxu0 0.0
  %3192 = vmatprep.subr.mxu0 0.0
  %3193 = vmatpush1.msra.mxu0 0.0
  %3194 = vmatprep.subr.mxu0 0.0
  %3195 = vmatpush1.msra.mxu0 0.0
  %3196 = vmatprep.subr.mxu0 0.0
  %3197 = vmatpush1.msra.mxu0 0.0
  %3198 = vmatprep.subr.mxu0 0.0
  %3199 = vmatpush1.msra.mxu0 0.0
  %3200 = vmatprep.mubr.f32.mxu0 0.0
  %3201 = vmatmul.mubr.f32.gmra.mrb[0].mxu0 %v3131
  %v3202 = vpop.f32.mrb[0].mxu0
  %v3203 = vadd.f32 0.0, %v3202
  %v3204 = vpop.f32.mrb[0].mxu0
  %3205 = vmatprep.mubr.f32.mxu0 0.0
  %3206 = vmatmul.mubr.f32.gmra.mrb[0].mxu0 %v3134
  %v3207 = vpop.f32.mrb[0].mxu0
  %v3208 = vadd.f32 0.0, %v3207
  %v3209 = vpop.f32.mrb[0].mxu0
  %3210 = vdwg.mxu0
  %v3212 = vsel %vm48, %v2026, 0
  %v3215 = vsel %vm48, %v2027, 0
  %3217 = vmatprep.subr.mxu0 0.0
  %3218 = vmatpush1.msra.mxu0 %v1843
  %3219 = vmatprep.subr.mxu0 0.0
  %3220 = vmatpush1.msra.mxu0 %v1848
  %3221 = vmatprep.subr.mxu0 0.0
  %3222 = vmatpush1.msra.mxu0 0.0
  %3223 = vmatprep.subr.mxu0 0.0
  %3224 = vmatpush1.msra.mxu0 0.0
  %3225 = vmatprep.subr.mxu0 0.0
  %3226 = vmatpush1.msra.mxu0 0.0
  %3227 = vmatprep.subr.mxu0 0.0
  %3228 = vmatpush1.msra.mxu0 0.0
  %3229 = vmatprep.subr.mxu0 0.0
  %3230 = vmatpush1.msra.mxu0 0.0
  %3231 = vmatprep.subr.mxu0 0.0
  %3232 = vmatpush1.msra.mxu0 0.0
  %3233 = vmatprep.subr.mxu0 0.0
  %3234 = vmatpush1.msra.mxu0 0.0
  %3235 = vmatprep.subr.mxu0 0.0
  %3236 = vmatpush1.msra.mxu0 0.0
  %3237 = vmatprep.subr.mxu0 0.0
  %3238 = vmatpush1.msra.mxu0 0.0
  %3239 = vmatprep.subr.mxu0 0.0
  %3240 = vmatpush1.msra.mxu0 0.0
  %3241 = vmatprep.subr.mxu0 0.0
  %3242 = vmatpush1.msra.mxu0 0.0
  %3243 = vmatprep.subr.mxu0 0.0
  %3244 = vmatpush1.msra.mxu0 0.0
  %3245 = vmatprep.subr.mxu0 0.0
  %3246 = vmatpush1.msra.mxu0 0.0
  %3247 = vmatprep.subr.mxu0 0.0
  %3248 = vmatpush1.msra.mxu0 0.0
  %3249 = vmatprep.subr.mxu0 0.0
  %3250 = vmatpush1.msra.mxu0 0.0
  %3251 = vmatprep.subr.mxu0 0.0
  %3252 = vmatpush1.msra.mxu0 0.0
  %3253 = vmatprep.subr.mxu0 0.0
  %3254 = vmatpush1.msra.mxu0 0.0
  %3255 = vmatprep.subr.mxu0 0.0
  %3256 = vmatpush1.msra.mxu0 0.0
  %3257 = vmatprep.subr.mxu0 0.0
  %3258 = vmatpush1.msra.mxu0 0.0
  %3259 = vmatprep.subr.mxu0 0.0
  %3260 = vmatpush1.msra.mxu0 0.0
  %3261 = vmatprep.subr.mxu0 0.0
  %3262 = vmatpush1.msra.mxu0 0.0
  %3263 = vmatprep.subr.mxu0 0.0
  %3264 = vmatpush1.msra.mxu0 0.0
  %3265 = vmatprep.subr.mxu0 0.0
  %3266 = vmatpush1.msra.mxu0 0.0
  %3267 = vmatprep.subr.mxu0 0.0
  %3268 = vmatpush1.msra.mxu0 0.0
  %3269 = vmatprep.subr.mxu0 0.0
  %3270 = vmatpush1.msra.mxu0 0.0
  %3271 = vmatprep.subr.mxu0 0.0
  %3272 = vmatpush1.msra.mxu0 0.0
  %3273 = vmatprep.subr.mxu0 0.0
  %3274 = vmatpush1.msra.mxu0 0.0
  %3275 = vmatprep.subr.mxu0 0.0
  %3276 = vmatpush1.msra.mxu0 0.0
  %3277 = vmatprep.subr.mxu0 0.0
  %3278 = vmatpush1.msra.mxu0 0.0
  %3279 = vmatprep.subr.mxu0 0.0
  %3280 = vmatpush1.msra.mxu0 0.0
  %3281 = vmatprep.mubr.f32.mxu0 0.0
  %3282 = vmatmul.mubr.f32.gmra.mrb[0].mxu0 %v3212
  %v3283 = vpop.f32.mrb[0].mxu0
  %v3284 = vadd.f32 %v2189, %v3283
  %v3285 = vpop.f32.mrb[0].mxu0
  %3286 = vmatprep.mubr.f32.mxu0 0.0
  %3287 = vmatmul.mubr.f32.gmra.mrb[0].mxu0 %v3215
  %v3288 = vpop.f32.mrb[0].mxu0
  %v3289 = vadd.f32 %v2194, %v3288
  %v3290 = vpop.f32.mrb[0].mxu0
  %3291 = vdwg.mxu0
  %v3292 = vadd.f32 %v3284, %v2358
  %v3293 = vadd.f32 %v3289, %v2363
  %v3294 = vadd.f32 %v3292, %v2527
  %v3295 = vadd.f32 %v3293, %v2532
  %v3296 = vadd.f32 %v3294, %v2696
  %v3297 = vadd.f32 %v3295, %v2701
  %v3298 = vadd.f32 %v3296, %v2865
  %v3299 = vadd.f32 %v3297, %v2870
  %v3300 = vadd.f32 %v3298, %v3034
  %v3301 = vadd.f32 %v3299, %v3039
  %v3302 = vadd.f32 %v3300, %v3203
  %v3303 = vadd.f32 %v3301, %v3208
  %v3304 = vmul.f32 %v3302, 0.125
  %v3305 = vmul.f32 %v3303, 0.125
  %vm3306 = vcmask 31744
  %3307 = vst.msk [vmem:[%s10] sm:$0xff] %vm3306, %v3304
  %3308 = vst.msk [vmem:[%s10 + $0x8] sm:$0xff] %vm3306, %v3305
  // Predicated region
  $region42: #{tpu_custom_call.1} parent=0 // pred_check
    _
  $region43: #{tpu_custom_call.1} parent=0 // pred_check_branch
    %3310 = sbr.rel (0) target = $region45
  $region44: #{tpu_custom_call.1} parent=0 // pred_region
    _
  $region45: #{tpu_custom_call.1} parent=0 // pred_fallthru
    _
  // Predicated region
  $region46: #{tpu_custom_call.1} parent=0 // pred_check
    _
  $region47: #{tpu_custom_call.1} parent=0 // pred_check_branch
    %3312 = sbr.rel (0) target = $region49
  $region48: #{tpu_custom_call.1} parent=0 // pred_region
    _
  $region49: #{tpu_custom_call.1} parent=0 // pred_fallthru
    _

</llo_original>
